<compile_context>
chip_gen: v7x
topology: tpu7x:2x2x1
jax: 0.10.0
libtpu: 0.0.40
codegen_flags: <defaults>
</compile_context>

<pallas_src>
import functools

import jax
import jax.numpy as jnp
import numpy as np
from jax.experimental import pallas as pl
from jax.experimental.pallas import tpu as pltpu

NHEAD = 4
FFN_DIM = 2048          # nn.TransformerEncoderLayer default dim_feedforward
FFN_CHUNK = 512         # feed-forward dim tile width inside the kernel
LN_EPS = 1e-5


def _layernorm(x, gamma, beta):
    mu = jnp.mean(x, axis=-1, keepdims=True)
    var = jnp.mean((x - mu) ** 2, axis=-1, keepdims=True)
    return (x - mu) * jax.lax.rsqrt(var + LN_EPS) * gamma + beta


def _ffn_chunk_width(F):
    return FFN_CHUNK if (F % FFN_CHUNK == 0 and F > FFN_CHUNK) else F


def _vmem_capacity_bytes():
    """Physical per-core VMEM (64 MiB v7x, 128 MiB v5e/v6e)."""
    try:
        return int(pltpu.get_tpu_info().vmem_capacity_bytes)
    except Exception:
        pass
    try:
        kind = jax.devices()[0].device_kind.lower()
    except Exception:
        kind = ""
    if "v7" in kind or "7x" in kind:
        return 64 * 1024 * 1024
    return 128 * 1024 * 1024


def _pick_batch_block(B, S, D, ffn_chunk, vmem_limit, target_rows):
    """Largest divisor of B whose per-step footprint fits the VMEM budget,
    capped so there are >= 2 grid steps (keeps both v7x TensorCores busy)."""
    weight_bytes = (2 * (3 * D * D + D * D + 2 * D * FFN_DIM)   # bf16 weights
                    + 4 * S * S + 4 * (8 * D + 2 * FFN_DIM))    # mask + f32 biases
    budget = vmem_limit - weight_bytes - (6 << 20)              # Mosaic scratch headroom

    def step_bytes(bt):
        rows = bt * S
        return (rows * D * 4 * 4          # double-buffered f32 in + out slabs
                + rows * D * 48           # x/qkv/attn/y/h2/out f32 + bf16 copies
                + bt * S * S * 12         # mask + scores + probs
                + rows * ffn_chunk * 6)   # ffn hidden chunk (f32 + bf16)

    max_bt = B if B < 2 else B // 2       # >= 2 grid steps when possible
    best = 1
    for bt in range(1, max_bt + 1):
        if B % bt != 0 or step_bytes(bt) > budget:
            continue
        best = bt
        if bt * S >= target_rows:
            break
    return best


def _invariant_spec(shape):
    """Full-array block with a constant index map; single-buffered if supported."""
    idx = lambda b, _n=len(shape): (0,) * _n
    try:
        return pl.BlockSpec(shape, idx, pipeline_mode=pl.Buffered(1))
    except (AttributeError, TypeError):
        return pl.BlockSpec(shape, idx)


def _encoder_block_kernel(
    x_ref, kb_ref, sm_ref,
    wqkv_ref, bqkv_ref, wo_h_ref, bo_ref,
    w1_ref, b1_ref, w2_ref, b2_ref,
    g1_ref, be1_ref, g2_ref, be2_ref,
    o_ref,
):
    # x_ref: (Bt, S, D) batch-block slab; kb_ref: (Bt, 1, S) key-padding bias;
    # sm_ref: (S, S) shared additive mask. Weights arrive pre-transposed (bf16);
    # wo_h_ref is (NHEAD, Hd, D).
    Bt, S, D = x_ref.shape
    Hd = D // NHEAD
    R = Bt * S

    x = x_ref[...].astype(jnp.float32)                  # (Bt, S, D)
    x2 = x.reshape(R, D)                                 # fill MXU rows

    # Additive attention mask built in-kernel: (Bt, S, S).
    mask = sm_ref[...][None, :, :] + kb_ref[...]

    # ---- fused QKV projection (1/sqrt(Hd) folded into Q weights/bias) -------
    qkv = jnp.dot(x2.astype(jnp.bfloat16), wqkv_ref[...],
                  preferred_element_type=jnp.float32) + bqkv_ref[...]   # (R, 3D)

    # ---- multi-head self-attention; each head's output is accumulated
    # straight into the output projection (no VMEM scratch / strip stores) ----
    attn = jnp.zeros((R, D), jnp.float32)
    for h in range(NHEAD):
        qh = qkv[:, h * Hd:(h + 1) * Hd].astype(jnp.bfloat16).reshape(Bt, S, Hd)
        kh = qkv[:, D + h * Hd:D + (h + 1) * Hd].astype(jnp.bfloat16).reshape(Bt, S, Hd)
        vh = qkv[:, 2 * D + h * Hd:2 * D + (h + 1) * Hd].astype(jnp.bfloat16).reshape(Bt, S, Hd)

        s = jnp.einsum("bqd,bkd->bqk", qh, kh,
                       preferred_element_type=jnp.float32) + mask       # (Bt, S, S)
        s = s - jnp.max(s, axis=-1, keepdims=True)
        p = jnp.exp(s)
        p = p * pl.reciprocal(jnp.sum(p, axis=-1, keepdims=True), approx=True)
        oh = jnp.einsum("bqk,bkd->bqd", p.astype(jnp.bfloat16), vh,
                        preferred_element_type=jnp.float32)             # (Bt, S, Hd)
        attn = attn + jnp.dot(oh.reshape(R, Hd).astype(jnp.bfloat16), wo_h_ref[h],
                              preferred_element_type=jnp.float32)       # (R, D)
    attn = attn + bo_ref[...]

    # ---- residual + norm1 (f32) ---------------------------------------------
    y = _layernorm(x2 + attn, g1_ref[...], be1_ref[...])
    y_b = y.astype(jnp.bfloat16)

    # ---- feed-forward, tiled over the 2048 dim (bounded h1 footprint) -------
    F = w1_ref.shape[1]
    Fc = _ffn_chunk_width(F)
    n_chunks = F // Fc
    h2 = jnp.zeros((R, D), jnp.float32)
    for c in range(n_chunks):
        lo = c * Fc
        h1 = jnp.dot(y_b, w1_ref[:, lo:lo + Fc],
                     preferred_element_type=jnp.float32) + b1_ref[:, lo:lo + Fc]
        h1 = jnp.maximum(h1, 0.0).astype(jnp.bfloat16)                  # relu
        h2 = h2 + jnp.dot(h1, w2_ref[lo:lo + Fc, :],
                          preferred_element_type=jnp.float32)
    h2 = h2 + b2_ref[...]

    # ---- residual + norm2 (f32) ---------------------------------------------
    out = _layernorm(y + h2, g2_ref[...], be2_ref[...])
    # TODO(synk): if real D < 128, a lane-dense (Bt, S*D) output layout would
    # avoid masked partial stores; kept (Bt, S, D) f32 to preserve module I/O.
    o_ref[...] = out.reshape(Bt, S, D).astype(o_ref.dtype)


def init_params(key, emb_dim):
    ks = jax.random.split(key, 6)
    scale = 0.02
    return {
        "wqkv": scale * jax.random.normal(ks[0], (3 * emb_dim, emb_dim), jnp.float32),
        "bqkv": scale * jax.random.normal(ks[1], (3 * emb_dim,), jnp.float32),
        "wo": scale * jax.random.normal(ks[2], (emb_dim, emb_dim), jnp.float32),
        "bo": jnp.zeros((emb_dim,), jnp.float32),
        "w1": scale * jax.random.normal(ks[3], (FFN_DIM, emb_dim), jnp.float32),
        "b1": scale * jax.random.normal(ks[4], (FFN_DIM,), jnp.float32),
        "w2": scale * jax.random.normal(ks[5], (emb_dim, FFN_DIM), jnp.float32),
        "b2": jnp.zeros((emb_dim,), jnp.float32),
        "g1": jnp.ones((emb_dim,), jnp.float32),
        "be1": jnp.zeros((emb_dim,), jnp.float32),
        "g2": jnp.ones((emb_dim,), jnp.float32),
        "be2": jnp.zeros((emb_dim,), jnp.float32),
    }


@functools.partial(jax.jit, static_argnums=(4, 5))
def _session_encoder_impl(session_emb, padding_mask, src_mask, params, Bt, vmem_limit):
    B, S, D = session_emb.shape
    Hd = D // NHEAD
    n_steps = B // Bt

    # One-time weight prep: transpose so the MXU consumes weights directly,
    # fold 1/sqrt(Hd) into Q, split wo per head, cast weights to bf16.
    scale = 1.0 / float(np.sqrt(Hd))
    scale_vec = jnp.concatenate(
        [jnp.full((D,), scale, jnp.float32), jnp.ones((2 * D,), jnp.float32)])
    wqkv_t = (params["wqkv"].T * scale_vec[None, :]).astype(jnp.bfloat16)   # (D, 3D)
    wo_heads = params["wo"].T.reshape(NHEAD, Hd, D).astype(jnp.bfloat16)    # (H, Hd, D)
    w1_t = params["w1"].T.astype(jnp.bfloat16)                              # (D, F)
    w2_t = params["w2"].T.astype(jnp.bfloat16)                              # (F, D)

    row = lambda v: v.reshape(1, -1).astype(jnp.float32)
    bqkv = row(params["bqkv"] * scale_vec)

    # Per-batch key-padding bias; the (B, S, S) mask is never materialised in HBM.
    key_bias = jnp.where(padding_mask, -1e30, 0.0).astype(jnp.float32).reshape(B, 1, S)
    # Clamp so an -inf src_mask cannot yield inf-inf = NaN inside the kernel.
    sm = jnp.maximum(src_mask.astype(jnp.float32), -1e30)

    args = (
        session_emb.astype(jnp.float32), key_bias, sm,
        wqkv_t, bqkv, wo_heads, row(params["bo"]),
        w1_t, row(params["b1"]), w2_t, row(params["b2"]),
        row(params["g1"]), row(params["be1"]),
        row(params["g2"]), row(params["be2"]),
    )

    in_specs = [
        pl.BlockSpec((Bt, S, D), lambda b: (b, 0, 0)),   # x batch-block slab
        pl.BlockSpec((Bt, 1, S), lambda b: (b, 0, 0)),   # key-padding bias
    ] + [_invariant_spec(a.shape) for a in args[2:]]     # mask + weights, single-buffered

    flops = 2 * B * S * D * (4 * D + 2 * FFN_DIM) + 4 * B * S * S * D
    cost = pl.CostEstimate(
        flops=flops,
        transcendentals=B * NHEAD * S * S,
        bytes_accessed=(8 * B * S * D + 4 * B * S + 4 * S * S
                        + 2 * (4 * D * D + 2 * D * FFN_DIM)
                        + 4 * (8 * D + 2 * FFN_DIM)),
    )

    return pl.pallas_call(
        _encoder_block_kernel,
        grid=(n_steps,),
        in_specs=in_specs,
        out_specs=pl.BlockSpec((Bt, S, D), lambda b: (b, 0, 0)),
        out_shape=jax.ShapeDtypeStruct((B, S, D), jnp.float32),
        compiler_params=pltpu.CompilerParams(
            dimension_semantics=("parallel",),
            vmem_limit_bytes=vmem_limit),
        cost_estimate=cost,
    )(*args)


def session_encoder(session_emb, padding_mask, src_mask, params):
    """session_emb: (B, S, D) f32, padding_mask: (B, S) bool (True = pad),
    src_mask: (S, S) f32 additive. Returns (B, S, D) f32."""
    B, S, D = session_emb.shape
    cap = _vmem_capacity_bytes()
    vmem_limit = int(cap * 3 // 4)                       # ~48 MiB v7x, ~96 MiB v5e/v6e
    target_rows = 512 if cap > (64 << 20) else 256
    Bt = _pick_batch_block(B, S, D, _ffn_chunk_width(FFN_DIM), vmem_limit, target_rows)
    return _session_encoder_impl(session_emb, padding_mask, src_mask, params,
                                 Bt, vmem_limit)


def session_encoder_ref(session_emb, padding_mask, src_mask, params):
    """Pure-JAX (f32) reference with identical eval-mode semantics."""
    B, S, D = session_emb.shape
    Hd = D // NHEAD
    x = session_emb.astype(jnp.float32)
    key_bias = jnp.where(padding_mask, -1e30, 0.0).astype(jnp.float32)
    mask = jnp.maximum(src_mask.astype(jnp.float32), -1e30)[None, :, :] + key_bias[:, None, :]

    qkv = jnp.einsum("bsd,ed->bse", x, params["wqkv"]) + params["bqkv"]
    q, k, v = jnp.split(qkv, 3, axis=-1)
    q = q.reshape(B, S, NHEAD, Hd) / np.sqrt(Hd)
    k = k.reshape(B, S, NHEAD, Hd)
    v = v.reshape(B, S, NHEAD, Hd)
    scores = jnp.einsum("bqhd,bkhd->bhqk", q, k) + mask[:, None, :, :]
    p = jax.nn.softmax(scores, axis=-1)
    attn = jnp.einsum("bhqk,bkhd->bqhd", p, v).reshape(B, S, D)
    attn = jnp.einsum("bsd,ed->bse", attn, params["wo"]) + params["bo"]

    def ln(z, g, be):
        mu = jnp.mean(z, -1, keepdims=True)
        var = jnp.mean((z - mu) ** 2, -1, keepdims=True)
        return (z - mu) / jnp.sqrt(var + LN_EPS) * g + be

    y = ln(x + attn, params["g1"], params["be1"])
    h = jax.nn.relu(jnp.einsum("bsd,fd->bsf", y, params["w1"]) + params["b1"])
    h = jnp.einsum("bsf,df->bsd", h, params["w2"]) + params["b2"]
    return ln(y + h, params["g2"], params["be2"])


if __name__ == "__main__":
    B, S, D = 2, 8, 32
    key = jax.random.PRNGKey(0)
    k_x, k_p = jax.random.split(key)

    session_emb = jax.random.normal(k_x, (B, S, D), jnp.float32)
    padding_mask = jnp.zeros((B, S), jnp.bool_).at[1, 6:].set(True)  # pad last 2 of batch 1
    src_mask = jnp.zeros((S, S), jnp.float32)                         # no extra attn mask
    params = init_params(k_p, D)

    out = session_encoder(session_emb, padding_mask, src_mask, params)
    out = jax.block_until_ready(out)

    ref = session_encoder_ref(session_emb, padding_mask, src_mask, params)
    # bf16 matmul operands (f32 accumulation) + approx softmax recip -> relaxed tolerance
    np.testing.assert_allclose(np.asarray(out), np.asarray(ref), rtol=1e-2, atol=1e-2)

    print("KERNEL_OK")
</pallas_src>

<mosaic_0001>
module attributes {stable_mosaic.version = 11 : i64} {
  func.func @_encoder_block_kernel(%arg0: i32, %arg1: memref<1x8x32xf32, #tpu.memory_space<vmem>>, %arg2: memref<1x1x8xf32, #tpu.memory_space<vmem>>, %arg3: memref<8x8xf32, #tpu.memory_space<vmem>>, %arg4: memref<32x96xbf16, #tpu.memory_space<vmem>>, %arg5: memref<1x96xf32, #tpu.memory_space<vmem>>, %arg6: memref<4x8x32xbf16, #tpu.memory_space<vmem>>, %arg7: memref<1x32xf32, #tpu.memory_space<vmem>>, %arg8: memref<32x2048xbf16, #tpu.memory_space<vmem>>, %arg9: memref<1x2048xf32, #tpu.memory_space<vmem>>, %arg10: memref<2048x32xbf16, #tpu.memory_space<vmem>>, %arg11: memref<1x32xf32, #tpu.memory_space<vmem>>, %arg12: memref<1x32xf32, #tpu.memory_space<vmem>>, %arg13: memref<1x32xf32, #tpu.memory_space<vmem>>, %arg14: memref<1x32xf32, #tpu.memory_space<vmem>>, %arg15: memref<1x32xf32, #tpu.memory_space<vmem>>, %arg16: memref<1x8x32xf32, #tpu.memory_space<vmem>>) attributes {dimension_semantics = [#tpu.dimension_semantics<parallel>], iteration_bounds = array<i64: 2>, scalar_prefetch = 0 : i64, scratch_operands = 0 : i64, tpu.core_type = #tpu.core_type<tc>, window_params = [{transform_indices = @transform_0, window_bounds = array<i64: 1, 8, 32>}, {transform_indices = @transform_1, window_bounds = array<i64: 1, 1, 8>}, {pipeline_mode = #tpu.pipeline_mode<synchronous>, transform_indices = @transform_2, window_bounds = array<i64: 8, 8>}, {pipeline_mode = #tpu.pipeline_mode<synchronous>, transform_indices = @transform_3, window_bounds = array<i64: 32, 96>}, {pipeline_mode = #tpu.pipeline_mode<synchronous>, transform_indices = @transform_4, window_bounds = array<i64: 1, 96>}, {pipeline_mode = #tpu.pipeline_mode<synchronous>, transform_indices = @transform_5, window_bounds = array<i64: 4, 8, 32>}, {pipeline_mode = #tpu.pipeline_mode<synchronous>, transform_indices = @transform_6, window_bounds = array<i64: 1, 32>}, {pipeline_mode = #tpu.pipeline_mode<synchronous>, transform_indices = @transform_7, window_bounds = array<i64: 32, 2048>}, {pipeline_mode = #tpu.pipeline_mode<synchronous>, transform_indices = @transform_8, window_bounds = array<i64: 1, 2048>}, {pipeline_mode = #tpu.pipeline_mode<synchronous>, transform_indices = @transform_9, window_bounds = array<i64: 2048, 32>}, {pipeline_mode = #tpu.pipeline_mode<synchronous>, transform_indices = @transform_10, window_bounds = array<i64: 1, 32>}, {pipeline_mode = #tpu.pipeline_mode<synchronous>, transform_indices = @transform_11, window_bounds = array<i64: 1, 32>}, {pipeline_mode = #tpu.pipeline_mode<synchronous>, transform_indices = @transform_12, window_bounds = array<i64: 1, 32>}, {pipeline_mode = #tpu.pipeline_mode<synchronous>, transform_indices = @transform_13, window_bounds = array<i64: 1, 32>}, {pipeline_mode = #tpu.pipeline_mode<synchronous>, transform_indices = @transform_14, window_bounds = array<i64: 1, 32>}, {transform_indices = @transform_15, window_bounds = array<i64: 1, 8, 32>}]} {
    %c0 = arith.constant 0 : index
    %c0_0 = arith.constant 0 : index
    %c0_1 = arith.constant 0 : index
    %0 = vector.load %arg1[%c0, %c0_0, %c0_1] : memref<1x8x32xf32, #tpu.memory_space<vmem>>, vector<1x8x32xf32>
    %1 = vector.shape_cast %0 : vector<1x8x32xf32> to vector<8x32xf32>
    %c0_2 = arith.constant 0 : index
    %c0_3 = arith.constant 0 : index
    %2 = vector.load %arg3[%c0_2, %c0_3] : memref<8x8xf32, #tpu.memory_space<vmem>>, vector<8x8xf32>
    %3 = vector.shape_cast %2 : vector<8x8xf32> to vector<1x8x8xf32>
    %c0_4 = arith.constant 0 : index
    %c0_5 = arith.constant 0 : index
    %c0_6 = arith.constant 0 : index
    %4 = vector.load %arg2[%c0_4, %c0_5, %c0_6] : memref<1x1x8xf32, #tpu.memory_space<vmem>>, vector<1x1x8xf32>
    %5 = vector.broadcast %4 : vector<1x1x8xf32> to vector<1x8x8xf32>
    %6 = arith.addf %3, %5 : vector<1x8x8xf32>
    %7 = arith.truncf %1 : vector<8x32xf32> to vector<8x32xbf16>
    %c0_7 = arith.constant 0 : index
    %c0_8 = arith.constant 0 : index
    %8 = vector.load %arg4[%c0_7, %c0_8] : memref<32x96xbf16, #tpu.memory_space<vmem>>, vector<32x96xbf16>
    %cst = arith.constant dense<0.000000e+00> : vector<8x96xf32>
    %9 = tpu.matmul %7, %8, %cst {dimension_numbers = #tpu.dot_dimension_numbers<[1], [0], [0], [1], [0, 0, 1, 1], [], []>} : vector<8x32xbf16>, vector<32x96xbf16>, vector<8x96xf32> -> vector<8x96xf32>
    %c0_9 = arith.constant 0 : index
    %c0_10 = arith.constant 0 : index
    %10 = vector.load %arg5[%c0_9, %c0_10] : memref<1x96xf32, #tpu.memory_space<vmem>>, vector<1x96xf32>
    %11 = vector.broadcast %10 : vector<1x96xf32> to vector<8x96xf32>
    %12 = arith.addf %9, %11 : vector<8x96xf32>
    %cst_11 = arith.constant 0.000000e+00 : f32
    %13 = vector.broadcast %cst_11 : f32 to vector<8x32xf32>
    %14 = vector.extract_strided_slice %12 {offsets = [0, 0], sizes = [8, 8], strides = [1, 1]} : vector<8x96xf32> to vector<8x8xf32>
    %15 = arith.truncf %14 : vector<8x8xf32> to vector<8x8xbf16>
    %16 = vector.shape_cast %15 : vector<8x8xbf16> to vector<1x8x8xbf16>
    %17 = vector.extract_strided_slice %12 {offsets = [0, 32], sizes = [8, 8], strides = [1, 1]} : vector<8x96xf32> to vector<8x8xf32>
    %18 = arith.truncf %17 : vector<8x8xf32> to vector<8x8xbf16>
    %19 = vector.shape_cast %18 : vector<8x8xbf16> to vector<1x8x8xbf16>
    %20 = vector.extract_strided_slice %12 {offsets = [0, 64], sizes = [8, 8], strides = [1, 1]} : vector<8x96xf32> to vector<8x8xf32>
    %21 = arith.truncf %20 : vector<8x8xf32> to vector<8x8xbf16>
    %22 = vector.shape_cast %21 : vector<8x8xbf16> to vector<1x8x8xbf16>
    "tpu.trace_start"() <{level = 10 : i32, message = "bqd,bkd->bqk"}> : () -> ()
    %cst_12 = arith.constant dense<0.000000e+00> : vector<1x8x8xf32>
    %23 = tpu.matmul %16, %19, %cst_12 {dimension_numbers = #tpu.dot_dimension_numbers<[2], [2], [1], [1], [0, 0, 0, 1, 1, 1], [0], [0]>} : vector<1x8x8xbf16>, vector<1x8x8xbf16>, vector<1x8x8xf32> -> vector<1x8x8xf32>
    "tpu.trace_stop"() : () -> ()
    %24 = arith.addf %23, %6 : vector<1x8x8xf32>
    %cst_13 = arith.constant dense<0xFF800000> : vector<1x8xf32>
    %25 = vector.multi_reduction <maximumf>, %24, %cst_13 [2] : vector<1x8x8xf32> to vector<1x8xf32>
    %26 = vector.shape_cast %25 : vector<1x8xf32> to vector<1x8x1xf32>
    %27 = vector.broadcast %26 : vector<1x8x1xf32> to vector<1x8x8xf32>
    %28 = arith.subf %24, %27 : vector<1x8x8xf32>
    %29 = math.exp %28 : vector<1x8x8xf32>
    %cst_14 = arith.constant dense<0.000000e+00> : vector<1x8xf32>
    %30 = vector.multi_reduction <add>, %29, %cst_14 [2] : vector<1x8x8xf32> to vector<1x8xf32>
    %31 = vector.shape_cast %30 : vector<1x8xf32> to vector<1x8x1xf32>
    %32 = tpu.reciprocal %31 {approx = true} : vector<1x8x1xf32> -> vector<1x8x1xf32>
    %33 = vector.broadcast %32 : vector<1x8x1xf32> to vector<1x8x8xf32>
    %34 = arith.mulf %29, %33 : vector<1x8x8xf32>
    %35 = arith.truncf %34 : vector<1x8x8xf32> to vector<1x8x8xbf16>
    "tpu.trace_start"() <{level = 10 : i32, message = "bqk,bkd->bqd"}> : () -> ()
    %cst_15 = arith.constant dense<0.000000e+00> : vector<1x8x8xf32>
    %36 = tpu.matmul %35, %22, %cst_15 {dimension_numbers = #tpu.dot_dimension_numbers<[2], [1], [1], [2], [0, 0, 0, 1, 1, 2], [0], [0]>} : vector<1x8x8xbf16>, vector<1x8x8xbf16>, vector<1x8x8xf32> -> vector<1x8x8xf32>
    "tpu.trace_stop"() : () -> ()
    %37 = vector.shape_cast %36 : vector<1x8x8xf32> to vector<8x8xf32>
    %38 = arith.truncf %37 : vector<8x8xf32> to vector<8x8xbf16>
    %c0_16 = arith.constant 0 : index
    %c0_17 = arith.constant 0 : index
    %c0_18 = arith.constant 0 : index
    %39 = vector.load %arg6[%c0_16, %c0_17, %c0_18] : memref<4x8x32xbf16, #tpu.memory_space<vmem>>, vector<1x8x32xbf16>
    %40 = vector.shape_cast %39 : vector<1x8x32xbf16> to vector<8x32xbf16>
    %cst_19 = arith.constant dense<0.000000e+00> : vector<8x32xf32>
    %41 = tpu.matmul %38, %40, %cst_19 {dimension_numbers = #tpu.dot_dimension_numbers<[1], [0], [0], [1], [0, 0, 1, 1], [], []>} : vector<8x8xbf16>, vector<8x32xbf16>, vector<8x32xf32> -> vector<8x32xf32>
    %42 = arith.addf %13, %41 : vector<8x32xf32>
    %43 = vector.extract_strided_slice %12 {offsets = [0, 8], sizes = [8, 8], strides = [1, 1]} : vector<8x96xf32> to vector<8x8xf32>
    %44 = arith.truncf %43 : vector<8x8xf32> to vector<8x8xbf16>
    %45 = vector.shape_cast %44 : vector<8x8xbf16> to vector<1x8x8xbf16>
    %46 = vector.extract_strided_slice %12 {offsets = [0, 40], sizes = [8, 8], strides = [1, 1]} : vector<8x96xf32> to vector<8x8xf32>
    %47 = arith.truncf %46 : vector<8x8xf32> to vector<8x8xbf16>
    %48 = vector.shape_cast %47 : vector<8x8xbf16> to vector<1x8x8xbf16>
    %49 = vector.extract_strided_slice %12 {offsets = [0, 72], sizes = [8, 8], strides = [1, 1]} : vector<8x96xf32> to vector<8x8xf32>
    %50 = arith.truncf %49 : vector<8x8xf32> to vector<8x8xbf16>
    %51 = vector.shape_cast %50 : vector<8x8xbf16> to vector<1x8x8xbf16>
    "tpu.trace_start"() <{level = 10 : i32, message = "bqd,bkd->bqk"}> : () -> ()
    %cst_20 = arith.constant dense<0.000000e+00> : vector<1x8x8xf32>
    %52 = tpu.matmul %45, %48, %cst_20 {dimension_numbers = #tpu.dot_dimension_numbers<[2], [2], [1], [1], [0, 0, 0, 1, 1, 1], [0], [0]>} : vector<1x8x8xbf16>, vector<1x8x8xbf16>, vector<1x8x8xf32> -> vector<1x8x8xf32>
    "tpu.trace_stop"() : () -> ()
    %53 = arith.addf %52, %6 : vector<1x8x8xf32>
    %cst_21 = arith.constant dense<0xFF800000> : vector<1x8xf32>
    %54 = vector.multi_reduction <maximumf>, %53, %cst_21 [2] : vector<1x8x8xf32> to vector<1x8xf32>
    %55 = vector.shape_cast %54 : vector<1x8xf32> to vector<1x8x1xf32>
    %56 = vector.broadcast %55 : vector<1x8x1xf32> to vector<1x8x8xf32>
    %57 = arith.subf %53, %56 : vector<1x8x8xf32>
    %58 = math.exp %57 : vector<1x8x8xf32>
    %cst_22 = arith.constant dense<0.000000e+00> : vector<1x8xf32>
    %59 = vector.multi_reduction <add>, %58, %cst_22 [2] : vector<1x8x8xf32> to vector<1x8xf32>
    %60 = vector.shape_cast %59 : vector<1x8xf32> to vector<1x8x1xf32>
    %61 = tpu.reciprocal %60 {approx = true} : vector<1x8x1xf32> -> vector<1x8x1xf32>
    %62 = vector.broadcast %61 : vector<1x8x1xf32> to vector<1x8x8xf32>
    %63 = arith.mulf %58, %62 : vector<1x8x8xf32>
    %64 = arith.truncf %63 : vector<1x8x8xf32> to vector<1x8x8xbf16>
    "tpu.trace_start"() <{level = 10 : i32, message = "bqk,bkd->bqd"}> : () -> ()
    %cst_23 = arith.constant dense<0.000000e+00> : vector<1x8x8xf32>
    %65 = tpu.matmul %64, %51, %cst_23 {dimension_numbers = #tpu.dot_dimension_numbers<[2], [1], [1], [2], [0, 0, 0, 1, 1, 2], [0], [0]>} : vector<1x8x8xbf16>, vector<1x8x8xbf16>, vector<1x8x8xf32> -> vector<1x8x8xf32>
    "tpu.trace_stop"() : () -> ()
    %66 = vector.shape_cast %65 : vector<1x8x8xf32> to vector<8x8xf32>
    %67 = arith.truncf %66 : vector<8x8xf32> to vector<8x8xbf16>
    %c1 = arith.constant 1 : index
    %c0_24 = arith.constant 0 : index
    %c0_25 = arith.constant 0 : index
    %68 = vector.load %arg6[%c1, %c0_24, %c0_25] : memref<4x8x32xbf16, #tpu.memory_space<vmem>>, vector<1x8x32xbf16>
    %69 = vector.shape_cast %68 : vector<1x8x32xbf16> to vector<8x32xbf16>
    %cst_26 = arith.constant dense<0.000000e+00> : vector<8x32xf32>
    %70 = tpu.matmul %67, %69, %cst_26 {dimension_numbers = #tpu.dot_dimension_numbers<[1], [0], [0], [1], [0, 0, 1, 1], [], []>} : vector<8x8xbf16>, vector<8x32xbf16>, vector<8x32xf32> -> vector<8x32xf32>
    %71 = arith.addf %42, %70 : vector<8x32xf32>
    %72 = vector.extract_strided_slice %12 {offsets = [0, 16], sizes = [8, 8], strides = [1, 1]} : vector<8x96xf32> to vector<8x8xf32>
    %73 = arith.truncf %72 : vector<8x8xf32> to vector<8x8xbf16>
    %74 = vector.shape_cast %73 : vector<8x8xbf16> to vector<1x8x8xbf16>
    %75 = vector.extract_strided_slice %12 {offsets = [0, 48], sizes = [8, 8], strides = [1, 1]} : vector<8x96xf32> to vector<8x8xf32>
    %76 = arith.truncf %75 : vector<8x8xf32> to vector<8x8xbf16>
    %77 = vector.shape_cast %76 : vector<8x8xbf16> to vector<1x8x8xbf16>
    %78 = vector.extract_strided_slice %12 {offsets = [0, 80], sizes = [8, 8], strides = [1, 1]} : vector<8x96xf32> to vector<8x8xf32>
    %79 = arith.truncf %78 : vector<8x8xf32> to vector<8x8xbf16>
    %80 = vector.shape_cast %79 : vector<8x8xbf16> to vector<1x8x8xbf16>
    "tpu.trace_start"() <{level = 10 : i32, message = "bqd,bkd->bqk"}> : () -> ()
    %cst_27 = arith.constant dense<0.000000e+00> : vector<1x8x8xf32>
    %81 = tpu.matmul %74, %77, %cst_27 {dimension_numbers = #tpu.dot_dimension_numbers<[2], [2], [1], [1], [0, 0, 0, 1, 1, 1], [0], [0]>} : vector<1x8x8xbf16>, vector<1x8x8xbf16>, vector<1x8x8xf32> -> vector<1x8x8xf32>
    "tpu.trace_stop"() : () -> ()
    %82 = arith.addf %81, %6 : vector<1x8x8xf32>
    %cst_28 = arith.constant dense<0xFF800000> : vector<1x8xf32>
    %83 = vector.multi_reduction <maximumf>, %82, %cst_28 [2] : vector<1x8x8xf32> to vector<1x8xf32>
    %84 = vector.shape_cast %83 : vector<1x8xf32> to vector<1x8x1xf32>
    %85 = vector.broadcast %84 : vector<1x8x1xf32> to vector<1x8x8xf32>
    %86 = arith.subf %82, %85 : vector<1x8x8xf32>
    %87 = math.exp %86 : vector<1x8x8xf32>
    %cst_29 = arith.constant dense<0.000000e+00> : vector<1x8xf32>
    %88 = vector.multi_reduction <add>, %87, %cst_29 [2] : vector<1x8x8xf32> to vector<1x8xf32>
    %89 = vector.shape_cast %88 : vector<1x8xf32> to vector<1x8x1xf32>
    %90 = tpu.reciprocal %89 {approx = true} : vector<1x8x1xf32> -> vector<1x8x1xf32>
    %91 = vector.broadcast %90 : vector<1x8x1xf32> to vector<1x8x8xf32>
    %92 = arith.mulf %87, %91 : vector<1x8x8xf32>
    %93 = arith.truncf %92 : vector<1x8x8xf32> to vector<1x8x8xbf16>
    "tpu.trace_start"() <{level = 10 : i32, message = "bqk,bkd->bqd"}> : () -> ()
    %cst_30 = arith.constant dense<0.000000e+00> : vector<1x8x8xf32>
    %94 = tpu.matmul %93, %80, %cst_30 {dimension_numbers = #tpu.dot_dimension_numbers<[2], [1], [1], [2], [0, 0, 0, 1, 1, 2], [0], [0]>} : vector<1x8x8xbf16>, vector<1x8x8xbf16>, vector<1x8x8xf32> -> vector<1x8x8xf32>
    "tpu.trace_stop"() : () -> ()
    %95 = vector.shape_cast %94 : vector<1x8x8xf32> to vector<8x8xf32>
    %96 = arith.truncf %95 : vector<8x8xf32> to vector<8x8xbf16>
    %c2 = arith.constant 2 : index
    %c0_31 = arith.constant 0 : index
    %c0_32 = arith.constant 0 : index
    %97 = vector.load %arg6[%c2, %c0_31, %c0_32] : memref<4x8x32xbf16, #tpu.memory_space<vmem>>, vector<1x8x32xbf16>
    %98 = vector.shape_cast %97 : vector<1x8x32xbf16> to vector<8x32xbf16>
    %cst_33 = arith.constant dense<0.000000e+00> : vector<8x32xf32>
    %99 = tpu.matmul %96, %98, %cst_33 {dimension_numbers = #tpu.dot_dimension_numbers<[1], [0], [0], [1], [0, 0, 1, 1], [], []>} : vector<8x8xbf16>, vector<8x32xbf16>, vector<8x32xf32> -> vector<8x32xf32>
    %100 = arith.addf %71, %99 : vector<8x32xf32>
    %101 = vector.extract_strided_slice %12 {offsets = [0, 24], sizes = [8, 8], strides = [1, 1]} : vector<8x96xf32> to vector<8x8xf32>
    %102 = arith.truncf %101 : vector<8x8xf32> to vector<8x8xbf16>
    %103 = vector.shape_cast %102 : vector<8x8xbf16> to vector<1x8x8xbf16>
    %104 = vector.extract_strided_slice %12 {offsets = [0, 56], sizes = [8, 8], strides = [1, 1]} : vector<8x96xf32> to vector<8x8xf32>
    %105 = arith.truncf %104 : vector<8x8xf32> to vector<8x8xbf16>
    %106 = vector.shape_cast %105 : vector<8x8xbf16> to vector<1x8x8xbf16>
    %107 = vector.extract_strided_slice %12 {offsets = [0, 88], sizes = [8, 8], strides = [1, 1]} : vector<8x96xf32> to vector<8x8xf32>
    %108 = arith.truncf %107 : vector<8x8xf32> to vector<8x8xbf16>
    %109 = vector.shape_cast %108 : vector<8x8xbf16> to vector<1x8x8xbf16>
    "tpu.trace_start"() <{level = 10 : i32, message = "bqd,bkd->bqk"}> : () -> ()
    %cst_34 = arith.constant dense<0.000000e+00> : vector<1x8x8xf32>
    %110 = tpu.matmul %103, %106, %cst_34 {dimension_numbers = #tpu.dot_dimension_numbers<[2], [2], [1], [1], [0, 0, 0, 1, 1, 1], [0], [0]>} : vector<1x8x8xbf16>, vector<1x8x8xbf16>, vector<1x8x8xf32> -> vector<1x8x8xf32>
    "tpu.trace_stop"() : () -> ()
    %111 = arith.addf %110, %6 : vector<1x8x8xf32>
    %cst_35 = arith.constant dense<0xFF800000> : vector<1x8xf32>
    %112 = vector.multi_reduction <maximumf>, %111, %cst_35 [2] : vector<1x8x8xf32> to vector<1x8xf32>
    %113 = vector.shape_cast %112 : vector<1x8xf32> to vector<1x8x1xf32>
    %114 = vector.broadcast %113 : vector<1x8x1xf32> to vector<1x8x8xf32>
    %115 = arith.subf %111, %114 : vector<1x8x8xf32>
    %116 = math.exp %115 : vector<1x8x8xf32>
    %cst_36 = arith.constant dense<0.000000e+00> : vector<1x8xf32>
    %117 = vector.multi_reduction <add>, %116, %cst_36 [2] : vector<1x8x8xf32> to vector<1x8xf32>
    %118 = vector.shape_cast %117 : vector<1x8xf32> to vector<1x8x1xf32>
    %119 = tpu.reciprocal %118 {approx = true} : vector<1x8x1xf32> -> vector<1x8x1xf32>
    %120 = vector.broadcast %119 : vector<1x8x1xf32> to vector<1x8x8xf32>
    %121 = arith.mulf %116, %120 : vector<1x8x8xf32>
    %122 = arith.truncf %121 : vector<1x8x8xf32> to vector<1x8x8xbf16>
    "tpu.trace_start"() <{level = 10 : i32, message = "bqk,bkd->bqd"}> : () -> ()
    %cst_37 = arith.constant dense<0.000000e+00> : vector<1x8x8xf32>
    %123 = tpu.matmul %122, %109, %cst_37 {dimension_numbers = #tpu.dot_dimension_numbers<[2], [1], [1], [2], [0, 0, 0, 1, 1, 2], [0], [0]>} : vector<1x8x8xbf16>, vector<1x8x8xbf16>, vector<1x8x8xf32> -> vector<1x8x8xf32>
    "tpu.trace_stop"() : () -> ()
    %124 = vector.shape_cast %123 : vector<1x8x8xf32> to vector<8x8xf32>
    %125 = arith.truncf %124 : vector<8x8xf32> to vector<8x8xbf16>
    %c3 = arith.constant 3 : index
    %c0_38 = arith.constant 0 : index
    %c0_39 = arith.constant 0 : index
    %126 = vector.load %arg6[%c3, %c0_38, %c0_39] : memref<4x8x32xbf16, #tpu.memory_space<vmem>>, vector<1x8x32xbf16>
    %127 = vector.shape_cast %126 : vector<1x8x32xbf16> to vector<8x32xbf16>
    %cst_40 = arith.constant dense<0.000000e+00> : vector<8x32xf32>
    %128 = tpu.matmul %125, %127, %cst_40 {dimension_numbers = #tpu.dot_dimension_numbers<[1], [0], [0], [1], [0, 0, 1, 1], [], []>} : vector<8x8xbf16>, vector<8x32xbf16>, vector<8x32xf32> -> vector<8x32xf32>
    %129 = arith.addf %100, %128 : vector<8x32xf32>
    %c0_41 = arith.constant 0 : index
    %c0_42 = arith.constant 0 : index
    %130 = vector.load %arg7[%c0_41, %c0_42] : memref<1x32xf32, #tpu.memory_space<vmem>>, vector<1x32xf32>
    %131 = vector.broadcast %130 : vector<1x32xf32> to vector<8x32xf32>
    %132 = arith.addf %129, %131 : vector<8x32xf32>
    %133 = arith.addf %1, %132 : vector<8x32xf32>
    %c0_43 = arith.constant 0 : index
    %c0_44 = arith.constant 0 : index
    %134 = vector.load %arg12[%c0_43, %c0_44] : memref<1x32xf32, #tpu.memory_space<vmem>>, vector<1x32xf32>
    %c0_45 = arith.constant 0 : index
    %c0_46 = arith.constant 0 : index
    %135 = vector.load %arg13[%c0_45, %c0_46] : memref<1x32xf32, #tpu.memory_space<vmem>>, vector<1x32xf32>
    %cst_47 = arith.constant dense<0.000000e+00> : vector<8xf32>
    %136 = vector.multi_reduction <add>, %133, %cst_47 [1] : vector<8x32xf32> to vector<8xf32>
    %137 = vector.shape_cast %136 : vector<8xf32> to vector<8x1xf32>
    %cst_48 = arith.constant 3.200000e+01 : f32
    %138 = vector.broadcast %cst_48 : f32 to vector<8x1xf32>
    %139 = arith.divf %137, %138 : vector<8x1xf32>
    %140 = vector.broadcast %139 : vector<8x1xf32> to vector<8x32xf32>
    %141 = arith.subf %133, %140 : vector<8x32xf32>
    %142 = arith.mulf %141, %141 : vector<8x32xf32>
    %cst_49 = arith.constant dense<0.000000e+00> : vector<8xf32>
    %143 = vector.multi_reduction <add>, %142, %cst_49 [1] : vector<8x32xf32> to vector<8xf32>
    %144 = vector.shape_cast %143 : vector<8xf32> to vector<8x1xf32>
    %cst_50 = arith.constant 3.200000e+01 : f32
    %145 = vector.broadcast %cst_50 : f32 to vector<8x1xf32>
    %146 = arith.divf %144, %145 : vector<8x1xf32>
    %147 = vector.broadcast %139 : vector<8x1xf32> to vector<8x32xf32>
    %148 = arith.subf %133, %147 : vector<8x32xf32>
    %cst_51 = arith.constant 9.99999974E-6 : f32
    %149 = vector.broadcast %cst_51 : f32 to vector<8x1xf32>
    %150 = arith.addf %146, %149 : vector<8x1xf32>
    %151 = math.rsqrt %150 : vector<8x1xf32>
    %152 = vector.broadcast %151 : vector<8x1xf32> to vector<8x32xf32>
    %153 = arith.mulf %148, %152 : vector<8x32xf32>
    %154 = vector.broadcast %134 : vector<1x32xf32> to vector<8x32xf32>
    %155 = arith.mulf %153, %154 : vector<8x32xf32>
    %156 = vector.broadcast %135 : vector<1x32xf32> to vector<8x32xf32>
    %157 = arith.addf %155, %156 : vector<8x32xf32>
    %158 = arith.truncf %157 : vector<8x32xf32> to vector<8x32xbf16>
    %cst_52 = arith.constant 0.000000e+00 : f32
    %159 = vector.broadcast %cst_52 : f32 to vector<8x32xf32>
    %c0_53 = arith.constant 0 : index
    %c0_54 = arith.constant 0 : index
    %160 = vector.load %arg8[%c0_53, %c0_54] : memref<32x2048xbf16, #tpu.memory_space<vmem>>, vector<32x512xbf16>
    %cst_55 = arith.constant dense<0.000000e+00> : vector<8x512xf32>
    %161 = tpu.matmul %158, %160, %cst_55 {dimension_numbers = #tpu.dot_dimension_numbers<[1], [0], [0], [1], [0, 0, 1, 1], [], []>} : vector<8x32xbf16>, vector<32x512xbf16>, vector<8x512xf32> -> vector<8x512xf32>
    %c0_56 = arith.constant 0 : index
    %c0_57 = arith.constant 0 : index
    %162 = vector.load %arg9[%c0_56, %c0_57] : memref<1x2048xf32, #tpu.memory_space<vmem>>, vector<1x512xf32>
    %163 = vector.broadcast %162 : vector<1x512xf32> to vector<8x512xf32>
    %164 = arith.addf %161, %163 : vector<8x512xf32>
    %cst_58 = arith.constant 0.000000e+00 : f32
    %165 = vector.broadcast %cst_58 : f32 to vector<8x512xf32>
    %166 = arith.maximumf %164, %165 : vector<8x512xf32>
    %167 = arith.truncf %166 : vector<8x512xf32> to vector<8x512xbf16>
    %c0_59 = arith.constant 0 : index
    %c0_60 = arith.constant 0 : index
    %168 = vector.load %arg10[%c0_59, %c0_60] : memref<2048x32xbf16, #tpu.memory_space<vmem>>, vector<512x32xbf16>
    %cst_61 = arith.constant dense<0.000000e+00> : vector<8x32xf32>
    %169 = tpu.matmul %167, %168, %cst_61 {dimension_numbers = #tpu.dot_dimension_numbers<[1], [0], [0], [1], [0, 0, 1, 1], [], []>} : vector<8x512xbf16>, vector<512x32xbf16>, vector<8x32xf32> -> vector<8x32xf32>
    %170 = arith.addf %159, %169 : vector<8x32xf32>
    %c0_62 = arith.constant 0 : index
    %c512 = arith.constant 512 : index
    %171 = vector.load %arg8[%c0_62, %c512] : memref<32x2048xbf16, #tpu.memory_space<vmem>>, vector<32x512xbf16>
    %cst_63 = arith.constant dense<0.000000e+00> : vector<8x512xf32>
    %172 = tpu.matmul %158, %171, %cst_63 {dimension_numbers = #tpu.dot_dimension_numbers<[1], [0], [0], [1], [0, 0, 1, 1], [], []>} : vector<8x32xbf16>, vector<32x512xbf16>, vector<8x512xf32> -> vector<8x512xf32>
    %c0_64 = arith.constant 0 : index
    %c512_65 = arith.constant 512 : index
    %173 = vector.load %arg9[%c0_64, %c512_65] : memref<1x2048xf32, #tpu.memory_space<vmem>>, vector<1x512xf32>
    %174 = vector.broadcast %173 : vector<1x512xf32> to vector<8x512xf32>
    %175 = arith.addf %172, %174 : vector<8x512xf32>
    %cst_66 = arith.constant 0.000000e+00 : f32
    %176 = vector.broadcast %cst_66 : f32 to vector<8x512xf32>
    %177 = arith.maximumf %175, %176 : vector<8x512xf32>
    %178 = arith.truncf %177 : vector<8x512xf32> to vector<8x512xbf16>
    %c512_67 = arith.constant 512 : index
    %c0_68 = arith.constant 0 : index
    %179 = vector.load %arg10[%c512_67, %c0_68] : memref<2048x32xbf16, #tpu.memory_space<vmem>>, vector<512x32xbf16>
    %cst_69 = arith.constant dense<0.000000e+00> : vector<8x32xf32>
    %180 = tpu.matmul %178, %179, %cst_69 {dimension_numbers = #tpu.dot_dimension_numbers<[1], [0], [0], [1], [0, 0, 1, 1], [], []>} : vector<8x512xbf16>, vector<512x32xbf16>, vector<8x32xf32> -> vector<8x32xf32>
    %181 = arith.addf %170, %180 : vector<8x32xf32>
    %c0_70 = arith.constant 0 : index
    %c1024 = arith.constant 1024 : index
    %182 = vector.load %arg8[%c0_70, %c1024] : memref<32x2048xbf16, #tpu.memory_space<vmem>>, vector<32x512xbf16>
    %cst_71 = arith.constant dense<0.000000e+00> : vector<8x512xf32>
    %183 = tpu.matmul %158, %182, %cst_71 {dimension_numbers = #tpu.dot_dimension_numbers<[1], [0], [0], [1], [0, 0, 1, 1], [], []>} : vector<8x32xbf16>, vector<32x512xbf16>, vector<8x512xf32> -> vector<8x512xf32>
    %c0_72 = arith.constant 0 : index
    %c1024_73 = arith.constant 1024 : index
    %184 = vector.load %arg9[%c0_72, %c1024_73] : memref<1x2048xf32, #tpu.memory_space<vmem>>, vector<1x512xf32>
    %185 = vector.broadcast %184 : vector<1x512xf32> to vector<8x512xf32>
    %186 = arith.addf %183, %185 : vector<8x512xf32>
    %cst_74 = arith.constant 0.000000e+00 : f32
    %187 = vector.broadcast %cst_74 : f32 to vector<8x512xf32>
    %188 = arith.maximumf %186, %187 : vector<8x512xf32>
    %189 = arith.truncf %188 : vector<8x512xf32> to vector<8x512xbf16>
    %c1024_75 = arith.constant 1024 : index
    %c0_76 = arith.constant 0 : index
    %190 = vector.load %arg10[%c1024_75, %c0_76] : memref<2048x32xbf16, #tpu.memory_space<vmem>>, vector<512x32xbf16>
    %cst_77 = arith.constant dense<0.000000e+00> : vector<8x32xf32>
    %191 = tpu.matmul %189, %190, %cst_77 {dimension_numbers = #tpu.dot_dimension_numbers<[1], [0], [0], [1], [0, 0, 1, 1], [], []>} : vector<8x512xbf16>, vector<512x32xbf16>, vector<8x32xf32> -> vector<8x32xf32>
    %192 = arith.addf %181, %191 : vector<8x32xf32>
    %c0_78 = arith.constant 0 : index
    %c1536 = arith.constant 1536 : index
    %193 = vector.load %arg8[%c0_78, %c1536] : memref<32x2048xbf16, #tpu.memory_space<vmem>>, vector<32x512xbf16>
    %cst_79 = arith.constant dense<0.000000e+00> : vector<8x512xf32>
    %194 = tpu.matmul %158, %193, %cst_79 {dimension_numbers = #tpu.dot_dimension_numbers<[1], [0], [0], [1], [0, 0, 1, 1], [], []>} : vector<8x32xbf16>, vector<32x512xbf16>, vector<8x512xf32> -> vector<8x512xf32>
    %c0_80 = arith.constant 0 : index
    %c1536_81 = arith.constant 1536 : index
    %195 = vector.load %arg9[%c0_80, %c1536_81] : memref<1x2048xf32, #tpu.memory_space<vmem>>, vector<1x512xf32>
    %196 = vector.broadcast %195 : vector<1x512xf32> to vector<8x512xf32>
    %197 = arith.addf %194, %196 : vector<8x512xf32>
    %cst_82 = arith.constant 0.000000e+00 : f32
    %198 = vector.broadcast %cst_82 : f32 to vector<8x512xf32>
    %199 = arith.maximumf %197, %198 : vector<8x512xf32>
    %200 = arith.truncf %199 : vector<8x512xf32> to vector<8x512xbf16>
    %c1536_83 = arith.constant 1536 : index
    %c0_84 = arith.constant 0 : index
    %201 = vector.load %arg10[%c1536_83, %c0_84] : memref<2048x32xbf16, #tpu.memory_space<vmem>>, vector<512x32xbf16>
    %cst_85 = arith.constant dense<0.000000e+00> : vector<8x32xf32>
    %202 = tpu.matmul %200, %201, %cst_85 {dimension_numbers = #tpu.dot_dimension_numbers<[1], [0], [0], [1], [0, 0, 1, 1], [], []>} : vector<8x512xbf16>, vector<512x32xbf16>, vector<8x32xf32> -> vector<8x32xf32>
    %203 = arith.addf %192, %202 : vector<8x32xf32>
    %c0_86 = arith.constant 0 : index
    %c0_87 = arith.constant 0 : index
    %204 = vector.load %arg11[%c0_86, %c0_87] : memref<1x32xf32, #tpu.memory_space<vmem>>, vector<1x32xf32>
    %205 = vector.broadcast %204 : vector<1x32xf32> to vector<8x32xf32>
    %206 = arith.addf %203, %205 : vector<8x32xf32>
    %207 = arith.addf %157, %206 : vector<8x32xf32>
    %c0_88 = arith.constant 0 : index
    %c0_89 = arith.constant 0 : index
    %208 = vector.load %arg14[%c0_88, %c0_89] : memref<1x32xf32, #tpu.memory_space<vmem>>, vector<1x32xf32>
    %c0_90 = arith.constant 0 : index
    %c0_91 = arith.constant 0 : index
    %209 = vector.load %arg15[%c0_90, %c0_91] : memref<1x32xf32, #tpu.memory_space<vmem>>, vector<1x32xf32>
    %cst_92 = arith.constant dense<0.000000e+00> : vector<8xf32>
    %210 = vector.multi_reduction <add>, %207, %cst_92 [1] : vector<8x32xf32> to vector<8xf32>
    %211 = vector.shape_cast %210 : vector<8xf32> to vector<8x1xf32>
    %cst_93 = arith.constant 3.200000e+01 : f32
    %212 = vector.broadcast %cst_93 : f32 to vector<8x1xf32>
    %213 = arith.divf %211, %212 : vector<8x1xf32>
    %214 = vector.broadcast %213 : vector<8x1xf32> to vector<8x32xf32>
    %215 = arith.subf %207, %214 : vector<8x32xf32>
    %216 = arith.mulf %215, %215 : vector<8x32xf32>
    %cst_94 = arith.constant dense<0.000000e+00> : vector<8xf32>
    %217 = vector.multi_reduction <add>, %216, %cst_94 [1] : vector<8x32xf32> to vector<8xf32>
    %218 = vector.shape_cast %217 : vector<8xf32> to vector<8x1xf32>
    %cst_95 = arith.constant 3.200000e+01 : f32
    %219 = vector.broadcast %cst_95 : f32 to vector<8x1xf32>
    %220 = arith.divf %218, %219 : vector<8x1xf32>
    %221 = vector.broadcast %213 : vector<8x1xf32> to vector<8x32xf32>
    %222 = arith.subf %207, %221 : vector<8x32xf32>
    %cst_96 = arith.constant 9.99999974E-6 : f32
    %223 = vector.broadcast %cst_96 : f32 to vector<8x1xf32>
    %224 = arith.addf %220, %223 : vector<8x1xf32>
    %225 = math.rsqrt %224 : vector<8x1xf32>
    %226 = vector.broadcast %225 : vector<8x1xf32> to vector<8x32xf32>
    %227 = arith.mulf %222, %226 : vector<8x32xf32>
    %228 = vector.broadcast %208 : vector<1x32xf32> to vector<8x32xf32>
    %229 = arith.mulf %227, %228 : vector<8x32xf32>
    %230 = vector.broadcast %209 : vector<1x32xf32> to vector<8x32xf32>
    %231 = arith.addf %229, %230 : vector<8x32xf32>
    %232 = vector.shape_cast %231 : vector<8x32xf32> to vector<1x8x32xf32>
    %c0_97 = arith.constant 0 : index
    %c0_98 = arith.constant 0 : index
    %c0_99 = arith.constant 0 : index
    %233 = vector.load %arg16[%c0_97, %c0_98, %c0_99] : memref<1x8x32xf32, #tpu.memory_space<vmem>>, vector<1x8x32xf32>
    tpu.vector_store %arg16[%c0_97, %c0_98, %c0_99], %232 {strides = array<i32>} : memref<1x8x32xf32, #tpu.memory_space<vmem>>, vector<1x8x32xf32>,
    return
  }
  func.func @transform_0(%arg0: i32) -> (i32, i32, i32) {
    %c0_i32 = arith.constant 0 : i32
    %c0_i32_0 = arith.constant 0 : i32
    %c0_i32_1 = arith.constant 0 : i32
    return %arg0, %c0_i32, %c0_i32_0 : i32, i32, i32
  }
  func.func @transform_1(%arg0: i32) -> (i32, i32, i32) {
    %c0_i32 = arith.constant 0 : i32
    %c0_i32_0 = arith.constant 0 : i32
    %c0_i32_1 = arith.constant 0 : i32
    return %arg0, %c0_i32, %c0_i32_0 : i32, i32, i32
  }
  func.func @transform_2(%arg0: i32) -> (i32, i32) {
    %c0_i32 = arith.constant 0 : i32
    %c0_i32_0 = arith.constant 0 : i32
    %c0_i32_1 = arith.constant 0 : i32
    return %c0_i32, %c0_i32_0 : i32, i32
  }
  func.func @transform_3(%arg0: i32) -> (i32, i32) {
    %c0_i32 = arith.constant 0 : i32
    %c0_i32_0 = arith.constant 0 : i32
    %c0_i32_1 = arith.constant 0 : i32
    return %c0_i32, %c0_i32_0 : i32, i32
  }
  func.func @transform_4(%arg0: i32) -> (i32, i32) {
    %c0_i32 = arith.constant 0 : i32
    %c0_i32_0 = arith.constant 0 : i32
    %c0_i32_1 = arith.constant 0 : i32
    return %c0_i32, %c0_i32_0 : i32, i32
  }
  func.func @transform_5(%arg0: i32) -> (i32, i32, i32) {
    %c0_i32 = arith.constant 0 : i32
    %c0_i32_0 = arith.constant 0 : i32
    %c0_i32_1 = arith.constant 0 : i32
    %c0_i32_2 = arith.constant 0 : i32
    return %c0_i32, %c0_i32_0, %c0_i32_1 : i32, i32, i32
  }
  func.func @transform_6(%arg0: i32) -> (i32, i32) {
    %c0_i32 = arith.constant 0 : i32
    %c0_i32_0 = arith.constant 0 : i32
    %c0_i32_1 = arith.constant 0 : i32
    return %c0_i32, %c0_i32_0 : i32, i32
  }
  func.func @transform_7(%arg0: i32) -> (i32, i32) {
    %c0_i32 = arith.constant 0 : i32
    %c0_i32_0 = arith.constant 0 : i32
    %c0_i32_1 = arith.constant 0 : i32
    return %c0_i32, %c0_i32_0 : i32, i32
  }
  func.func @transform_8(%arg0: i32) -> (i32, i32) {
    %c0_i32 = arith.constant 0 : i32
    %c0_i32_0 = arith.constant 0 : i32
    %c0_i32_1 = arith.constant 0 : i32
    return %c0_i32, %c0_i32_0 : i32, i32
  }
  func.func @transform_9(%arg0: i32) -> (i32, i32) {
    %c0_i32 = arith.constant 0 : i32
    %c0_i32_0 = arith.constant 0 : i32
    %c0_i32_1 = arith.constant 0 : i32
    return %c0_i32, %c0_i32_0 : i32, i32
  }
  func.func @transform_10(%arg0: i32) -> (i32, i32) {
    %c0_i32 = arith.constant 0 : i32
    %c0_i32_0 = arith.constant 0 : i32
    %c0_i32_1 = arith.constant 0 : i32
    return %c0_i32, %c0_i32_0 : i32, i32
  }
  func.func @transform_11(%arg0: i32) -> (i32, i32) {
    %c0_i32 = arith.constant 0 : i32
    %c0_i32_0 = arith.constant 0 : i32
    %c0_i32_1 = arith.constant 0 : i32
    return %c0_i32, %c0_i32_0 : i32, i32
  }
  func.func @transform_12(%arg0: i32) -> (i32, i32) {
    %c0_i32 = arith.constant 0 : i32
    %c0_i32_0 = arith.constant 0 : i32
    %c0_i32_1 = arith.constant 0 : i32
    return %c0_i32, %c0_i32_0 : i32, i32
  }
  func.func @transform_13(%arg0: i32) -> (i32, i32) {
    %c0_i32 = arith.constant 0 : i32
    %c0_i32_0 = arith.constant 0 : i32
    %c0_i32_1 = arith.constant 0 : i32
    return %c0_i32, %c0_i32_0 : i32, i32
  }
  func.func @transform_14(%arg0: i32) -> (i32, i32) {
    %c0_i32 = arith.constant 0 : i32
    %c0_i32_0 = arith.constant 0 : i32
    %c0_i32_1 = arith.constant 0 : i32
    return %c0_i32, %c0_i32_0 : i32, i32
  }
  func.func @transform_15(%arg0: i32) -> (i32, i32, i32) {
    %c0_i32 = arith.constant 0 : i32
    %c0_i32_0 = arith.constant 0 : i32
    %c0_i32_1 = arith.constant 0 : i32
    return %arg0, %c0_i32, %c0_i32_0 : i32, i32, i32
  }
}

</mosaic_0001>

<llo_original>
// kernel: _session_encoder_impl.1
$region0: #{_session_encoder_impl.1}
  #allocation0 [shape = 'u32[]', space=smem, size = 0x4, offset = 0x4, fixed_abs, tag = 'smem constant byte address 0x4 - core index']
  #allocation1 [shape = 'u32[144,128]{1,0:T(1,128)}', space=vmem, size = 0x12000, scoped, tag = 'internal scratch']
  %s0 = inlined_call_operand.hbm [shape: f32[2,8,32], index: 0, kind: input, shape index: {}]
  %s1 = inlined_call_operand.hbm [shape: f32[2,1,8], index: 1, kind: input, shape index: {}]
  %s2 = inlined_call_operand.hbm [shape: f32[8,8], index: 2, kind: input, shape index: {}]
  %s3 = inlined_call_operand.hbm [shape: bf16[32,96], index: 3, kind: input, shape index: {}]
  %s4 = inlined_call_operand.hbm [shape: f32[1,96], index: 4, kind: input, shape index: {}]
  %s5 = inlined_call_operand.hbm [shape: bf16[4,8,32], index: 5, kind: input, shape index: {}]
  %s6 = inlined_call_operand.hbm [shape: f32[1,32], index: 6, kind: input, shape index: {}]
  %s7 = inlined_call_operand.hbm [shape: bf16[32,2048], index: 7, kind: input, shape index: {}]
  %s8 = inlined_call_operand.hbm [shape: f32[1,2048], index: 8, kind: input, shape index: {}]
  %s9 = inlined_call_operand.hbm [shape: bf16[2048,32], index: 9, kind: input, shape index: {}]
  %s10 = inlined_call_operand.hbm [shape: f32[1,32], index: 10, kind: input, shape index: {}]
  %s11 = inlined_call_operand.hbm [shape: f32[1,32], index: 11, kind: input, shape index: {}]
  %s12 = inlined_call_operand.hbm [shape: f32[1,32], index: 12, kind: input, shape index: {}]
  %s13 = inlined_call_operand.hbm [shape: f32[1,32], index: 13, kind: input, shape index: {}]
  %s14 = inlined_call_operand.hbm [shape: f32[1,32], index: 14, kind: input, shape index: {}]
  %s15 = inlined_call_operand.hbm [shape: f32[2,8,32], index: 15, kind: output, shape index: {}]
  %s16 = sld [smem:[#allocation0]]
  $region153: #{_session_encoder_impl.1} parent=0
    _
  %s18 = ssub.s32 1, %s16
  %s19 = scalar_select 0, %s18, %s16
  $region1: #{_session_encoder_impl.1} parent=0
    #allocation2 [shape = 'u8[8192]{0}', space=vmem, size = 0x2000, scoped, tag = 'input window, operand 0']
    #allocation3 [shape = 's32[2]{0}', space=sflag, size = 0x8, scoped, tag = 'scoped memory for _session_encoder_impl.1']
    #allocation4 [shape = 's32[2]{0}', space=sflag, size = 0x8, scoped, tag = 'scoped memory for _session_encoder_impl.1']
    #allocation5 [shape = 'u8[1024]{0}', space=vmem, size = 0x400, scoped, tag = 'input window, operand 1']
    #allocation6 [shape = 's32[2]{0}', space=sflag, size = 0x8, scoped, tag = 'scoped memory for _session_encoder_impl.1']
    #allocation7 [shape = 'u8[4096]{0}', space=vmem, size = 0x1000, scoped, tag = 'input window, operand 2, single buffered']
    #allocation8 [shape = 'u8[8192]{0}', space=vmem, size = 0x2000, scoped, tag = 'input window, operand 3, single buffered']
    #allocation9 [shape = 's32[1]{0}', space=sflag, size = 0x4, scoped, tag = 'scoped memory for _session_encoder_impl.1']
    #allocation10 [shape = 'u8[512]{0}', space=vmem, size = 0x400, scoped, tag = 'input window, operand 4, single buffered']
    #allocation11 [shape = 'u8[8192]{0}', space=vmem, size = 0x2000, scoped, tag = 'input window, operand 5, single buffered']
    #allocation12 [shape = 's32[1]{0}', space=sflag, size = 0x4, scoped, tag = 'scoped memory for _session_encoder_impl.1']
    #allocation13 [shape = 'u8[512]{0}', space=vmem, size = 0x400, scoped, tag = 'input window, operand 6, single buffered']
    #allocation14 [shape = 'u8[131072]{0}', space=vmem, size = 0x20000, scoped, tag = 'input window, operand 7, single buffered']
    #allocation15 [shape = 's32[1]{0}', space=sflag, size = 0x4, scoped, tag = 'scoped memory for _session_encoder_impl.1']
    #allocation16 [shape = 'u8[8192]{0}', space=vmem, size = 0x2000, scoped, tag = 'input window, operand 8, single buffered']
    #allocation17 [shape = 'u8[524288]{0}', space=vmem, size = 0x80000, scoped, tag = 'input window, operand 9, single buffered']
    #allocation18 [shape = 's32[1]{0}', space=sflag, size = 0x4, scoped, tag = 'scoped memory for _session_encoder_impl.1']
    #allocation19 [shape = 'u8[512]{0}', space=vmem, size = 0x400, scoped, tag = 'input window, operand 10, single buffered']
    #allocation20 [shape = 'u8[512]{0}', space=vmem, size = 0x400, scoped, tag = 'input window, operand 11, single buffered']
    #allocation21 [shape = 's32[1]{0}', space=sflag, size = 0x4, scoped, tag = 'scoped memory for _session_encoder_impl.1']
    #allocation22 [shape = 'u8[512]{0}', space=vmem, size = 0x400, scoped, tag = 'input window, operand 12, single buffered']
    #allocation23 [shape = 'u8[512]{0}', space=vmem, size = 0x400, scoped, tag = 'input window, operand 13, single buffered']
    #allocation24 [shape = 's32[1]{0}', space=sflag, size = 0x4, scoped, tag = 'scoped memory for _session_encoder_impl.1']
    #allocation25 [shape = 'u8[512]{0}', space=vmem, size = 0x400, scoped, tag = 'input window, operand 14, single buffered']
    #allocation26 [shape = 'u8[8192]{0}', space=vmem, size = 0x2000, scoped, tag = 'output window, operand 0']
    %20 = vsyncpa [#allocation3], 0
    %s21 = scalar_lea.sflag [#allocation3], 1
    %22 = vsyncpa %s21, 0
    %23 = vsyncpa [#allocation6], 0
    %s24 = scalar_lea.sflag [#allocation6], 1
    %25 = vsyncpa %s24, 0
    %26 = vsyncpa [#allocation9], 0
    %27 = vsyncpa [#allocation12], 0
    %28 = vsyncpa [#allocation15], 0
    %29 = vsyncpa [#allocation18], 0
    %30 = vsyncpa [#allocation21], 0
    %31 = vsyncpa [#allocation24], 0
    %32 = vsyncpa [#allocation4], 0
    %s33 = scalar_lea.sflag [#allocation4], 1
    %34 = vsyncpa %s33, 0
    loop: start=0, step=1, limit=4
    $region2: #{_session_encoder_impl.1} parent=1 // loop_pre_header
      _
    $region3: #{_session_encoder_impl.1} parent=1 // loop_header
      %s36 = sphi 0, %s40
      %p37 = scmp.ge.s32.totalorder %s36, 4
      %s46 = sphi 0, %s48
      %s49 = sphi 0, %s46
      %s50 = sphi 0, %s49
      %s66 = sphi 0, %s50
      %s72 = sphi 0, %s74
      %s75 = sphi 0, %s72
      %s76 = sphi 0, %s75
      %s92 = sphi 0, %s76
      %s96 = sphi 0, %s96
      %s98 = sphi 0, %s96
      %s99 = sphi 0, %s98
      %s113 = sphi 0, %s99
      %s117 = sphi 0, %s117
      %s119 = sphi 0, %s117
      %s120 = sphi 0, %s119
      %s134 = sphi 0, %s120
      %s138 = sphi 0, %s138
      %s140 = sphi 0, %s138
      %s141 = sphi 0, %s140
      %s155 = sphi 0, %s141
      %s159 = sphi 0, %s159
      %s161 = sphi 0, %s159
      %s162 = sphi 0, %s161
      %s176 = sphi 0, %s162
      %s180 = sphi 0, %s180
      %s182 = sphi 0, %s180
      %s183 = sphi 0, %s182
      %s197 = sphi 0, %s183
      %s201 = sphi 0, %s201
      %s203 = sphi 0, %s201
      %s204 = sphi 0, %s203
      %s218 = sphi 0, %s204
      %s222 = sphi 0, %s222
      %s224 = sphi 0, %s222
      %s225 = sphi 0, %s224
      %s239 = sphi 0, %s225
      %s243 = sphi 0, %s243
      %s245 = sphi 0, %s243
      %s246 = sphi 0, %s245
      %s260 = sphi 0, %s246
      %s264 = sphi 0, %s264
      %s266 = sphi 0, %s264
      %s267 = sphi 0, %s266
      %s281 = sphi 0, %s267
      %s285 = sphi 0, %s285
      %s287 = sphi 0, %s285
      %s288 = sphi 0, %s287
      %s302 = sphi 0, %s288
      %s306 = sphi 0, %s306
      %s308 = sphi 0, %s306
      %s309 = sphi 0, %s308
      %s323 = sphi 0, %s309
      %s327 = sphi 0, %s327
      %s329 = sphi 0, %s327
      %s330 = sphi 0, %s329
      %s344 = sphi 0, %s330
      %s348 = sphi 0, %s348
      %s350 = sphi 0, %s348
      %s351 = sphi 0, %s350
      %s365 = sphi 0, %s351
      %s371 = sphi 0, %s373
      %s374 = sphi 0, %s371
      %s375 = sphi 0, %s374
      %s391 = sphi 0, %s375
    $region4: #{_session_encoder_impl.1} parent=1 // loop_header_branch
      %39 = sbr.rel (%p37) target = $region8
    $region5: #{_session_encoder_impl.1} parent=1 // loop_body
      %s41 = ssub.s32 %s36, 1
      %s42 = ssub.s32 %s36, 2
      %s43 = sadd.s32 %s36, 1
      %s44 = ssub.s32 %s36, %s43
      %p45 = scmp.eq.s32.totalorder %s44, 0
      %s47 = sadd.s32 %s46, 1
      %s48 = scalar_select %p45, %s46, %s47
      %p51 = pneg %p45
      %p52 = scmp.eq.s32.totalorder %s36, 1
      %p53 = por %p51, %p52
      %p54 = scmp.ne.s32.totalorder %s46, %s49
      %p55 = scmp.eq.s32.totalorder %s36, 0
      %p56 = por %p54, %p55
      %p57 = scmp.ne.s32.totalorder %s46, %s49
      %p58 = scmp.eq.s32.totalorder %s41, 1
      %p59 = por %p57, %p58
      %p60 = scmp.ne.s32.totalorder %s49, %s50
      %p61 = scmp.eq.s32.totalorder %s41, 0
      %p62 = por %p60, %p61
      %p63 = scmp.ne.s32.totalorder %s49, %s50
      %p64 = scmp.eq.s32.totalorder %s42, 1
      %p65 = por %p63, %p64
      %p67 = scmp.ne.s32.totalorder %s50, %s66
      %p68 = scmp.eq.s32.totalorder %s42, 0
      %p69 = por %p67, %p68
      %s70 = ssub.s32 %s36, %s43
      %p71 = scmp.eq.s32.totalorder %s70, 0
      %s73 = sadd.s32 %s72, 1
      %s74 = scalar_select %p71, %s72, %s73
      %p77 = pneg %p71
      %p78 = scmp.eq.s32.totalorder %s36, 1
      %p79 = por %p77, %p78
      %p80 = scmp.ne.s32.totalorder %s72, %s75
      %p81 = scmp.eq.s32.totalorder %s36, 0
      %p82 = por %p80, %p81
      %p83 = scmp.ne.s32.totalorder %s72, %s75
      %p84 = scmp.eq.s32.totalorder %s41, 1
      %p85 = por %p83, %p84
      %p86 = scmp.ne.s32.totalorder %s75, %s76
      %p87 = scmp.eq.s32.totalorder %s41, 0
      %p88 = por %p86, %p87
      %p89 = scmp.ne.s32.totalorder %s75, %s76
      %p90 = scmp.eq.s32.totalorder %s42, 1
      %p91 = por %p89, %p90
      %p93 = scmp.ne.s32.totalorder %s76, %s92
      %p94 = scmp.eq.s32.totalorder %s42, 0
      %p95 = por %p93, %p94
      %s97 = sadd.s32 %s96, 1
      %p100 = scmp.eq.s32.totalorder %s36, 1
      %p101 = scmp.ne.s32.totalorder %s96, %s98
      %p102 = scmp.eq.s32.totalorder %s36, 0
      %p103 = por %p101, %p102
      %p104 = scmp.ne.s32.totalorder %s96, %s98
      %p105 = scmp.eq.s32.totalorder %s41, 1
      %p106 = por %p104, %p105
      %p107 = scmp.ne.s32.totalorder %s98, %s99
      %p108 = scmp.eq.s32.totalorder %s41, 0
      %p109 = por %p107, %p108
      %p110 = scmp.ne.s32.totalorder %s98, %s99
      %p111 = scmp.eq.s32.totalorder %s42, 1
      %p112 = por %p110, %p111
      %p114 = scmp.ne.s32.totalorder %s99, %s113
      %p115 = scmp.eq.s32.totalorder %s42, 0
      %p116 = por %p114, %p115
      %s118 = sadd.s32 %s117, 1
      %p121 = scmp.eq.s32.totalorder %s36, 1
      %p122 = scmp.ne.s32.totalorder %s117, %s119
      %p123 = scmp.eq.s32.totalorder %s36, 0
      %p124 = por %p122, %p123
      %p125 = scmp.ne.s32.totalorder %s117, %s119
      %p126 = scmp.eq.s32.totalorder %s41, 1
      %p127 = por %p125, %p126
      %p128 = scmp.ne.s32.totalorder %s119, %s120
      %p129 = scmp.eq.s32.totalorder %s41, 0
      %p130 = por %p128, %p129
      %p131 = scmp.ne.s32.totalorder %s119, %s120
      %p132 = scmp.eq.s32.totalorder %s42, 1
      %p133 = por %p131, %p132
      %p135 = scmp.ne.s32.totalorder %s120, %s134
      %p136 = scmp.eq.s32.totalorder %s42, 0
      %p137 = por %p135, %p136
      %s139 = sadd.s32 %s138, 1
      %p142 = scmp.eq.s32.totalorder %s36, 1
      %p143 = scmp.ne.s32.totalorder %s138, %s140
      %p144 = scmp.eq.s32.totalorder %s36, 0
      %p145 = por %p143, %p144
      %p146 = scmp.ne.s32.totalorder %s138, %s140
      %p147 = scmp.eq.s32.totalorder %s41, 1
      %p148 = por %p146, %p147
      %p149 = scmp.ne.s32.totalorder %s140, %s141
      %p150 = scmp.eq.s32.totalorder %s41, 0
      %p151 = por %p149, %p150
      %p152 = scmp.ne.s32.totalorder %s140, %s141
      %p153 = scmp.eq.s32.totalorder %s42, 1
      %p154 = por %p152, %p153
      %p156 = scmp.ne.s32.totalorder %s141, %s155
      %p157 = scmp.eq.s32.totalorder %s42, 0
      %p158 = por %p156, %p157
      %s160 = sadd.s32 %s159, 1
      %p163 = scmp.eq.s32.totalorder %s36, 1
      %p164 = scmp.ne.s32.totalorder %s159, %s161
      %p165 = scmp.eq.s32.totalorder %s36, 0
      %p166 = por %p164, %p165
      %p167 = scmp.ne.s32.totalorder %s159, %s161
      %p168 = scmp.eq.s32.totalorder %s41, 1
      %p169 = por %p167, %p168
      %p170 = scmp.ne.s32.totalorder %s161, %s162
      %p171 = scmp.eq.s32.totalorder %s41, 0
      %p172 = por %p170, %p171
      %p173 = scmp.ne.s32.totalorder %s161, %s162
      %p174 = scmp.eq.s32.totalorder %s42, 1
      %p175 = por %p173, %p174
      %p177 = scmp.ne.s32.totalorder %s162, %s176
      %p178 = scmp.eq.s32.totalorder %s42, 0
      %p179 = por %p177, %p178
      %s181 = sadd.s32 %s180, 1
      %p184 = scmp.eq.s32.totalorder %s36, 1
      %p185 = scmp.ne.s32.totalorder %s180, %s182
      %p186 = scmp.eq.s32.totalorder %s36, 0
      %p187 = por %p185, %p186
      %p188 = scmp.ne.s32.totalorder %s180, %s182
      %p189 = scmp.eq.s32.totalorder %s41, 1
      %p190 = por %p188, %p189
      %p191 = scmp.ne.s32.totalorder %s182, %s183
      %p192 = scmp.eq.s32.totalorder %s41, 0
      %p193 = por %p191, %p192
      %p194 = scmp.ne.s32.totalorder %s182, %s183
      %p195 = scmp.eq.s32.totalorder %s42, 1
      %p196 = por %p194, %p195
      %p198 = scmp.ne.s32.totalorder %s183, %s197
      %p199 = scmp.eq.s32.totalorder %s42, 0
      %p200 = por %p198, %p199
      %s202 = sadd.s32 %s201, 1
      %p205 = scmp.eq.s32.totalorder %s36, 1
      %p206 = scmp.ne.s32.totalorder %s201, %s203
      %p207 = scmp.eq.s32.totalorder %s36, 0
      %p208 = por %p206, %p207
      %p209 = scmp.ne.s32.totalorder %s201, %s203
      %p210 = scmp.eq.s32.totalorder %s41, 1
      %p211 = por %p209, %p210
      %p212 = scmp.ne.s32.totalorder %s203, %s204
      %p213 = scmp.eq.s32.totalorder %s41, 0
      %p214 = por %p212, %p213
      %p215 = scmp.ne.s32.totalorder %s203, %s204
      %p216 = scmp.eq.s32.totalorder %s42, 1
      %p217 = por %p215, %p216
      %p219 = scmp.ne.s32.totalorder %s204, %s218
      %p220 = scmp.eq.s32.totalorder %s42, 0
      %p221 = por %p219, %p220
      %s223 = sadd.s32 %s222, 1
      %p226 = scmp.eq.s32.totalorder %s36, 1
      %p227 = scmp.ne.s32.totalorder %s222, %s224
      %p228 = scmp.eq.s32.totalorder %s36, 0
      %p229 = por %p227, %p228
      %p230 = scmp.ne.s32.totalorder %s222, %s224
      %p231 = scmp.eq.s32.totalorder %s41, 1
      %p232 = por %p230, %p231
      %p233 = scmp.ne.s32.totalorder %s224, %s225
      %p234 = scmp.eq.s32.totalorder %s41, 0
      %p235 = por %p233, %p234
      %p236 = scmp.ne.s32.totalorder %s224, %s225
      %p237 = scmp.eq.s32.totalorder %s42, 1
      %p238 = por %p236, %p237
      %p240 = scmp.ne.s32.totalorder %s225, %s239
      %p241 = scmp.eq.s32.totalorder %s42, 0
      %p242 = por %p240, %p241
      %s244 = sadd.s32 %s243, 1
      %p247 = scmp.eq.s32.totalorder %s36, 1
      %p248 = scmp.ne.s32.totalorder %s243, %s245
      %p249 = scmp.eq.s32.totalorder %s36, 0
      %p250 = por %p248, %p249
      %p251 = scmp.ne.s32.totalorder %s243, %s245
      %p252 = scmp.eq.s32.totalorder %s41, 1
      %p253 = por %p251, %p252
      %p254 = scmp.ne.s32.totalorder %s245, %s246
      %p255 = scmp.eq.s32.totalorder %s41, 0
      %p256 = por %p254, %p255
      %p257 = scmp.ne.s32.totalorder %s245, %s246
      %p258 = scmp.eq.s32.totalorder %s42, 1
      %p259 = por %p257, %p258
      %p261 = scmp.ne.s32.totalorder %s246, %s260
      %p262 = scmp.eq.s32.totalorder %s42, 0
      %p263 = por %p261, %p262
      %s265 = sadd.s32 %s264, 1
      %p268 = scmp.eq.s32.totalorder %s36, 1
      %p269 = scmp.ne.s32.totalorder %s264, %s266
      %p270 = scmp.eq.s32.totalorder %s36, 0
      %p271 = por %p269, %p270
      %p272 = scmp.ne.s32.totalorder %s264, %s266
      %p273 = scmp.eq.s32.totalorder %s41, 1
      %p274 = por %p272, %p273
      %p275 = scmp.ne.s32.totalorder %s266, %s267
      %p276 = scmp.eq.s32.totalorder %s41, 0
      %p277 = por %p275, %p276
      %p278 = scmp.ne.s32.totalorder %s266, %s267
      %p279 = scmp.eq.s32.totalorder %s42, 1
      %p280 = por %p278, %p279
      %p282 = scmp.ne.s32.totalorder %s267, %s281
      %p283 = scmp.eq.s32.totalorder %s42, 0
      %p284 = por %p282, %p283
      %s286 = sadd.s32 %s285, 1
      %p289 = scmp.eq.s32.totalorder %s36, 1
      %p290 = scmp.ne.s32.totalorder %s285, %s287
      %p291 = scmp.eq.s32.totalorder %s36, 0
      %p292 = por %p290, %p291
      %p293 = scmp.ne.s32.totalorder %s285, %s287
      %p294 = scmp.eq.s32.totalorder %s41, 1
      %p295 = por %p293, %p294
      %p296 = scmp.ne.s32.totalorder %s287, %s288
      %p297 = scmp.eq.s32.totalorder %s41, 0
      %p298 = por %p296, %p297
      %p299 = scmp.ne.s32.totalorder %s287, %s288
      %p300 = scmp.eq.s32.totalorder %s42, 1
      %p301 = por %p299, %p300
      %p303 = scmp.ne.s32.totalorder %s288, %s302
      %p304 = scmp.eq.s32.totalorder %s42, 0
      %p305 = por %p303, %p304
      %s307 = sadd.s32 %s306, 1
      %p310 = scmp.eq.s32.totalorder %s36, 1
      %p311 = scmp.ne.s32.totalorder %s306, %s308
      %p312 = scmp.eq.s32.totalorder %s36, 0
      %p313 = por %p311, %p312
      %p314 = scmp.ne.s32.totalorder %s306, %s308
      %p315 = scmp.eq.s32.totalorder %s41, 1
      %p316 = por %p314, %p315
      %p317 = scmp.ne.s32.totalorder %s308, %s309
      %p318 = scmp.eq.s32.totalorder %s41, 0
      %p319 = por %p317, %p318
      %p320 = scmp.ne.s32.totalorder %s308, %s309
      %p321 = scmp.eq.s32.totalorder %s42, 1
      %p322 = por %p320, %p321
      %p324 = scmp.ne.s32.totalorder %s309, %s323
      %p325 = scmp.eq.s32.totalorder %s42, 0
      %p326 = por %p324, %p325
      %s328 = sadd.s32 %s327, 1
      %p331 = scmp.eq.s32.totalorder %s36, 1
      %p332 = scmp.ne.s32.totalorder %s327, %s329
      %p333 = scmp.eq.s32.totalorder %s36, 0
      %p334 = por %p332, %p333
      %p335 = scmp.ne.s32.totalorder %s327, %s329
      %p336 = scmp.eq.s32.totalorder %s41, 1
      %p337 = por %p335, %p336
      %p338 = scmp.ne.s32.totalorder %s329, %s330
      %p339 = scmp.eq.s32.totalorder %s41, 0
      %p340 = por %p338, %p339
      %p341 = scmp.ne.s32.totalorder %s329, %s330
      %p342 = scmp.eq.s32.totalorder %s42, 1
      %p343 = por %p341, %p342
      %p345 = scmp.ne.s32.totalorder %s330, %s344
      %p346 = scmp.eq.s32.totalorder %s42, 0
      %p347 = por %p345, %p346
      %s349 = sadd.s32 %s348, 1
      %p352 = scmp.eq.s32.totalorder %s36, 1
      %p353 = scmp.ne.s32.totalorder %s348, %s350
      %p354 = scmp.eq.s32.totalorder %s36, 0
      %p355 = por %p353, %p354
      %p356 = scmp.ne.s32.totalorder %s348, %s350
      %p357 = scmp.eq.s32.totalorder %s41, 1
      %p358 = por %p356, %p357
      %p359 = scmp.ne.s32.totalorder %s350, %s351
      %p360 = scmp.eq.s32.totalorder %s41, 0
      %p361 = por %p359, %p360
      %p362 = scmp.ne.s32.totalorder %s350, %s351
      %p363 = scmp.eq.s32.totalorder %s42, 1
      %p364 = por %p362, %p363
      %p366 = scmp.ne.s32.totalorder %s351, %s365
      %p367 = scmp.eq.s32.totalorder %s42, 0
      %p368 = por %p366, %p367
      %s369 = ssub.s32 %s36, %s43
      %p370 = scmp.eq.s32.totalorder %s369, 0
      %s372 = sadd.s32 %s371, 1
      %s373 = scalar_select %p370, %s371, %s372
      %p376 = pneg %p370
      %p377 = scmp.eq.s32.totalorder %s36, 1
      %p378 = por %p376, %p377
      %p379 = scmp.ne.s32.totalorder %s371, %s374
      %p380 = scmp.eq.s32.totalorder %s36, 0
      %p381 = por %p379, %p380
      %p382 = scmp.ne.s32.totalorder %s371, %s374
      %p383 = scmp.eq.s32.totalorder %s41, 1
      %p384 = por %p382, %p383
      %p385 = scmp.ne.s32.totalorder %s374, %s375
      %p386 = scmp.eq.s32.totalorder %s41, 0
      %p387 = por %p385, %p386
      %p388 = scmp.ne.s32.totalorder %s374, %s375
      %p389 = scmp.eq.s32.totalorder %s42, 1
      %p390 = por %p388, %p389
      %p392 = scmp.ne.s32.totalorder %s375, %s391
      %p393 = scmp.eq.s32.totalorder %s42, 0
      %p394 = por %p392, %p393
      %p395 = scmp.le.s32.totalorder 1, %s36
      %p396 = scmp.lt.s32.totalorder %s36, 3
      %p397 = pnand %p395, %p396
      %p398 = pneg %p397
      // Predicated region
      $region9: #{_session_encoder_impl.1} parent=5 // pred_check
        _
      $region10: #{_session_encoder_impl.1} parent=5 // pred_check_branch
        %400 = sbr.rel (%p397) target = $region12
      $region11: #{_session_encoder_impl.1} parent=5 // pred_region
        %s401 = ssub.s32 %s36, 1
        // Predicated region
        $region13: #{_session_encoder_impl.1} parent=11 // pred_check
          %p402 = pneg %p109
        $region14: #{_session_encoder_impl.1} parent=11 // pred_check_branch
          %404 = sbr.rel (%p402) target = $region16
        $region15: #{_session_encoder_impl.1} parent=11 // pred_region
          %s406 = ssub.s32 128, 128
          %407 = vsyncadd [#allocation6], %s406
          %s409 = sshll.u32 [#allocation7], 4
          %s410 = int_to_ptr.vmem [resolvable:$true] %s409
          %412 = dma.hbm_to_vmem [thread:$0]  %s2, 128, %s410, [#allocation6]
        $region16: #{_session_encoder_impl.1} parent=11 // pred_fallthru
          _
        // Predicated region
        $region17: #{_session_encoder_impl.1} parent=11 // pred_check
          %p413 = pneg %p130
        $region18: #{_session_encoder_impl.1} parent=11 // pred_check_branch
          %415 = sbr.rel (%p413) target = $region20
        $region19: #{_session_encoder_impl.1} parent=11 // pred_region
          %s417 = ssub.s32 256, 256
          %418 = vsyncadd [#allocation9], %s417
          %s419 = sshll.u32 [#allocation8], 4
          %s420 = int_to_ptr.vmem [resolvable:$true] %s419
          %425 = dma.hbm_to_vmem [thread:$0]  %s3, 256, %s420, [#allocation9], 64, 64, 4
        $region20: #{_session_encoder_impl.1} parent=11 // pred_fallthru
          _
        // Predicated region
        $region21: #{_session_encoder_impl.1} parent=11 // pred_check
          %p426 = pneg %p151
        $region22: #{_session_encoder_impl.1} parent=11 // pred_check_branch
          %428 = sbr.rel (%p426) target = $region24
        $region23: #{_session_encoder_impl.1} parent=11 // pred_region
          %s430 = ssub.s32 16, 16
          %431 = vsyncadd [#allocation9], %s430
          %s433 = sshll.u32 [#allocation10], 4
          %s434 = int_to_ptr.vmem [resolvable:$true] %s433
          %436 = dma.hbm_to_vmem [thread:$0]  %s4, 16, %s434, [#allocation9]
        $region24: #{_session_encoder_impl.1} parent=11 // pred_fallthru
          _
        // Predicated region
        $region25: #{_session_encoder_impl.1} parent=11 // pred_check
          %p437 = pneg %p172
        $region26: #{_session_encoder_impl.1} parent=11 // pred_check_branch
          %439 = sbr.rel (%p437) target = $region28
        $region27: #{_session_encoder_impl.1} parent=11 // pred_region
          %s441 = ssub.s32 256, 256
          %442 = vsyncadd [#allocation12], %s441
          %s443 = sshll.u32 [#allocation11], 4
          %s444 = int_to_ptr.vmem [resolvable:$true] %s443
          %449 = dma.hbm_to_vmem [thread:$0]  %s5, 256, %s444, [#allocation12], 64, 64, 4
        $region28: #{_session_encoder_impl.1} parent=11 // pred_fallthru
          _
        // Predicated region
        $region29: #{_session_encoder_impl.1} parent=11 // pred_check
          %p450 = pneg %p193
        $region30: #{_session_encoder_impl.1} parent=11 // pred_check_branch
          %452 = sbr.rel (%p450) target = $region32
        $region31: #{_session_encoder_impl.1} parent=11 // pred_region
          %s454 = ssub.s32 16, 16
          %455 = vsyncadd [#allocation12], %s454
          %s457 = sshll.u32 [#allocation13], 4
          %s458 = int_to_ptr.vmem [resolvable:$true] %s457
          %460 = dma.hbm_to_vmem [thread:$0]  %s6, 16, %s458, [#allocation12]
        $region32: #{_session_encoder_impl.1} parent=11 // pred_fallthru
          _
        // Predicated region
        $region33: #{_session_encoder_impl.1} parent=11 // pred_check
          %p461 = pneg %p214
        $region34: #{_session_encoder_impl.1} parent=11 // pred_check_branch
          %463 = sbr.rel (%p461) target = $region36
        $region35: #{_session_encoder_impl.1} parent=11 // pred_region
          %s465 = ssub.s32 4096, 4096
          %466 = vsyncadd [#allocation15], %s465
          %s467 = sshll.u32 [#allocation14], 4
          %s468 = int_to_ptr.vmem [resolvable:$true] %s467
          %473 = dma.hbm_to_vmem [thread:$0]  %s7, 4096, %s468, [#allocation15], 1024, 1024, 64
        $region36: #{_session_encoder_impl.1} parent=11 // pred_fallthru
          _
        // Predicated region
        $region37: #{_session_encoder_impl.1} parent=11 // pred_check
          %p474 = pneg %p235
        $region38: #{_session_encoder_impl.1} parent=11 // pred_check_branch
          %476 = sbr.rel (%p474) target = $region40
        $region39: #{_session_encoder_impl.1} parent=11 // pred_region
          %s478 = ssub.s32 256, 256
          %479 = vsyncadd [#allocation15], %s478
          %s481 = sshll.u32 [#allocation16], 4
          %s482 = int_to_ptr.vmem [resolvable:$true] %s481
          %484 = dma.hbm_to_vmem [thread:$0]  %s8, 256, %s482, [#allocation15]
        $region40: #{_session_encoder_impl.1} parent=11 // pred_fallthru
          _
        // Predicated region
        $region41: #{_session_encoder_impl.1} parent=11 // pred_check
          %p485 = pneg %p256
        $region42: #{_session_encoder_impl.1} parent=11 // pred_check_branch
          %487 = sbr.rel (%p485) target = $region44
        $region43: #{_session_encoder_impl.1} parent=11 // pred_region
          %s489 = ssub.s32 16384, 16384
          %490 = vsyncadd [#allocation18], %s489
          %s491 = sshll.u32 [#allocation17], 4
          %s492 = int_to_ptr.vmem [resolvable:$true] %s491
          %497 = dma.hbm_to_vmem [thread:$0]  %s9, 16384, %s492, [#allocation18], 64, 64, 4
        $region44: #{_session_encoder_impl.1} parent=11 // pred_fallthru
          _
        // Predicated region
        $region45: #{_session_encoder_impl.1} parent=11 // pred_check
          %p498 = pneg %p277
        $region46: #{_session_encoder_impl.1} parent=11 // pred_check_branch
          %500 = sbr.rel (%p498) target = $region48
        $region47: #{_session_encoder_impl.1} parent=11 // pred_region
          %s502 = ssub.s32 16, 16
          %503 = vsyncadd [#allocation18], %s502
          %s505 = sshll.u32 [#allocation19], 4
          %s506 = int_to_ptr.vmem [resolvable:$true] %s505
          %508 = dma.hbm_to_vmem [thread:$0]  %s10, 16, %s506, [#allocation18]
        $region48: #{_session_encoder_impl.1} parent=11 // pred_fallthru
          _
        // Predicated region
        $region49: #{_session_encoder_impl.1} parent=11 // pred_check
          %p509 = pneg %p298
        $region50: #{_session_encoder_impl.1} parent=11 // pred_check_branch
          %511 = sbr.rel (%p509) target = $region52
        $region51: #{_session_encoder_impl.1} parent=11 // pred_region
          %s513 = ssub.s32 16, 16
          %514 = vsyncadd [#allocation21], %s513
          %s516 = sshll.u32 [#allocation20], 4
          %s517 = int_to_ptr.vmem [resolvable:$true] %s516
          %519 = dma.hbm_to_vmem [thread:$0]  %s11, 16, %s517, [#allocation21]
        $region52: #{_session_encoder_impl.1} parent=11 // pred_fallthru
          _
        // Predicated region
        $region53: #{_session_encoder_impl.1} parent=11 // pred_check
          %p520 = pneg %p319
        $region54: #{_session_encoder_impl.1} parent=11 // pred_check_branch
          %522 = sbr.rel (%p520) target = $region56
        $region55: #{_session_encoder_impl.1} parent=11 // pred_region
          %s524 = ssub.s32 16, 16
          %525 = vsyncadd [#allocation21], %s524
          %s527 = sshll.u32 [#allocation22], 4
          %s528 = int_to_ptr.vmem [resolvable:$true] %s527
          %530 = dma.hbm_to_vmem [thread:$0]  %s12, 16, %s528, [#allocation21]
        $region56: #{_session_encoder_impl.1} parent=11 // pred_fallthru
          _
        // Predicated region
        $region57: #{_session_encoder_impl.1} parent=11 // pred_check
          %p531 = pneg %p340
        $region58: #{_session_encoder_impl.1} parent=11 // pred_check_branch
          %533 = sbr.rel (%p531) target = $region60
        $region59: #{_session_encoder_impl.1} parent=11 // pred_region
          %s535 = ssub.s32 16, 16
          %536 = vsyncadd [#allocation24], %s535
          %s538 = sshll.u32 [#allocation23], 4
          %s539 = int_to_ptr.vmem [resolvable:$true] %s538
          %541 = dma.hbm_to_vmem [thread:$0]  %s13, 16, %s539, [#allocation24]
        $region60: #{_session_encoder_impl.1} parent=11 // pred_fallthru
          _
        // Predicated region
        $region61: #{_session_encoder_impl.1} parent=11 // pred_check
          %p542 = pneg %p361
        $region62: #{_session_encoder_impl.1} parent=11 // pred_check_branch
          %544 = sbr.rel (%p542) target = $region64
        $region63: #{_session_encoder_impl.1} parent=11 // pred_region
          %s546 = ssub.s32 16, 16
          %547 = vsyncadd [#allocation24], %s546
          %s549 = sshll.u32 [#allocation25], 4
          %s550 = int_to_ptr.vmem [resolvable:$true] %s549
          %552 = dma.hbm_to_vmem [thread:$0]  %s14, 16, %s550, [#allocation24]
        $region64: #{_session_encoder_impl.1} parent=11 // pred_fallthru
          _
      $region12: #{_session_encoder_impl.1} parent=5 // pred_fallthru
        _
      %p553 = scmp.lt.s32.totalorder %s36, 2
      // Predicated region
      $region65: #{_session_encoder_impl.1} parent=5 // pred_check
        %p554 = pneg %p553
      $region66: #{_session_encoder_impl.1} parent=5 // pred_check_branch
        %556 = sbr.rel (%p554) target = $region68
      $region67: #{_session_encoder_impl.1} parent=5 // pred_region
        // Predicated region
        $region69: #{_session_encoder_impl.1} parent=67 // pred_check
          %p557 = pneg %p56
        $region70: #{_session_encoder_impl.1} parent=67 // pred_check_branch
          %559 = sbr.rel (%p557) target = $region72
        $region71: #{_session_encoder_impl.1} parent=67 // pred_region
          %s560 = sand.u32 %s46, 1
          %s561 = scalar_lea.sflag [#allocation3], %s560
          %s562 = sand.u32 %s46, 1
          %s563 = smul.addr %s562, 8
          %s564 = scalar_lea.vmem [#allocation2], %s563
          %s566 = ssub.s32 128, 128
          %567 = vsyncadd %s561, %s566
          %s568 = smul.addr %s36, 128
          %s569 = scalar_lea.hbm %s0, %s568
          %s571 = sshll.u32 %s564, 4
          %s572 = int_to_ptr.vmem [resolvable:$true] %s571
          %574 = dma.hbm_to_vmem [thread:$0]  %s569, 128, %s572, %s561
        $region72: #{_session_encoder_impl.1} parent=67 // pred_fallthru
          _
        // Predicated region
        $region73: #{_session_encoder_impl.1} parent=67 // pred_check
          %p575 = pneg %p82
        $region74: #{_session_encoder_impl.1} parent=67 // pred_check_branch
          %577 = sbr.rel (%p575) target = $region76
        $region75: #{_session_encoder_impl.1} parent=67 // pred_region
          %s578 = sand.u32 %s36, 1
          %s579 = scalar_lea.sflag [#allocation6], %s578
          %s580 = sand.u32 %s72, 1
          %s581 = scalar_lea.vmem [#allocation5], %s580
          %s583 = ssub.s32 16, 16
          %584 = vsyncadd %s579, %s583
          %s585 = smul.addr %s36, 16
          %s586 = scalar_lea.hbm %s1, %s585
          %s588 = sshll.u32 %s581, 4
          %s589 = int_to_ptr.vmem [resolvable:$true] %s588
          %591 = dma.hbm_to_vmem [thread:$0]  %s586, 16, %s589, %s579
        $region76: #{_session_encoder_impl.1} parent=67 // pred_fallthru
          _
      $region68: #{_session_encoder_impl.1} parent=5 // pred_fallthru
        _
      %p592 = scmp.le.s32.totalorder 1, %s36
      %p593 = scmp.lt.s32.totalorder %s36, 3
      %p594 = pnand %p592, %p593
      %p595 = pneg %p594
      // Predicated region
      $region77: #{_session_encoder_impl.1} parent=5 // pred_check
        _
      $region78: #{_session_encoder_impl.1} parent=5 // pred_check_branch
        %597 = sbr.rel (%p594) target = $region80
      $region79: #{_session_encoder_impl.1} parent=5 // pred_region
        %s598 = ssub.s32 %s36, 1
        %s599 = sand.u32 %s49, 1
        %s600 = scalar_lea.sflag [#allocation3], %s599
        %s601 = sand.u32 %s49, 1
        %s602 = smul.addr %s601, 8
        %s603 = scalar_lea.vmem [#allocation2], %s602
        // Predicated region
        $region81: #{_session_encoder_impl.1} parent=79 // pred_check
          %p604 = pneg %p62
        $region82: #{_session_encoder_impl.1} parent=79 // pred_check_branch
          %606 = sbr.rel (%p604) target = $region84
        $region83: #{_session_encoder_impl.1} parent=79 // pred_region
          %607 = dma.done %s600, 128
        $region84: #{_session_encoder_impl.1} parent=79 // pred_fallthru
          _
        %s608 = sand.u32 %s41, 1
        %s609 = scalar_lea.sflag [#allocation6], %s608
        %s610 = sand.u32 %s75, 1
        %s611 = scalar_lea.vmem [#allocation5], %s610
        // Predicated region
        $region85: #{_session_encoder_impl.1} parent=79 // pred_check
          %p612 = pneg %p88
        $region86: #{_session_encoder_impl.1} parent=79 // pred_check_branch
          %614 = sbr.rel (%p612) target = $region88
        $region87: #{_session_encoder_impl.1} parent=79 // pred_region
          %615 = dma.done %s609, 16
        $region88: #{_session_encoder_impl.1} parent=79 // pred_fallthru
          _
        // Predicated region
        $region89: #{_session_encoder_impl.1} parent=79 // pred_check
          %p616 = pneg %p109
        $region90: #{_session_encoder_impl.1} parent=79 // pred_check_branch
          %618 = sbr.rel (%p616) target = $region92
        $region91: #{_session_encoder_impl.1} parent=79 // pred_region
          %619 = dma.done [#allocation6], 128
        $region92: #{_session_encoder_impl.1} parent=79 // pred_fallthru
          _
        // Predicated region
        $region93: #{_session_encoder_impl.1} parent=79 // pred_check
          %p620 = pneg %p130
        $region94: #{_session_encoder_impl.1} parent=79 // pred_check_branch
          %622 = sbr.rel (%p620) target = $region96
        $region95: #{_session_encoder_impl.1} parent=79 // pred_region
          %623 = dma.done [#allocation9], 256
        $region96: #{_session_encoder_impl.1} parent=79 // pred_fallthru
          _
        // Predicated region
        $region97: #{_session_encoder_impl.1} parent=79 // pred_check
          %p624 = pneg %p151
        $region98: #{_session_encoder_impl.1} parent=79 // pred_check_branch
          %626 = sbr.rel (%p624) target = $region100
        $region99: #{_session_encoder_impl.1} parent=79 // pred_region
          %627 = dma.done [#allocation9], 16
        $region100: #{_session_encoder_impl.1} parent=79 // pred_fallthru
          _
        // Predicated region
        $region101: #{_session_encoder_impl.1} parent=79 // pred_check
          %p628 = pneg %p172
        $region102: #{_session_encoder_impl.1} parent=79 // pred_check_branch
          %630 = sbr.rel (%p628) target = $region104
        $region103: #{_session_encoder_impl.1} parent=79 // pred_region
          %631 = dma.done [#allocation12], 256
        $region104: #{_session_encoder_impl.1} parent=79 // pred_fallthru
          _
        // Predicated region
        $region105: #{_session_encoder_impl.1} parent=79 // pred_check
          %p632 = pneg %p193
        $region106: #{_session_encoder_impl.1} parent=79 // pred_check_branch
          %634 = sbr.rel (%p632) target = $region108
        $region107: #{_session_encoder_impl.1} parent=79 // pred_region
          %635 = dma.done [#allocation12], 16
        $region108: #{_session_encoder_impl.1} parent=79 // pred_fallthru
          _
        // Predicated region
        $region109: #{_session_encoder_impl.1} parent=79 // pred_check
          %p636 = pneg %p214
        $region110: #{_session_encoder_impl.1} parent=79 // pred_check_branch
          %638 = sbr.rel (%p636) target = $region112
        $region111: #{_session_encoder_impl.1} parent=79 // pred_region
          %639 = dma.done [#allocation15], 4096
        $region112: #{_session_encoder_impl.1} parent=79 // pred_fallthru
          _
        // Predicated region
        $region113: #{_session_encoder_impl.1} parent=79 // pred_check
          %p640 = pneg %p235
        $region114: #{_session_encoder_impl.1} parent=79 // pred_check_branch
          %642 = sbr.rel (%p640) target = $region116
        $region115: #{_session_encoder_impl.1} parent=79 // pred_region
          %643 = dma.done [#allocation15], 256
        $region116: #{_session_encoder_impl.1} parent=79 // pred_fallthru
          _
        // Predicated region
        $region117: #{_session_encoder_impl.1} parent=79 // pred_check
          %p644 = pneg %p256
        $region118: #{_session_encoder_impl.1} parent=79 // pred_check_branch
          %646 = sbr.rel (%p644) target = $region120
        $region119: #{_session_encoder_impl.1} parent=79 // pred_region
          %647 = dma.done [#allocation18], 16384
        $region120: #{_session_encoder_impl.1} parent=79 // pred_fallthru
          _
        // Predicated region
        $region121: #{_session_encoder_impl.1} parent=79 // pred_check
          %p648 = pneg %p277
        $region122: #{_session_encoder_impl.1} parent=79 // pred_check_branch
          %650 = sbr.rel (%p648) target = $region124
        $region123: #{_session_encoder_impl.1} parent=79 // pred_region
          %651 = dma.done [#allocation18], 16
        $region124: #{_session_encoder_impl.1} parent=79 // pred_fallthru
          _
        // Predicated region
        $region125: #{_session_encoder_impl.1} parent=79 // pred_check
          %p652 = pneg %p298
        $region126: #{_session_encoder_impl.1} parent=79 // pred_check_branch
          %654 = sbr.rel (%p652) target = $region128
        $region127: #{_session_encoder_impl.1} parent=79 // pred_region
          %655 = dma.done [#allocation21], 16
        $region128: #{_session_encoder_impl.1} parent=79 // pred_fallthru
          _
        // Predicated region
        $region129: #{_session_encoder_impl.1} parent=79 // pred_check
          %p656 = pneg %p319
        $region130: #{_session_encoder_impl.1} parent=79 // pred_check_branch
          %658 = sbr.rel (%p656) target = $region132
        $region131: #{_session_encoder_impl.1} parent=79 // pred_region
          %659 = dma.done [#allocation21], 16
        $region132: #{_session_encoder_impl.1} parent=79 // pred_fallthru
          _
        // Predicated region
        $region133: #{_session_encoder_impl.1} parent=79 // pred_check
          %p660 = pneg %p340
        $region134: #{_session_encoder_impl.1} parent=79 // pred_check_branch
          %662 = sbr.rel (%p660) target = $region136
        $region135: #{_session_encoder_impl.1} parent=79 // pred_region
          %663 = dma.done [#allocation24], 16
        $region136: #{_session_encoder_impl.1} parent=79 // pred_fallthru
          _
        // Predicated region
        $region137: #{_session_encoder_impl.1} parent=79 // pred_check
          %p664 = pneg %p361
        $region138: #{_session_encoder_impl.1} parent=79 // pred_check_branch
          %666 = sbr.rel (%p664) target = $region140
        $region139: #{_session_encoder_impl.1} parent=79 // pred_region
          %667 = dma.done [#allocation24], 16
        $region140: #{_session_encoder_impl.1} parent=79 // pred_fallthru
          _
        %s668 = sand.u32 %s49, 1
        %s669 = scalar_lea.sflag [#allocation3], %s668
        %s670 = sand.u32 %s49, 1
        %s671 = smul.addr %s670, 8
        %s672 = scalar_lea.vmem [#allocation2], %s671
        %p673 = pneg %p62
        %p674 = pneg %p59
        %s675 = sand.u32 %s41, 1
        %s676 = scalar_lea.sflag [#allocation6], %s675
        %s677 = sand.u32 %s75, 1
        %s678 = scalar_lea.vmem [#allocation5], %s677
        %p679 = pneg %p88
        %p680 = pneg %p85
        %p681 = pneg %p109
        %p682 = pneg %p106
        %p683 = pneg %p130
        %p684 = pneg %p127
        %p685 = pneg %p151
        %p686 = pneg %p148
        %p687 = pneg %p172
        %p688 = pneg %p169
        %p689 = pneg %p193
        %p690 = pneg %p190
        %p691 = pneg %p214
        %p692 = pneg %p211
        %p693 = pneg %p235
        %p694 = pneg %p232
        %p695 = pneg %p256
        %p696 = pneg %p253
        %p697 = pneg %p277
        %p698 = pneg %p274
        %p699 = pneg %p298
        %p700 = pneg %p295
        %p701 = pneg %p319
        %p702 = pneg %p316
        %p703 = pneg %p340
        %p704 = pneg %p337
        %p705 = pneg %p361
        %p706 = pneg %p358
        %p707 = pneg %p387
        %p708 = pneg %p384
        %s709 = sand.u32 %s374, 1
        %s710 = scalar_lea.sflag [#allocation4], %s709
        %s711 = sand.u32 %s374, 1
        %s712 = smul.addr %s711, 8
        %s713 = scalar_lea.vmem [#allocation26], %s712
        %v715 = vld [vmem:[%s603] sm:$0xff]
        %v716 = vld [vmem:[#allocation7] sm:$0xff]
        %v717 = vld [vmem:[%s611] sm:$0x1]
        %v719 = vlaneseq
        %v720 = vshrl.u32 %v719, 7
        %v721 = vsub.s32 0, %v720
        %v722 = vrot.slane %v717, %v721
        %v724 = vadd.f32 %v716, %v722
        %v725 = vpack.c.bf16 %v715, %v715
        %v726 = vld [vmem:[#allocation8] sm:$0xf]
        %v727 = vld [vmem:[#allocation8 + $0x4] sm:$0xf]
        %v728 = vld [vmem:[#allocation8 + $0x8] sm:$0xf]
        %v729 = vld [vmem:[#allocation8 + $0xc] sm:$0xf]
        %v730 = vld [vmem:[#allocation10] sm:$0x1]
        %v732 = vlaneseq
        %v733 = vshrl.u32 %v732, 7
        %v734 = vsub.s32 0, %v733
        %v735 = vrot.slane %v730, %v734
        %v741 = vunpack.c.l.b16 %v726
        %v742 = vunpack.c.l.b16 %v727
        %v743 = vunpack.c.l.b16 %v728
        %v744 = vunpack.c.l.b16 %v729
        %v745 = vpack.c.b16 %v742, %v741
        %v746 = vpack.c.b16 %v744, %v743
        %vm749 = vcmask 261120
        %v751 = vsel %vm749, %v725, 0
        %753 = vmatprep.subr.bf16.mxu0 0
        %754 = vmatpush1.bf16.msra.mxu0 %v745
        %755 = vmatprep.subr.bf16.mxu0 0
        %756 = vmatpush1.bf16.msra.mxu0 %v746
        %757 = vmatprep.subr.bf16.mxu0 0
        %758 = vmatpush1.bf16.msra.mxu0 0
        %759 = vmatprep.subr.bf16.mxu0 0
        %760 = vmatpush1.bf16.msra.mxu0 0
        %761 = vmatprep.subr.bf16.mxu0 0
        %762 = vmatpush1.bf16.msra.mxu0 0
        %763 = vmatprep.subr.bf16.mxu0 0
        %764 = vmatpush1.bf16.msra.mxu0 0
        %765 = vmatprep.subr.bf16.mxu0 0
        %766 = vmatpush1.bf16.msra.mxu0 0
        %767 = vmatprep.subr.bf16.mxu0 0
        %768 = vmatpush1.bf16.msra.mxu0 0
        %769 = vmatprep.subr.bf16.mxu0 0
        %770 = vmatpush1.bf16.msra.mxu0 0
        %771 = vmatprep.subr.bf16.mxu0 0
        %772 = vmatpush1.bf16.msra.mxu0 0
        %773 = vmatprep.subr.bf16.mxu0 0
        %774 = vmatpush1.bf16.msra.mxu0 0
        %775 = vmatprep.subr.bf16.mxu0 0
        %776 = vmatpush1.bf16.msra.mxu0 0
        %777 = vmatprep.subr.bf16.mxu0 0
        %778 = vmatpush1.bf16.msra.mxu0 0
        %779 = vmatprep.subr.bf16.mxu0 0
        %780 = vmatpush1.bf16.msra.mxu0 0
        %781 = vmatprep.subr.bf16.mxu0 0
        %782 = vmatpush1.bf16.msra.mxu0 0
        %783 = vmatprep.subr.bf16.mxu0 0
        %784 = vmatpush1.bf16.msra.mxu0 0
        %785 = vmatprep.mubr.bf16.mxu0 0
        %786 = vmatmul.mubr.bf16.gmra.mrb[0].mxu0 %v751
        %v787 = vpop.f32.mrb[0].mxu0
        %v788 = vadd.f32 %v735, %v787
        %v789 = vpop.f32.mrb[0].mxu0
        %v790 = vpop.f32.mrb[0].mxu0
        %v791 = vpop.f32.mrb[0].mxu0
        %792 = vdwg.mxu0
        %v793 = vpack.c.bf16 %v788, %v788
        %795 = vrot.lane.b32.xlu0 %v793, 96
        %v796 = vpop.permute.xlu0 %795
        %vm797 = vcmask 64512
        %v799 = vsel %vm797, %v793, 0
        %v802 = vsel %vm797, %v796, 0
        %804 = vmatprep.subr.bf16.mxu0 0
        %805 = vmatpush1.bf16.xpose.msra.mxu0 %v802
        %806 = vmatprep.subr.bf16.mxu0 0
        %807 = vmatpush1.bf16.xpose.msra.mxu0 0
        %808 = vmatprep.subr.bf16.mxu0 0
        %809 = vmatpush1.bf16.xpose.msra.mxu0 0
        %810 = vmatprep.subr.bf16.mxu0 0
        %811 = vmatpush1.bf16.xpose.msra.mxu0 0
        %812 = vmatprep.subr.bf16.mxu0 0
        %813 = vmatpush1.bf16.xpose.msra.mxu0 0
        %814 = vmatprep.subr.bf16.mxu0 0
        %815 = vmatpush1.bf16.xpose.msra.mxu0 0
        %816 = vmatprep.subr.bf16.mxu0 0
        %817 = vmatpush1.bf16.xpose.msra.mxu0 0
        %818 = vmatprep.subr.bf16.mxu0 0
        %819 = vmatpush1.bf16.xpose.msra.mxu0 0
        %820 = vmatprep.subr.bf16.mxu0 0
        %821 = vmatpush1.bf16.xpose.msra.mxu0 0
        %822 = vmatprep.subr.bf16.mxu0 0
        %823 = vmatpush1.bf16.xpose.msra.mxu0 0
        %824 = vmatprep.subr.bf16.mxu0 0
        %825 = vmatpush1.bf16.xpose.msra.mxu0 0
        %826 = vmatprep.subr.bf16.mxu0 0
        %827 = vmatpush1.bf16.xpose.msra.mxu0 0
        %828 = vmatprep.subr.bf16.mxu0 0
        %829 = vmatpush1.bf16.xpose.msra.mxu0 0
        %830 = vmatprep.subr.bf16.mxu0 0
        %831 = vmatpush1.bf16.xpose.msra.mxu0 0
        %832 = vmatprep.subr.bf16.mxu0 0
        %833 = vmatpush1.bf16.xpose.msra.mxu0 0
        %834 = vmatprep.subr.bf16.mxu0 0
        %835 = vmatpush1.bf16.xpose.msra.mxu0 0
        %836 = vmatprep.mubr.bf16.mxu0 0
        %837 = vmatmul.mubr.bf16.gmra.mrb[0].mxu0 %v799
        %v838 = vpop.f32.mrb[0].mxu0
        %v839 = vadd.f32 %v724, %v838
        %v840 = vpop.f32.mrb[0].mxu0
        %v841 = vpop.f32.mrb[0].mxu0
        %v842 = vpop.f32.mrb[0].mxu0
        %843 = vdwg.mxu0
        %v844 = vsel %vm797, %v839, -inf
        %845 = vmax.xlane.f32.xlu0 %v844
        %v846 = vpop.xlane.xlu0 %845
        %v847 = vsub.f32 %v839, %v846
        %v848 = vmul.f32 %v847, 1.442695
        %v849 = vpow.pop %v848
        %v850 = vsel %vm797, %v849, 0.0
        %851 = vadd.xlane.f32.xlu0 %v850
        %v852 = vpop.xlane.xlu0 %851
        %v853 = vrcp.pop %v852
        %v854 = vmul.f32 %v849, %v853
        %v855 = vpack.c.bf16 %v854, %v854
        %856 = vrot.lane.b32.xlu0 %v793, 64
        %v857 = vpop.permute.xlu0 %856
        %v859 = vsel %vm797, %v855, 0
        %vm861 = vcmask 1043456
        %v863 = vsel %vm861, %v857, 0
        %865 = vmatprep.subr.bf16.mxu0 0
        %866 = vmatpush1.bf16.msra.mxu0 %v863
        %867 = vmatprep.subr.bf16.mxu0 0
        %868 = vmatpush1.bf16.msra.mxu0 0
        %869 = vmatprep.subr.bf16.mxu0 0
        %870 = vmatpush1.bf16.msra.mxu0 0
        %871 = vmatprep.subr.bf16.mxu0 0
        %872 = vmatpush1.bf16.msra.mxu0 0
        %873 = vmatprep.subr.bf16.mxu0 0
        %874 = vmatpush1.bf16.msra.mxu0 0
        %875 = vmatprep.subr.bf16.mxu0 0
        %876 = vmatpush1.bf16.msra.mxu0 0
        %877 = vmatprep.subr.bf16.mxu0 0
        %878 = vmatpush1.bf16.msra.mxu0 0
        %879 = vmatprep.subr.bf16.mxu0 0
        %880 = vmatpush1.bf16.msra.mxu0 0
        %881 = vmatprep.subr.bf16.mxu0 0
        %882 = vmatpush1.bf16.msra.mxu0 0
        %883 = vmatprep.subr.bf16.mxu0 0
        %884 = vmatpush1.bf16.msra.mxu0 0
        %885 = vmatprep.subr.bf16.mxu0 0
        %886 = vmatpush1.bf16.msra.mxu0 0
        %887 = vmatprep.subr.bf16.mxu0 0
        %888 = vmatpush1.bf16.msra.mxu0 0
        %889 = vmatprep.subr.bf16.mxu0 0
        %890 = vmatpush1.bf16.msra.mxu0 0
        %891 = vmatprep.subr.bf16.mxu0 0
        %892 = vmatpush1.bf16.msra.mxu0 0
        %893 = vmatprep.subr.bf16.mxu0 0
        %894 = vmatpush1.bf16.msra.mxu0 0
        %895 = vmatprep.subr.bf16.mxu0 0
        %896 = vmatpush1.bf16.msra.mxu0 0
        %897 = vmatprep.mubr.bf16.mxu0 0
        %898 = vmatmul.mubr.bf16.gmra.mrb[0].mxu0 %v859
        %v899 = vpop.f32.mrb[0].mxu0
        %v900 = vadd.f32 0.0, %v899
        %v901 = vpop.f32.mrb[0].mxu0
        %v902 = vpop.f32.mrb[0].mxu0
        %v903 = vpop.f32.mrb[0].mxu0
        %904 = vdwg.mxu0
        %v905 = vpack.c.bf16 %v900, %v900
        %v906 = vld [vmem:[#allocation11] sm:$0xf]
        %907 = vrot.lane.b32.xlu0 %v793, 120
        %v908 = vpop.permute.xlu0 %907
        %909 = vrot.lane.b32.xlu0 %v793, 88
        %v910 = vpop.permute.xlu0 %909
        %v912 = vsel %vm797, %v908, 0
        %v915 = vsel %vm797, %v910, 0
        %917 = vmatprep.subr.bf16.mxu0 0
        %918 = vmatpush1.bf16.xpose.msra.mxu0 %v915
        %919 = vmatprep.subr.bf16.mxu0 0
        %920 = vmatpush1.bf16.xpose.msra.mxu0 0
        %921 = vmatprep.subr.bf16.mxu0 0
        %922 = vmatpush1.bf16.xpose.msra.mxu0 0
        %923 = vmatprep.subr.bf16.mxu0 0
        %924 = vmatpush1.bf16.xpose.msra.mxu0 0
        %925 = vmatprep.subr.bf16.mxu0 0
        %926 = vmatpush1.bf16.xpose.msra.mxu0 0
        %927 = vmatprep.subr.bf16.mxu0 0
        %928 = vmatpush1.bf16.xpose.msra.mxu0 0
        %929 = vmatprep.subr.bf16.mxu0 0
        %930 = vmatpush1.bf16.xpose.msra.mxu0 0
        %931 = vmatprep.subr.bf16.mxu0 0
        %932 = vmatpush1.bf16.xpose.msra.mxu0 0
        %933 = vmatprep.subr.bf16.mxu0 0
        %934 = vmatpush1.bf16.xpose.msra.mxu0 0
        %935 = vmatprep.subr.bf16.mxu0 0
        %936 = vmatpush1.bf16.xpose.msra.mxu0 0
        %937 = vmatprep.subr.bf16.mxu0 0
        %938 = vmatpush1.bf16.xpose.msra.mxu0 0
        %939 = vmatprep.subr.bf16.mxu0 0
        %940 = vmatpush1.bf16.xpose.msra.mxu0 0
        %941 = vmatprep.subr.bf16.mxu0 0
        %942 = vmatpush1.bf16.xpose.msra.mxu0 0
        %943 = vmatprep.subr.bf16.mxu0 0
        %944 = vmatpush1.bf16.xpose.msra.mxu0 0
        %945 = vmatprep.subr.bf16.mxu0 0
        %946 = vmatpush1.bf16.xpose.msra.mxu0 0
        %947 = vmatprep.subr.bf16.mxu0 0
        %948 = vmatpush1.bf16.xpose.msra.mxu0 0
        %949 = vmatprep.mubr.bf16.mxu0 0
        %950 = vmatmul.mubr.bf16.gmra.mrb[0].mxu0 %v912
        %v951 = vpop.f32.mrb[0].mxu0
        %v952 = vadd.f32 %v724, %v951
        %v953 = vpop.f32.mrb[0].mxu0
        %v954 = vpop.f32.mrb[0].mxu0
        %v955 = vpop.f32.mrb[0].mxu0
        %956 = vdwg.mxu0
        %v957 = vsel %vm797, %v952, -inf
        %958 = vmax.xlane.f32.xlu0 %v957
        %v959 = vpop.xlane.xlu0 %958
        %v960 = vsub.f32 %v952, %v959
        %v961 = vmul.f32 %v960, 1.442695
        %v962 = vpow.pop %v961
        %v963 = vsel %vm797, %v962, 0.0
        %964 = vadd.xlane.f32.xlu0 %v963
        %v965 = vpop.xlane.xlu0 %964
        %v966 = vrcp.pop %v965
        %v967 = vmul.f32 %v962, %v966
        %v968 = vpack.c.bf16 %v967, %v967
        %969 = vrot.lane.b32.xlu0 %v793, 56
        %v970 = vpop.permute.xlu0 %969
        %v972 = vsel %vm797, %v968, 0
        %v975 = vsel %vm861, %v970, 0
        %977 = vmatprep.subr.bf16.mxu0 0
        %978 = vmatpush1.bf16.msra.mxu0 %v975
        %979 = vmatprep.subr.bf16.mxu0 0
        %980 = vmatpush1.bf16.msra.mxu0 0
        %981 = vmatprep.subr.bf16.mxu0 0
        %982 = vmatpush1.bf16.msra.mxu0 0
        %983 = vmatprep.subr.bf16.mxu0 0
        %984 = vmatpush1.bf16.msra.mxu0 0
        %985 = vmatprep.subr.bf16.mxu0 0
        %986 = vmatpush1.bf16.msra.mxu0 0
        %987 = vmatprep.subr.bf16.mxu0 0
        %988 = vmatpush1.bf16.msra.mxu0 0
        %989 = vmatprep.subr.bf16.mxu0 0
        %990 = vmatpush1.bf16.msra.mxu0 0
        %991 = vmatprep.subr.bf16.mxu0 0
        %992 = vmatpush1.bf16.msra.mxu0 0
        %993 = vmatprep.subr.bf16.mxu0 0
        %994 = vmatpush1.bf16.msra.mxu0 0
        %995 = vmatprep.subr.bf16.mxu0 0
        %996 = vmatpush1.bf16.msra.mxu0 0
        %997 = vmatprep.subr.bf16.mxu0 0
        %998 = vmatpush1.bf16.msra.mxu0 0
        %999 = vmatprep.subr.bf16.mxu0 0
        %1000 = vmatpush1.bf16.msra.mxu0 0
        %1001 = vmatprep.subr.bf16.mxu0 0
        %1002 = vmatpush1.bf16.msra.mxu0 0
        %1003 = vmatprep.subr.bf16.mxu0 0
        %1004 = vmatpush1.bf16.msra.mxu0 0
        %1005 = vmatprep.subr.bf16.mxu0 0
        %1006 = vmatpush1.bf16.msra.mxu0 0
        %1007 = vmatprep.subr.bf16.mxu0 0
        %1008 = vmatpush1.bf16.msra.mxu0 0
        %1009 = vmatprep.mubr.bf16.mxu0 0
        %1010 = vmatmul.mubr.bf16.gmra.mrb[0].mxu0 %v972
        %v1011 = vpop.f32.mrb[0].mxu0
        %v1012 = vadd.f32 0.0, %v1011
        %v1013 = vpop.f32.mrb[0].mxu0
        %v1014 = vpop.f32.mrb[0].mxu0
        %v1015 = vpop.f32.mrb[0].mxu0
        %1016 = vdwg.mxu0
        %v1017 = vpack.c.bf16 %v1012, %v1012
        %s1018 = scalar_lea.vmem [#allocation11], 4
        %v1019 = vld [vmem:[%s1018] sm:$0xf]
        %v1021 = vsel %vm797, %v1017, 0
        %v1024 = vsel %vm861, %v1019, 0
        %1026 = vmatprep.subr.bf16.mxu0 0
        %1027 = vmatpush1.bf16.msra.mxu0 %v1024
        %1028 = vmatprep.subr.bf16.mxu0 0
        %1029 = vmatpush1.bf16.msra.mxu0 0
        %1030 = vmatprep.subr.bf16.mxu0 0
        %1031 = vmatpush1.bf16.msra.mxu0 0
        %1032 = vmatprep.subr.bf16.mxu0 0
        %1033 = vmatpush1.bf16.msra.mxu0 0
        %1034 = vmatprep.subr.bf16.mxu0 0
        %1035 = vmatpush1.bf16.msra.mxu0 0
        %1036 = vmatprep.subr.bf16.mxu0 0
        %1037 = vmatpush1.bf16.msra.mxu0 0
        %1038 = vmatprep.subr.bf16.mxu0 0
        %1039 = vmatpush1.bf16.msra.mxu0 0
        %1040 = vmatprep.subr.bf16.mxu0 0
        %1041 = vmatpush1.bf16.msra.mxu0 0
        %1042 = vmatprep.subr.bf16.mxu0 0
        %1043 = vmatpush1.bf16.msra.mxu0 0
        %1044 = vmatprep.subr.bf16.mxu0 0
        %1045 = vmatpush1.bf16.msra.mxu0 0
        %1046 = vmatprep.subr.bf16.mxu0 0
        %1047 = vmatpush1.bf16.msra.mxu0 0
        %1048 = vmatprep.subr.bf16.mxu0 0
        %1049 = vmatpush1.bf16.msra.mxu0 0
        %1050 = vmatprep.subr.bf16.mxu0 0
        %1051 = vmatpush1.bf16.msra.mxu0 0
        %1052 = vmatprep.subr.bf16.mxu0 0
        %1053 = vmatpush1.bf16.msra.mxu0 0
        %1054 = vmatprep.subr.bf16.mxu0 0
        %1055 = vmatpush1.bf16.msra.mxu0 0
        %1056 = vmatprep.subr.bf16.mxu0 0
        %1057 = vmatpush1.bf16.msra.mxu0 0
        %1058 = vmatprep.mubr.bf16.mxu0 0
        %1059 = vmatmul.mubr.bf16.gmra.mrb[0].mxu0 %v1021
        %v1060 = vpop.f32.mrb[0].mxu0
        %v1061 = vadd.f32 0.0, %v1060
        %v1062 = vpop.f32.mrb[0].mxu0
        %v1063 = vpop.f32.mrb[0].mxu0
        %v1064 = vpop.f32.mrb[0].mxu0
        %1065 = vdwg.mxu0
        %v1067 = vsel %vm797, %v905, 0
        %v1070 = vsel %vm861, %v906, 0
        %1072 = vmatprep.subr.bf16.mxu0 0
        %1073 = vmatpush1.bf16.msra.mxu0 %v1070
        %1074 = vmatprep.subr.bf16.mxu0 0
        %1075 = vmatpush1.bf16.msra.mxu0 0
        %1076 = vmatprep.subr.bf16.mxu0 0
        %1077 = vmatpush1.bf16.msra.mxu0 0
        %1078 = vmatprep.subr.bf16.mxu0 0
        %1079 = vmatpush1.bf16.msra.mxu0 0
        %1080 = vmatprep.subr.bf16.mxu0 0
        %1081 = vmatpush1.bf16.msra.mxu0 0
        %1082 = vmatprep.subr.bf16.mxu0 0
        %1083 = vmatpush1.bf16.msra.mxu0 0
        %1084 = vmatprep.subr.bf16.mxu0 0
        %1085 = vmatpush1.bf16.msra.mxu0 0
        %1086 = vmatprep.subr.bf16.mxu0 0
        %1087 = vmatpush1.bf16.msra.mxu0 0
        %1088 = vmatprep.subr.bf16.mxu0 0
        %1089 = vmatpush1.bf16.msra.mxu0 0
        %1090 = vmatprep.subr.bf16.mxu0 0
        %1091 = vmatpush1.bf16.msra.mxu0 0
        %1092 = vmatprep.subr.bf16.mxu0 0
        %1093 = vmatpush1.bf16.msra.mxu0 0
        %1094 = vmatprep.subr.bf16.mxu0 0
        %1095 = vmatpush1.bf16.msra.mxu0 0
        %1096 = vmatprep.subr.bf16.mxu0 0
        %1097 = vmatpush1.bf16.msra.mxu0 0
        %1098 = vmatprep.subr.bf16.mxu0 0
        %1099 = vmatpush1.bf16.msra.mxu0 0
        %1100 = vmatprep.subr.bf16.mxu0 0
        %1101 = vmatpush1.bf16.msra.mxu0 0
        %1102 = vmatprep.subr.bf16.mxu0 0
        %1103 = vmatpush1.bf16.msra.mxu0 0
        %1104 = vmatprep.mubr.bf16.mxu0 0
        %1105 = vmatmul.mubr.bf16.gmra.mrb[0].mxu0 %v1067
        %v1106 = vpop.f32.mrb[0].mxu0
        %v1107 = vadd.f32 %v1061, %v1106
        %v1108 = vpop.f32.mrb[0].mxu0
        %v1109 = vpop.f32.mrb[0].mxu0
        %v1110 = vpop.f32.mrb[0].mxu0
        %1111 = vdwg.mxu0
        %1112 = vrot.lane.b32.xlu0 %v793, 112
        %v1113 = vpop.permute.xlu0 %1112
        %1114 = vrot.lane.b32.xlu0 %v793, 80
        %v1115 = vpop.permute.xlu0 %1114
        %v1117 = vsel %vm797, %v1113, 0
        %v1120 = vsel %vm797, %v1115, 0
        %1122 = vmatprep.subr.bf16.mxu0 0
        %1123 = vmatpush1.bf16.xpose.msra.mxu0 %v1120
        %1124 = vmatprep.subr.bf16.mxu0 0
        %1125 = vmatpush1.bf16.xpose.msra.mxu0 0
        %1126 = vmatprep.subr.bf16.mxu0 0
        %1127 = vmatpush1.bf16.xpose.msra.mxu0 0
        %1128 = vmatprep.subr.bf16.mxu0 0
        %1129 = vmatpush1.bf16.xpose.msra.mxu0 0
        %1130 = vmatprep.subr.bf16.mxu0 0
        %1131 = vmatpush1.bf16.xpose.msra.mxu0 0
        %1132 = vmatprep.subr.bf16.mxu0 0
        %1133 = vmatpush1.bf16.xpose.msra.mxu0 0
        %1134 = vmatprep.subr.bf16.mxu0 0
        %1135 = vmatpush1.bf16.xpose.msra.mxu0 0
        %1136 = vmatprep.subr.bf16.mxu0 0
        %1137 = vmatpush1.bf16.xpose.msra.mxu0 0
        %1138 = vmatprep.subr.bf16.mxu0 0
        %1139 = vmatpush1.bf16.xpose.msra.mxu0 0
        %1140 = vmatprep.subr.bf16.mxu0 0
        %1141 = vmatpush1.bf16.xpose.msra.mxu0 0
        %1142 = vmatprep.subr.bf16.mxu0 0
        %1143 = vmatpush1.bf16.xpose.msra.mxu0 0
        %1144 = vmatprep.subr.bf16.mxu0 0
        %1145 = vmatpush1.bf16.xpose.msra.mxu0 0
        %1146 = vmatprep.subr.bf16.mxu0 0
        %1147 = vmatpush1.bf16.xpose.msra.mxu0 0
        %1148 = vmatprep.subr.bf16.mxu0 0
        %1149 = vmatpush1.bf16.xpose.msra.mxu0 0
        %1150 = vmatprep.subr.bf16.mxu0 0
        %1151 = vmatpush1.bf16.xpose.msra.mxu0 0
        %1152 = vmatprep.subr.bf16.mxu0 0
        %1153 = vmatpush1.bf16.xpose.msra.mxu0 0
        %1154 = vmatprep.mubr.bf16.mxu0 0
        %1155 = vmatmul.mubr.bf16.gmra.mrb[0].mxu0 %v1117
        %v1156 = vpop.f32.mrb[0].mxu0
        %v1157 = vadd.f32 %v724, %v1156
        %v1158 = vpop.f32.mrb[0].mxu0
        %v1159 = vpop.f32.mrb[0].mxu0
        %v1160 = vpop.f32.mrb[0].mxu0
        %1161 = vdwg.mxu0
        %v1162 = vsel %vm797, %v1157, -inf
        %1163 = vmax.xlane.f32.xlu0 %v1162
        %v1164 = vpop.xlane.xlu0 %1163
        %v1165 = vsub.f32 %v1157, %v1164
        %v1166 = vmul.f32 %v1165, 1.442695
        %v1167 = vpow.pop %v1166
        %v1168 = vsel %vm797, %v1167, 0.0
        %1169 = vadd.xlane.f32.xlu0 %v1168
        %v1170 = vpop.xlane.xlu0 %1169
        %v1171 = vrcp.pop %v1170
        %v1172 = vmul.f32 %v1167, %v1171
        %v1173 = vpack.c.bf16 %v1172, %v1172
        %1174 = vrot.lane.b32.xlu0 %v793, 48
        %v1175 = vpop.permute.xlu0 %1174
        %v1177 = vsel %vm797, %v1173, 0
        %v1180 = vsel %vm861, %v1175, 0
        %1182 = vmatprep.subr.bf16.mxu0 0
        %1183 = vmatpush1.bf16.msra.mxu0 %v1180
        %1184 = vmatprep.subr.bf16.mxu0 0
        %1185 = vmatpush1.bf16.msra.mxu0 0
        %1186 = vmatprep.subr.bf16.mxu0 0
        %1187 = vmatpush1.bf16.msra.mxu0 0
        %1188 = vmatprep.subr.bf16.mxu0 0
        %1189 = vmatpush1.bf16.msra.mxu0 0
        %1190 = vmatprep.subr.bf16.mxu0 0
        %1191 = vmatpush1.bf16.msra.mxu0 0
        %1192 = vmatprep.subr.bf16.mxu0 0
        %1193 = vmatpush1.bf16.msra.mxu0 0
        %1194 = vmatprep.subr.bf16.mxu0 0
        %1195 = vmatpush1.bf16.msra.mxu0 0
        %1196 = vmatprep.subr.bf16.mxu0 0
        %1197 = vmatpush1.bf16.msra.mxu0 0
        %1198 = vmatprep.subr.bf16.mxu0 0
        %1199 = vmatpush1.bf16.msra.mxu0 0
        %1200 = vmatprep.subr.bf16.mxu0 0
        %1201 = vmatpush1.bf16.msra.mxu0 0
        %1202 = vmatprep.subr.bf16.mxu0 0
        %1203 = vmatpush1.bf16.msra.mxu0 0
        %1204 = vmatprep.subr.bf16.mxu0 0
        %1205 = vmatpush1.bf16.msra.mxu0 0
        %1206 = vmatprep.subr.bf16.mxu0 0
        %1207 = vmatpush1.bf16.msra.mxu0 0
        %1208 = vmatprep.subr.bf16.mxu0 0
        %1209 = vmatpush1.bf16.msra.mxu0 0
        %1210 = vmatprep.subr.bf16.mxu0 0
        %1211 = vmatpush1.bf16.msra.mxu0 0
        %1212 = vmatprep.subr.bf16.mxu0 0
        %1213 = vmatpush1.bf16.msra.mxu0 0
        %1214 = vmatprep.mubr.bf16.mxu0 0
        %1215 = vmatmul.mubr.bf16.gmra.mrb[0].mxu0 %v1177
        %v1216 = vpop.f32.mrb[0].mxu0
        %v1217 = vadd.f32 0.0, %v1216
        %v1218 = vpop.f32.mrb[0].mxu0
        %v1219 = vpop.f32.mrb[0].mxu0
        %v1220 = vpop.f32.mrb[0].mxu0
        %1221 = vdwg.mxu0
        %v1222 = vpack.c.bf16 %v1217, %v1217
        %s1223 = scalar_lea.vmem [#allocation11], 8
        %v1224 = vld [vmem:[%s1223] sm:$0xf]
        %v1226 = vsel %vm797, %v1222, 0
        %v1229 = vsel %vm861, %v1224, 0
        %1231 = vmatprep.subr.bf16.mxu0 0
        %1232 = vmatpush1.bf16.msra.mxu0 %v1229
        %1233 = vmatprep.subr.bf16.mxu0 0
        %1234 = vmatpush1.bf16.msra.mxu0 0
        %1235 = vmatprep.subr.bf16.mxu0 0
        %1236 = vmatpush1.bf16.msra.mxu0 0
        %1237 = vmatprep.subr.bf16.mxu0 0
        %1238 = vmatpush1.bf16.msra.mxu0 0
        %1239 = vmatprep.subr.bf16.mxu0 0
        %1240 = vmatpush1.bf16.msra.mxu0 0
        %1241 = vmatprep.subr.bf16.mxu0 0
        %1242 = vmatpush1.bf16.msra.mxu0 0
        %1243 = vmatprep.subr.bf16.mxu0 0
        %1244 = vmatpush1.bf16.msra.mxu0 0
        %1245 = vmatprep.subr.bf16.mxu0 0
        %1246 = vmatpush1.bf16.msra.mxu0 0
        %1247 = vmatprep.subr.bf16.mxu0 0
        %1248 = vmatpush1.bf16.msra.mxu0 0
        %1249 = vmatprep.subr.bf16.mxu0 0
        %1250 = vmatpush1.bf16.msra.mxu0 0
        %1251 = vmatprep.subr.bf16.mxu0 0
        %1252 = vmatpush1.bf16.msra.mxu0 0
        %1253 = vmatprep.subr.bf16.mxu0 0
        %1254 = vmatpush1.bf16.msra.mxu0 0
        %1255 = vmatprep.subr.bf16.mxu0 0
        %1256 = vmatpush1.bf16.msra.mxu0 0
        %1257 = vmatprep.subr.bf16.mxu0 0
        %1258 = vmatpush1.bf16.msra.mxu0 0
        %1259 = vmatprep.subr.bf16.mxu0 0
        %1260 = vmatpush1.bf16.msra.mxu0 0
        %1261 = vmatprep.subr.bf16.mxu0 0
        %1262 = vmatpush1.bf16.msra.mxu0 0
        %1263 = vmatprep.mubr.bf16.mxu0 0
        %1264 = vmatmul.mubr.bf16.gmra.mrb[0].mxu0 %v1226
        %v1265 = vpop.f32.mrb[0].mxu0
        %v1266 = vadd.f32 0.0, %v1265
        %v1267 = vpop.f32.mrb[0].mxu0
        %v1268 = vpop.f32.mrb[0].mxu0
        %v1269 = vpop.f32.mrb[0].mxu0
        %1270 = vdwg.mxu0
        %v1271 = vadd.f32 %v1107, %v1266
        %1272 = vrot.lane.b32.xlu0 %v793, 104
        %v1273 = vpop.permute.xlu0 %1272
        %1274 = vrot.lane.b32.xlu0 %v793, 72
        %v1275 = vpop.permute.xlu0 %1274
        %v1277 = vsel %vm797, %v1273, 0
        %v1280 = vsel %vm797, %v1275, 0
        %1282 = vmatprep.subr.bf16.mxu0 0
        %1283 = vmatpush1.bf16.xpose.msra.mxu0 %v1280
        %1284 = vmatprep.subr.bf16.mxu0 0
        %1285 = vmatpush1.bf16.xpose.msra.mxu0 0
        %1286 = vmatprep.subr.bf16.mxu0 0
        %1287 = vmatpush1.bf16.xpose.msra.mxu0 0
        %1288 = vmatprep.subr.bf16.mxu0 0
        %1289 = vmatpush1.bf16.xpose.msra.mxu0 0
        %1290 = vmatprep.subr.bf16.mxu0 0
        %1291 = vmatpush1.bf16.xpose.msra.mxu0 0
        %1292 = vmatprep.subr.bf16.mxu0 0
        %1293 = vmatpush1.bf16.xpose.msra.mxu0 0
        %1294 = vmatprep.subr.bf16.mxu0 0
        %1295 = vmatpush1.bf16.xpose.msra.mxu0 0
        %1296 = vmatprep.subr.bf16.mxu0 0
        %1297 = vmatpush1.bf16.xpose.msra.mxu0 0
        %1298 = vmatprep.subr.bf16.mxu0 0
        %1299 = vmatpush1.bf16.xpose.msra.mxu0 0
        %1300 = vmatprep.subr.bf16.mxu0 0
        %1301 = vmatpush1.bf16.xpose.msra.mxu0 0
        %1302 = vmatprep.subr.bf16.mxu0 0
        %1303 = vmatpush1.bf16.xpose.msra.mxu0 0
        %1304 = vmatprep.subr.bf16.mxu0 0
        %1305 = vmatpush1.bf16.xpose.msra.mxu0 0
        %1306 = vmatprep.subr.bf16.mxu0 0
        %1307 = vmatpush1.bf16.xpose.msra.mxu0 0
        %1308 = vmatprep.subr.bf16.mxu0 0
        %1309 = vmatpush1.bf16.xpose.msra.mxu0 0
        %1310 = vmatprep.subr.bf16.mxu0 0
        %1311 = vmatpush1.bf16.xpose.msra.mxu0 0
        %1312 = vmatprep.subr.bf16.mxu0 0
        %1313 = vmatpush1.bf16.xpose.msra.mxu0 0
        %1314 = vmatprep.mubr.bf16.mxu0 0
        %1315 = vmatmul.mubr.bf16.gmra.mrb[0].mxu0 %v1277
        %v1316 = vpop.f32.mrb[0].mxu0
        %v1317 = vadd.f32 %v724, %v1316
        %v1318 = vpop.f32.mrb[0].mxu0
        %v1319 = vpop.f32.mrb[0].mxu0
        %v1320 = vpop.f32.mrb[0].mxu0
        %1321 = vdwg.mxu0
        %v1322 = vsel %vm797, %v1317, -inf
        %1323 = vmax.xlane.f32.xlu0 %v1322
        %v1324 = vpop.xlane.xlu0 %1323
        %v1325 = vsub.f32 %v1317, %v1324
        %v1326 = vmul.f32 %v1325, 1.442695
        %v1327 = vpow.pop %v1326
        %v1328 = vsel %vm797, %v1327, 0.0
        %1329 = vadd.xlane.f32.xlu0 %v1328
        %v1330 = vpop.xlane.xlu0 %1329
        %v1331 = vrcp.pop %v1330
        %v1332 = vmul.f32 %v1327, %v1331
        %v1333 = vpack.c.bf16 %v1332, %v1332
        %1334 = vrot.lane.b32.xlu0 %v793, 40
        %v1335 = vpop.permute.xlu0 %1334
        %v1337 = vsel %vm797, %v1333, 0
        %v1340 = vsel %vm861, %v1335, 0
        %1342 = vmatprep.subr.bf16.mxu0 0
        %1343 = vmatpush1.bf16.msra.mxu0 %v1340
        %1344 = vmatprep.subr.bf16.mxu0 0
        %1345 = vmatpush1.bf16.msra.mxu0 0
        %1346 = vmatprep.subr.bf16.mxu0 0
        %1347 = vmatpush1.bf16.msra.mxu0 0
        %1348 = vmatprep.subr.bf16.mxu0 0
        %1349 = vmatpush1.bf16.msra.mxu0 0
        %1350 = vmatprep.subr.bf16.mxu0 0
        %1351 = vmatpush1.bf16.msra.mxu0 0
        %1352 = vmatprep.subr.bf16.mxu0 0
        %1353 = vmatpush1.bf16.msra.mxu0 0
        %1354 = vmatprep.subr.bf16.mxu0 0
        %1355 = vmatpush1.bf16.msra.mxu0 0
        %1356 = vmatprep.subr.bf16.mxu0 0
        %1357 = vmatpush1.bf16.msra.mxu0 0
        %1358 = vmatprep.subr.bf16.mxu0 0
        %1359 = vmatpush1.bf16.msra.mxu0 0
        %1360 = vmatprep.subr.bf16.mxu0 0
        %1361 = vmatpush1.bf16.msra.mxu0 0
        %1362 = vmatprep.subr.bf16.mxu0 0
        %1363 = vmatpush1.bf16.msra.mxu0 0
        %1364 = vmatprep.subr.bf16.mxu0 0
        %1365 = vmatpush1.bf16.msra.mxu0 0
        %1366 = vmatprep.subr.bf16.mxu0 0
        %1367 = vmatpush1.bf16.msra.mxu0 0
        %1368 = vmatprep.subr.bf16.mxu0 0
        %1369 = vmatpush1.bf16.msra.mxu0 0
        %1370 = vmatprep.subr.bf16.mxu0 0
        %1371 = vmatpush1.bf16.msra.mxu0 0
        %1372 = vmatprep.subr.bf16.mxu0 0
        %1373 = vmatpush1.bf16.msra.mxu0 0
        %1374 = vmatprep.mubr.bf16.mxu0 0
        %1375 = vmatmul.mubr.bf16.gmra.mrb[0].mxu0 %v1337
        %v1376 = vpop.f32.mrb[0].mxu0
        %v1377 = vadd.f32 0.0, %v1376
        %v1378 = vpop.f32.mrb[0].mxu0
        %v1379 = vpop.f32.mrb[0].mxu0
        %v1380 = vpop.f32.mrb[0].mxu0
        %1381 = vdwg.mxu0
        %v1382 = vpack.c.bf16 %v1377, %v1377
        %s1383 = scalar_lea.vmem [#allocation11], 12
        %v1384 = vld [vmem:[%s1383] sm:$0xf]
        %v1386 = vsel %vm797, %v1382, 0
        %v1389 = vsel %vm861, %v1384, 0
        %1391 = vmatprep.subr.bf16.mxu0 0
        %1392 = vmatpush1.bf16.msra.mxu0 %v1389
        %1393 = vmatprep.subr.bf16.mxu0 0
        %1394 = vmatpush1.bf16.msra.mxu0 0
        %1395 = vmatprep.subr.bf16.mxu0 0
        %1396 = vmatpush1.bf16.msra.mxu0 0
        %1397 = vmatprep.subr.bf16.mxu0 0
        %1398 = vmatpush1.bf16.msra.mxu0 0
        %1399 = vmatprep.subr.bf16.mxu0 0
        %1400 = vmatpush1.bf16.msra.mxu0 0
        %1401 = vmatprep.subr.bf16.mxu0 0
        %1402 = vmatpush1.bf16.msra.mxu0 0
        %1403 = vmatprep.subr.bf16.mxu0 0
        %1404 = vmatpush1.bf16.msra.mxu0 0
        %1405 = vmatprep.subr.bf16.mxu0 0
        %1406 = vmatpush1.bf16.msra.mxu0 0
        %1407 = vmatprep.subr.bf16.mxu0 0
        %1408 = vmatpush1.bf16.msra.mxu0 0
        %1409 = vmatprep.subr.bf16.mxu0 0
        %1410 = vmatpush1.bf16.msra.mxu0 0
        %1411 = vmatprep.subr.bf16.mxu0 0
        %1412 = vmatpush1.bf16.msra.mxu0 0
        %1413 = vmatprep.subr.bf16.mxu0 0
        %1414 = vmatpush1.bf16.msra.mxu0 0
        %1415 = vmatprep.subr.bf16.mxu0 0
        %1416 = vmatpush1.bf16.msra.mxu0 0
        %1417 = vmatprep.subr.bf16.mxu0 0
        %1418 = vmatpush1.bf16.msra.mxu0 0
        %1419 = vmatprep.subr.bf16.mxu0 0
        %1420 = vmatpush1.bf16.msra.mxu0 0
        %1421 = vmatprep.subr.bf16.mxu0 0
        %1422 = vmatpush1.bf16.msra.mxu0 0
        %1423 = vmatprep.mubr.bf16.mxu0 0
        %1424 = vmatmul.mubr.bf16.gmra.mrb[0].mxu0 %v1386
        %v1425 = vpop.f32.mrb[0].mxu0
        %v1426 = vadd.f32 0.0, %v1425
        %v1427 = vpop.f32.mrb[0].mxu0
        %v1428 = vpop.f32.mrb[0].mxu0
        %v1429 = vpop.f32.mrb[0].mxu0
        %1430 = vdwg.mxu0
        %v1431 = vadd.f32 %v1271, %v1426
        %v1432 = vld [vmem:[#allocation13] sm:$0x1]
        %v1434 = vlaneseq
        %v1435 = vshrl.u32 %v1434, 7
        %v1436 = vsub.s32 0, %v1435
        %v1437 = vrot.slane %v1432, %v1436
        %v1439 = vadd.f32 %v1431, %v1437
        %v1440 = vadd.f32 %v715, %v1439
        %v1441 = vld [vmem:[#allocation20] sm:$0x1]
        %v1442 = vld [vmem:[#allocation22] sm:$0x1]
        %v1443 = vsel %vm749, %v1440, 0.0
        %1444 = vadd.xlane.f32.xlu0 %v1443
        %v1445 = vpop.xlane.xlu0 %1444
        %v1446 = vrcp.pop 32.0
        %v1447 = vmul.f32 %v1445, %v1446
        %v1448 = vsub.f32 %v1440, %v1447
        %v1449 = vmul.f32 %v1448, %v1448
        %v1450 = vsel %vm749, %v1449, 0.0
        %1451 = vadd.xlane.f32.xlu0 %v1450
        %v1452 = vpop.xlane.xlu0 %1451
        %v1453 = vmul.f32 %v1452, %v1446
        %v1454 = vadd.f32 %v1453, 1e-05
        %v1455 = vrsqrt.pop %v1454
        %v1456 = vmul.f32 %v1448, %v1455
        %v1458 = vlaneseq
        %v1459 = vshrl.u32 %v1458, 7
        %v1460 = vsub.s32 0, %v1459
        %v1461 = vrot.slane %v1441, %v1460
        %v1463 = vmul.f32 %v1456, %v1461
        %v1465 = vlaneseq
        %v1466 = vshrl.u32 %v1465, 7
        %v1467 = vsub.s32 0, %v1466
        %v1468 = vrot.slane %v1442, %v1467
        %v1470 = vadd.f32 %v1463, %v1468
        %v1471 = vpack.c.bf16 %v1470, %v1470
        %v1472 = vld [vmem:[#allocation14] sm:$0xff]
        %v1473 = vld [vmem:[#allocation14 + $0x8] sm:$0xff]
        %v1474 = vld [vmem:[#allocation14 + $0x40] sm:$0xff]
        %v1475 = vld [vmem:[#allocation14 + $0x48] sm:$0xff]
        %v1476 = vld [vmem:[#allocation14 + $0x80] sm:$0xff]
        %v1477 = vld [vmem:[#allocation14 + $0x88] sm:$0xff]
        %v1478 = vld [vmem:[#allocation14 + $0xc0] sm:$0xff]
        %v1479 = vld [vmem:[#allocation14 + $0xc8] sm:$0xff]
        %v1480 = vld [vmem:[#allocation16] sm:$0xf]
        %v1482 = vlaneseq
        %v1483 = vshrl.u32 %v1482, 7
        %v1484 = vsub.s32 0, %v1483
        %v1485 = vrot.slane %v1480, %v1484
        %v1486 = vlaneseq
        %v1487 = vshrl.u32 %v1486, 7
        %v1488 = vsub.s32 1, %v1487
        %v1489 = vrot.slane %v1480, %v1488
        %v1490 = vlaneseq
        %v1491 = vshrl.u32 %v1490, 7
        %v1492 = vsub.s32 2, %v1491
        %v1493 = vrot.slane %v1480, %v1492
        %v1494 = vlaneseq
        %v1495 = vshrl.u32 %v1494, 7
        %v1496 = vsub.s32 3, %v1495
        %v1497 = vrot.slane %v1480, %v1496
        %v1510 = vunpack.c.l.b16 %v1472
        %v1511 = vunpack.c.h.b16 %v1472
        %v1512 = vunpack.c.l.b16 %v1473
        %v1513 = vunpack.c.h.b16 %v1473
        %v1514 = vunpack.c.l.b16 %v1474
        %v1515 = vunpack.c.h.b16 %v1474
        %v1516 = vunpack.c.l.b16 %v1475
        %v1517 = vunpack.c.h.b16 %v1475
        %v1518 = vunpack.c.l.b16 %v1476
        %v1519 = vunpack.c.h.b16 %v1476
        %v1520 = vunpack.c.l.b16 %v1477
        %v1521 = vunpack.c.h.b16 %v1477
        %v1522 = vunpack.c.l.b16 %v1478
        %v1523 = vunpack.c.h.b16 %v1478
        %v1524 = vunpack.c.l.b16 %v1479
        %v1525 = vunpack.c.h.b16 %v1479
        %v1526 = vpack.c.b16 %v1514, %v1510
        %v1527 = vpack.c.b16 %v1515, %v1511
        %v1528 = vpack.c.b16 %v1516, %v1512
        %v1529 = vpack.c.b16 %v1517, %v1513
        %v1530 = vpack.c.b16 %v1522, %v1518
        %v1531 = vpack.c.b16 %v1523, %v1519
        %v1532 = vpack.c.b16 %v1524, %v1520
        %v1533 = vpack.c.b16 %v1525, %v1521
        %v1543 = vsel %vm749, %v1471, 0
        %1545 = vmatprep.subr.bf16.mxu0 %v1527
        %1546 = vmatpush1.bf16.msra.mxu0 %v1526
        %1547 = vmatprep.subr.bf16.mxu0 %v1531
        %1548 = vmatpush1.bf16.msra.mxu0 %v1530
        %1549 = vmatprep.subr.bf16.mxu0 0
        %1550 = vmatpush1.bf16.msra.mxu0 0
        %1551 = vmatprep.subr.bf16.mxu0 0
        %1552 = vmatpush1.bf16.msra.mxu0 0
        %1553 = vmatprep.subr.bf16.mxu0 0
        %1554 = vmatpush1.bf16.msra.mxu0 0
        %1555 = vmatprep.subr.bf16.mxu0 0
        %1556 = vmatpush1.bf16.msra.mxu0 0
        %1557 = vmatprep.subr.bf16.mxu0 0
        %1558 = vmatpush1.bf16.msra.mxu0 0
        %1559 = vmatprep.subr.bf16.mxu0 0
        %1560 = vmatpush1.bf16.msra.mxu0 0
        %1561 = vmatprep.subr.bf16.mxu0 0
        %1562 = vmatpush1.bf16.msra.mxu0 0
        %1563 = vmatprep.subr.bf16.mxu0 0
        %1564 = vmatpush1.bf16.msra.mxu0 0
        %1565 = vmatprep.subr.bf16.mxu0 0
        %1566 = vmatpush1.bf16.msra.mxu0 0
        %1567 = vmatprep.subr.bf16.mxu0 0
        %1568 = vmatpush1.bf16.msra.mxu0 0
        %1569 = vmatprep.subr.bf16.mxu0 0
        %1570 = vmatpush1.bf16.msra.mxu0 0
        %1571 = vmatprep.subr.bf16.mxu0 0
        %1572 = vmatpush1.bf16.msra.mxu0 0
        %1573 = vmatprep.subr.bf16.mxu0 0
        %1574 = vmatpush1.bf16.msra.mxu0 0
        %1575 = vmatprep.subr.bf16.mxu0 0
        %1576 = vmatpush1.bf16.msra.mxu0 0
        %1577 = vmatprep.mubr.bf16.mxu0 0
        %1578 = vmatmul.mubr.bf16.gmra.mrb[0].mxu0 %v1543
        %v1579 = vpop.f32.mrb[0].mxu0
        %v1580 = vadd.f32 %v1485, %v1579
        %v1581 = vpop.f32.mrb[0].mxu0
        %v1582 = vadd.f32 %v1489, %v1581
        %v1583 = vpop.f32.mrb[0].mxu0
        %v1584 = vpop.f32.mrb[0].mxu0
        %1585 = vdwg.mxu0
        %1586 = vmatprep.subr.bf16.mxu0 %v1529
        %1587 = vmatpush1.bf16.msra.mxu0 %v1528
        %1588 = vmatprep.subr.bf16.mxu0 %v1533
        %1589 = vmatpush1.bf16.msra.mxu0 %v1532
        %1590 = vmatprep.subr.bf16.mxu0 0
        %1591 = vmatpush1.bf16.msra.mxu0 0
        %1592 = vmatprep.subr.bf16.mxu0 0
        %1593 = vmatpush1.bf16.msra.mxu0 0
        %1594 = vmatprep.subr.bf16.mxu0 0
        %1595 = vmatpush1.bf16.msra.mxu0 0
        %1596 = vmatprep.subr.bf16.mxu0 0
        %1597 = vmatpush1.bf16.msra.mxu0 0
        %1598 = vmatprep.subr.bf16.mxu0 0
        %1599 = vmatpush1.bf16.msra.mxu0 0
        %1600 = vmatprep.subr.bf16.mxu0 0
        %1601 = vmatpush1.bf16.msra.mxu0 0
        %1602 = vmatprep.subr.bf16.mxu0 0
        %1603 = vmatpush1.bf16.msra.mxu0 0
        %1604 = vmatprep.subr.bf16.mxu0 0
        %1605 = vmatpush1.bf16.msra.mxu0 0
        %1606 = vmatprep.subr.bf16.mxu0 0
        %1607 = vmatpush1.bf16.msra.mxu0 0
        %1608 = vmatprep.subr.bf16.mxu0 0
        %1609 = vmatpush1.bf16.msra.mxu0 0
        %1610 = vmatprep.subr.bf16.mxu0 0
        %1611 = vmatpush1.bf16.msra.mxu0 0
        %1612 = vmatprep.subr.bf16.mxu0 0
        %1613 = vmatpush1.bf16.msra.mxu0 0
        %1614 = vmatprep.subr.bf16.mxu0 0
        %1615 = vmatpush1.bf16.msra.mxu0 0
        %1616 = vmatprep.subr.bf16.mxu0 0
        %1617 = vmatpush1.bf16.msra.mxu0 0
        %1618 = vmatprep.mubr.bf16.mxu0 0
        %1619 = vmatmul.mubr.bf16.gmra.mrb[0].mxu0 %v1543
        %v1620 = vpop.f32.mrb[0].mxu0
        %v1621 = vadd.f32 %v1493, %v1620
        %v1622 = vpop.f32.mrb[0].mxu0
        %v1623 = vadd.f32 %v1497, %v1622
        %v1624 = vpop.f32.mrb[0].mxu0
        %v1625 = vpop.f32.mrb[0].mxu0
        %1626 = vdwg.mxu0
        %v1627 = vmax.f32 %v1580, 0.0
        %v1628 = vmax.f32 %v1582, 0.0
        %v1629 = vmax.f32 %v1621, 0.0
        %v1630 = vmax.f32 %v1623, 0.0
        %v1631 = vpack.c.bf16 %v1627, %v1627
        %v1632 = vpack.c.bf16 %v1628, %v1628
        %v1633 = vpack.c.bf16 %v1629, %v1629
        %v1634 = vpack.c.bf16 %v1630, %v1630
        %v1635 = vld [vmem:[#allocation17] sm:$0xf]
        %v1636 = vld [vmem:[#allocation17 + $0x4] sm:$0xf]
        %v1637 = vld [vmem:[#allocation17 + $0x8] sm:$0xf]
        %v1638 = vld [vmem:[#allocation17 + $0xc] sm:$0xf]
        %v1639 = vld [vmem:[#allocation17 + $0x10] sm:$0xf]
        %v1640 = vld [vmem:[#allocation17 + $0x14] sm:$0xf]
        %v1641 = vld [vmem:[#allocation17 + $0x18] sm:$0xf]
        %v1642 = vld [vmem:[#allocation17 + $0x1c] sm:$0xf]
        %v1643 = vld [vmem:[#allocation17 + $0x20] sm:$0xf]
        %v1644 = vld [vmem:[#allocation17 + $0x24] sm:$0xf]
        %v1645 = vld [vmem:[#allocation17 + $0x28] sm:$0xf]
        %v1646 = vld [vmem:[#allocation17 + $0x2c] sm:$0xf]
        %v1647 = vld [vmem:[#allocation17 + $0x30] sm:$0xf]
        %v1648 = vld [vmem:[#allocation17 + $0x34] sm:$0xf]
        %v1649 = vld [vmem:[#allocation17 + $0x38] sm:$0xf]
        %v1650 = vld [vmem:[#allocation17 + $0x3c] sm:$0xf]
        %v1651 = vld [vmem:[#allocation17 + $0x40] sm:$0xf]
        %v1652 = vld [vmem:[#allocation17 + $0x44] sm:$0xf]
        %v1653 = vld [vmem:[#allocation17 + $0x48] sm:$0xf]
        %v1654 = vld [vmem:[#allocation17 + $0x4c] sm:$0xf]
        %v1655 = vld [vmem:[#allocation17 + $0x50] sm:$0xf]
        %v1656 = vld [vmem:[#allocation17 + $0x54] sm:$0xf]
        %v1657 = vld [vmem:[#allocation17 + $0x58] sm:$0xf]
        %v1658 = vld [vmem:[#allocation17 + $0x5c] sm:$0xf]
        %v1659 = vld [vmem:[#allocation17 + $0x60] sm:$0xf]
        %v1660 = vld [vmem:[#allocation17 + $0x64] sm:$0xf]
        %v1661 = vld [vmem:[#allocation17 + $0x68] sm:$0xf]
        %v1662 = vld [vmem:[#allocation17 + $0x6c] sm:$0xf]
        %v1663 = vld [vmem:[#allocation17 + $0x70] sm:$0xf]
        %v1664 = vld [vmem:[#allocation17 + $0x74] sm:$0xf]
        %v1665 = vld [vmem:[#allocation17 + $0x78] sm:$0xf]
        %v1666 = vld [vmem:[#allocation17 + $0x7c] sm:$0xf]
        %v1667 = vld [vmem:[#allocation17 + $0x80] sm:$0xf]
        %v1668 = vld [vmem:[#allocation17 + $0x84] sm:$0xf]
        %v1669 = vld [vmem:[#allocation17 + $0x88] sm:$0xf]
        %v1670 = vld [vmem:[#allocation17 + $0x8c] sm:$0xf]
        %v1671 = vld [vmem:[#allocation17 + $0x90] sm:$0xf]
        %v1672 = vld [vmem:[#allocation17 + $0x94] sm:$0xf]
        %v1673 = vld [vmem:[#allocation17 + $0x98] sm:$0xf]
        %v1674 = vld [vmem:[#allocation17 + $0x9c] sm:$0xf]
        %v1675 = vld [vmem:[#allocation17 + $0xa0] sm:$0xf]
        %v1676 = vld [vmem:[#allocation17 + $0xa4] sm:$0xf]
        %v1677 = vld [vmem:[#allocation17 + $0xa8] sm:$0xf]
        %v1678 = vld [vmem:[#allocation17 + $0xac] sm:$0xf]
        %v1679 = vld [vmem:[#allocation17 + $0xb0] sm:$0xf]
        %v1680 = vld [vmem:[#allocation17 + $0xb4] sm:$0xf]
        %v1681 = vld [vmem:[#allocation17 + $0xb8] sm:$0xf]
        %v1682 = vld [vmem:[#allocation17 + $0xbc] sm:$0xf]
        %v1683 = vld [vmem:[#allocation17 + $0xc0] sm:$0xf]
        %v1684 = vld [vmem:[#allocation17 + $0xc4] sm:$0xf]
        %v1685 = vld [vmem:[#allocation17 + $0xc8] sm:$0xf]
        %v1686 = vld [vmem:[#allocation17 + $0xcc] sm:$0xf]
        %v1687 = vld [vmem:[#allocation17 + $0xd0] sm:$0xf]
        %v1688 = vld [vmem:[#allocation17 + $0xd4] sm:$0xf]
        %v1689 = vld [vmem:[#allocation17 + $0xd8] sm:$0xf]
        %v1690 = vld [vmem:[#allocation17 + $0xdc] sm:$0xf]
        %v1691 = vld [vmem:[#allocation17 + $0xe0] sm:$0xf]
        %v1692 = vld [vmem:[#allocation17 + $0xe4] sm:$0xf]
        %v1693 = vld [vmem:[#allocation17 + $0xe8] sm:$0xf]
        %v1694 = vld [vmem:[#allocation17 + $0xec] sm:$0xf]
        %v1695 = vld [vmem:[#allocation17 + $0xf0] sm:$0xf]
        %v1696 = vld [vmem:[#allocation17 + $0xf4] sm:$0xf]
        %v1697 = vld [vmem:[#allocation17 + $0xf8] sm:$0xf]
        %v1698 = vld [vmem:[#allocation17 + $0xfc] sm:$0xf]
        %v1699 = vld [vmem:[#allocation14 + $0x10] sm:$0xff]
        %v1700 = vld [vmem:[#allocation14 + $0x18] sm:$0xff]
        %v1701 = vld [vmem:[#allocation14 + $0x50] sm:$0xff]
        %v1702 = vld [vmem:[#allocation14 + $0x58] sm:$0xff]
        %v1703 = vld [vmem:[#allocation14 + $0x90] sm:$0xff]
        %v1704 = vld [vmem:[#allocation14 + $0x98] sm:$0xff]
        %v1705 = vld [vmem:[#allocation14 + $0xd0] sm:$0xff]
        %v1706 = vld [vmem:[#allocation14 + $0xd8] sm:$0xff]
        %v1707 = vld [vmem:[#allocation16 + $0x4] sm:$0xf]
        %v1709 = vlaneseq
        %v1710 = vshrl.u32 %v1709, 7
        %v1711 = vsub.s32 0, %v1710
        %v1712 = vrot.slane %v1707, %v1711
        %v1713 = vlaneseq
        %v1714 = vshrl.u32 %v1713, 7
        %v1715 = vsub.s32 1, %v1714
        %v1716 = vrot.slane %v1707, %v1715
        %v1717 = vlaneseq
        %v1718 = vshrl.u32 %v1717, 7
        %v1719 = vsub.s32 2, %v1718
        %v1720 = vrot.slane %v1707, %v1719
        %v1721 = vlaneseq
        %v1722 = vshrl.u32 %v1721, 7
        %v1723 = vsub.s32 3, %v1722
        %v1724 = vrot.slane %v1707, %v1723
        %v1737 = vunpack.c.l.b16 %v1699
        %v1738 = vunpack.c.h.b16 %v1699
        %v1739 = vunpack.c.l.b16 %v1700
        %v1740 = vunpack.c.h.b16 %v1700
        %v1741 = vunpack.c.l.b16 %v1701
        %v1742 = vunpack.c.h.b16 %v1701
        %v1743 = vunpack.c.l.b16 %v1702
        %v1744 = vunpack.c.h.b16 %v1702
        %v1745 = vunpack.c.l.b16 %v1703
        %v1746 = vunpack.c.h.b16 %v1703
        %v1747 = vunpack.c.l.b16 %v1704
        %v1748 = vunpack.c.h.b16 %v1704
        %v1749 = vunpack.c.l.b16 %v1705
        %v1750 = vunpack.c.h.b16 %v1705
        %v1751 = vunpack.c.l.b16 %v1706
        %v1752 = vunpack.c.h.b16 %v1706
        %v1753 = vpack.c.b16 %v1741, %v1737
        %v1754 = vpack.c.b16 %v1742, %v1738
        %v1755 = vpack.c.b16 %v1743, %v1739
        %v1756 = vpack.c.b16 %v1744, %v1740
        %v1757 = vpack.c.b16 %v1749, %v1745
        %v1758 = vpack.c.b16 %v1750, %v1746
        %v1759 = vpack.c.b16 %v1751, %v1747
        %v1760 = vpack.c.b16 %v1752, %v1748
        %1769 = vmatprep.subr.bf16.mxu0 %v1754
        %1770 = vmatpush1.bf16.msra.mxu0 %v1753
        %1771 = vmatprep.subr.bf16.mxu0 %v1758
        %1772 = vmatpush1.bf16.msra.mxu0 %v1757
        %1773 = vmatprep.subr.bf16.mxu0 0
        %1774 = vmatpush1.bf16.msra.mxu0 0
        %1775 = vmatprep.subr.bf16.mxu0 0
        %1776 = vmatpush1.bf16.msra.mxu0 0
        %1777 = vmatprep.subr.bf16.mxu0 0
        %1778 = vmatpush1.bf16.msra.mxu0 0
        %1779 = vmatprep.subr.bf16.mxu0 0
        %1780 = vmatpush1.bf16.msra.mxu0 0
        %1781 = vmatprep.subr.bf16.mxu0 0
        %1782 = vmatpush1.bf16.msra.mxu0 0
        %1783 = vmatprep.subr.bf16.mxu0 0
        %1784 = vmatpush1.bf16.msra.mxu0 0
        %1785 = vmatprep.subr.bf16.mxu0 0
        %1786 = vmatpush1.bf16.msra.mxu0 0
        %1787 = vmatprep.subr.bf16.mxu0 0
        %1788 = vmatpush1.bf16.msra.mxu0 0
        %1789 = vmatprep.subr.bf16.mxu0 0
        %1790 = vmatpush1.bf16.msra.mxu0 0
        %1791 = vmatprep.subr.bf16.mxu0 0
        %1792 = vmatpush1.bf16.msra.mxu0 0
        %1793 = vmatprep.subr.bf16.mxu0 0
        %1794 = vmatpush1.bf16.msra.mxu0 0
        %1795 = vmatprep.subr.bf16.mxu0 0
        %1796 = vmatpush1.bf16.msra.mxu0 0
        %1797 = vmatprep.subr.bf16.mxu0 0
        %1798 = vmatpush1.bf16.msra.mxu0 0
        %1799 = vmatprep.subr.bf16.mxu0 0
        %1800 = vmatpush1.bf16.msra.mxu0 0
        %1801 = vmatprep.mubr.bf16.mxu0 0
        %1802 = vmatmul.mubr.bf16.gmra.mrb[0].mxu0 %v1543
        %v1803 = vpop.f32.mrb[0].mxu0
        %v1804 = vadd.f32 %v1712, %v1803
        %v1805 = vpop.f32.mrb[0].mxu0
        %v1806 = vadd.f32 %v1716, %v1805
        %v1807 = vpop.f32.mrb[0].mxu0
        %v1808 = vpop.f32.mrb[0].mxu0
        %1809 = vdwg.mxu0
        %1810 = vmatprep.subr.bf16.mxu0 %v1756
        %1811 = vmatpush1.bf16.msra.mxu0 %v1755
        %1812 = vmatprep.subr.bf16.mxu0 %v1760
        %1813 = vmatpush1.bf16.msra.mxu0 %v1759
        %1814 = vmatprep.subr.bf16.mxu0 0
        %1815 = vmatpush1.bf16.msra.mxu0 0
        %1816 = vmatprep.subr.bf16.mxu0 0
        %1817 = vmatpush1.bf16.msra.mxu0 0
        %1818 = vmatprep.subr.bf16.mxu0 0
        %1819 = vmatpush1.bf16.msra.mxu0 0
        %1820 = vmatprep.subr.bf16.mxu0 0
        %1821 = vmatpush1.bf16.msra.mxu0 0
        %1822 = vmatprep.subr.bf16.mxu0 0
        %1823 = vmatpush1.bf16.msra.mxu0 0
        %1824 = vmatprep.subr.bf16.mxu0 0
        %1825 = vmatpush1.bf16.msra.mxu0 0
        %1826 = vmatprep.subr.bf16.mxu0 0
        %1827 = vmatpush1.bf16.msra.mxu0 0
        %1828 = vmatprep.subr.bf16.mxu0 0
        %1829 = vmatpush1.bf16.msra.mxu0 0
        %1830 = vmatprep.subr.bf16.mxu0 0
        %1831 = vmatpush1.bf16.msra.mxu0 0
        %1832 = vmatprep.subr.bf16.mxu0 0
        %1833 = vmatpush1.bf16.msra.mxu0 0
        %1834 = vmatprep.subr.bf16.mxu0 0
        %1835 = vmatpush1.bf16.msra.mxu0 0
        %1836 = vmatprep.subr.bf16.mxu0 0
        %1837 = vmatpush1.bf16.msra.mxu0 0
        %1838 = vmatprep.subr.bf16.mxu0 0
        %1839 = vmatpush1.bf16.msra.mxu0 0
        %1840 = vmatprep.subr.bf16.mxu0 0
        %1841 = vmatpush1.bf16.msra.mxu0 0
        %1842 = vmatprep.mubr.bf16.mxu0 0
        %1843 = vmatmul.mubr.bf16.gmra.mrb[0].mxu0 %v1543
        %v1844 = vpop.f32.mrb[0].mxu0
        %v1845 = vadd.f32 %v1720, %v1844
        %v1846 = vpop.f32.mrb[0].mxu0
        %v1847 = vadd.f32 %v1724, %v1846
        %v1848 = vpop.f32.mrb[0].mxu0
        %v1849 = vpop.f32.mrb[0].mxu0
        %1850 = vdwg.mxu0
        %v1851 = vmax.f32 %v1804, 0.0
        %v1852 = vmax.f32 %v1806, 0.0
        %v1853 = vmax.f32 %v1845, 0.0
        %v1854 = vmax.f32 %v1847, 0.0
        %v1855 = vpack.c.bf16 %v1851, %v1851
        %v1856 = vpack.c.bf16 %v1852, %v1852
        %v1857 = vpack.c.bf16 %v1853, %v1853
        %v1858 = vpack.c.bf16 %v1854, %v1854
        %v1859 = vld [vmem:[#allocation17 + $0x100] sm:$0xf]
        %v1860 = vld [vmem:[#allocation17 + $0x104] sm:$0xf]
        %v1861 = vld [vmem:[#allocation17 + $0x108] sm:$0xf]
        %v1862 = vld [vmem:[#allocation17 + $0x10c] sm:$0xf]
        %v1863 = vld [vmem:[#allocation17 + $0x110] sm:$0xf]
        %v1864 = vld [vmem:[#allocation17 + $0x114] sm:$0xf]
        %v1865 = vld [vmem:[#allocation17 + $0x118] sm:$0xf]
        %v1866 = vld [vmem:[#allocation17 + $0x11c] sm:$0xf]
        %v1867 = vld [vmem:[#allocation17 + $0x120] sm:$0xf]
        %v1868 = vld [vmem:[#allocation17 + $0x124] sm:$0xf]
        %v1869 = vld [vmem:[#allocation17 + $0x128] sm:$0xf]
        %v1870 = vld [vmem:[#allocation17 + $0x12c] sm:$0xf]
        %v1871 = vld [vmem:[#allocation17 + $0x130] sm:$0xf]
        %v1872 = vld [vmem:[#allocation17 + $0x134] sm:$0xf]
        %v1873 = vld [vmem:[#allocation17 + $0x138] sm:$0xf]
        %v1874 = vld [vmem:[#allocation17 + $0x13c] sm:$0xf]
        %v1875 = vld [vmem:[#allocation17 + $0x140] sm:$0xf]
        %v1876 = vld [vmem:[#allocation17 + $0x144] sm:$0xf]
        %v1877 = vld [vmem:[#allocation17 + $0x148] sm:$0xf]
        %v1878 = vld [vmem:[#allocation17 + $0x14c] sm:$0xf]
        %v1879 = vld [vmem:[#allocation17 + $0x150] sm:$0xf]
        %v1880 = vld [vmem:[#allocation17 + $0x154] sm:$0xf]
        %v1881 = vld [vmem:[#allocation17 + $0x158] sm:$0xf]
        %v1882 = vld [vmem:[#allocation17 + $0x15c] sm:$0xf]
        %v1883 = vld [vmem:[#allocation17 + $0x160] sm:$0xf]
        %v1884 = vld [vmem:[#allocation17 + $0x164] sm:$0xf]
        %v1885 = vld [vmem:[#allocation17 + $0x168] sm:$0xf]
        %v1886 = vld [vmem:[#allocation17 + $0x16c] sm:$0xf]
        %v1887 = vld [vmem:[#allocation17 + $0x170] sm:$0xf]
        %v1888 = vld [vmem:[#allocation17 + $0x174] sm:$0xf]
        %v1889 = vld [vmem:[#allocation17 + $0x178] sm:$0xf]
        %v1890 = vld [vmem:[#allocation17 + $0x17c] sm:$0xf]
        %v1891 = vld [vmem:[#allocation17 + $0x180] sm:$0xf]
        %v1892 = vld [vmem:[#allocation17 + $0x184] sm:$0xf]
        %v1893 = vld [vmem:[#allocation17 + $0x188] sm:$0xf]
        %v1894 = vld [vmem:[#allocation17 + $0x18c] sm:$0xf]
        %v1895 = vld [vmem:[#allocation17 + $0x190] sm:$0xf]
        %v1896 = vld [vmem:[#allocation17 + $0x194] sm:$0xf]
        %v1897 = vld [vmem:[#allocation17 + $0x198] sm:$0xf]
        %v1898 = vld [vmem:[#allocation17 + $0x19c] sm:$0xf]
        %v1899 = vld [vmem:[#allocation17 + $0x1a0] sm:$0xf]
        %v1900 = vld [vmem:[#allocation17 + $0x1a4] sm:$0xf]
        %v1901 = vld [vmem:[#allocation17 + $0x1a8] sm:$0xf]
        %v1902 = vld [vmem:[#allocation17 + $0x1ac] sm:$0xf]
        %v1903 = vld [vmem:[#allocation17 + $0x1b0] sm:$0xf]
        %v1904 = vld [vmem:[#allocation17 + $0x1b4] sm:$0xf]
        %v1905 = vld [vmem:[#allocation17 + $0x1b8] sm:$0xf]
        %v1906 = vld [vmem:[#allocation17 + $0x1bc] sm:$0xf]
        %v1907 = vld [vmem:[#allocation17 + $0x1c0] sm:$0xf]
        %v1908 = vld [vmem:[#allocation17 + $0x1c4] sm:$0xf]
        %v1909 = vld [vmem:[#allocation17 + $0x1c8] sm:$0xf]
        %v1910 = vld [vmem:[#allocation17 + $0x1cc] sm:$0xf]
        %v1911 = vld [vmem:[#allocation17 + $0x1d0] sm:$0xf]
        %v1912 = vld [vmem:[#allocation17 + $0x1d4] sm:$0xf]
        %v1913 = vld [vmem:[#allocation17 + $0x1d8] sm:$0xf]
        %v1914 = vld [vmem:[#allocation17 + $0x1dc] sm:$0xf]
        %v1915 = vld [vmem:[#allocation17 + $0x1e0] sm:$0xf]
        %v1916 = vld [vmem:[#allocation17 + $0x1e4] sm:$0xf]
        %v1917 = vld [vmem:[#allocation17 + $0x1e8] sm:$0xf]
        %v1918 = vld [vmem:[#allocation17 + $0x1ec] sm:$0xf]
        %v1919 = vld [vmem:[#allocation17 + $0x1f0] sm:$0xf]
        %v1920 = vld [vmem:[#allocation17 + $0x1f4] sm:$0xf]
        %v1921 = vld [vmem:[#allocation17 + $0x1f8] sm:$0xf]
        %v1922 = vld [vmem:[#allocation17 + $0x1fc] sm:$0xf]
        %v1987 = vunpack.c.l.b16 %v1859
        %v1988 = vunpack.c.l.b16 %v1860
        %v1989 = vunpack.c.l.b16 %v1861
        %v1990 = vunpack.c.l.b16 %v1862
        %v1991 = vunpack.c.l.b16 %v1863
        %v1992 = vunpack.c.l.b16 %v1864
        %v1993 = vunpack.c.l.b16 %v1865
        %v1994 = vunpack.c.l.b16 %v1866
        %v1995 = vunpack.c.l.b16 %v1867
        %v1996 = vunpack.c.l.b16 %v1868
        %v1997 = vunpack.c.l.b16 %v1869
        %v1998 = vunpack.c.l.b16 %v1870
        %v1999 = vunpack.c.l.b16 %v1871
        %v2000 = vunpack.c.l.b16 %v1872
        %v2001 = vunpack.c.l.b16 %v1873
        %v2002 = vunpack.c.l.b16 %v1874
        %v2003 = vunpack.c.l.b16 %v1875
        %v2004 = vunpack.c.l.b16 %v1876
        %v2005 = vunpack.c.l.b16 %v1877
        %v2006 = vunpack.c.l.b16 %v1878
        %v2007 = vunpack.c.l.b16 %v1879
        %v2008 = vunpack.c.l.b16 %v1880
        %v2009 = vunpack.c.l.b16 %v1881
        %v2010 = vunpack.c.l.b16 %v1882
        %v2011 = vunpack.c.l.b16 %v1883
        %v2012 = vunpack.c.l.b16 %v1884
        %v2013 = vunpack.c.l.b16 %v1885
        %v2014 = vunpack.c.l.b16 %v1886
        %v2015 = vunpack.c.l.b16 %v1887
        %v2016 = vunpack.c.l.b16 %v1888
        %v2017 = vunpack.c.l.b16 %v1889
        %v2018 = vunpack.c.l.b16 %v1890
        %v2019 = vunpack.c.l.b16 %v1891
        %v2020 = vunpack.c.l.b16 %v1892
        %v2021 = vunpack.c.l.b16 %v1893
        %v2022 = vunpack.c.l.b16 %v1894
        %v2023 = vunpack.c.l.b16 %v1895
        %v2024 = vunpack.c.l.b16 %v1896
        %v2025 = vunpack.c.l.b16 %v1897
        %v2026 = vunpack.c.l.b16 %v1898
        %v2027 = vunpack.c.l.b16 %v1899
        %v2028 = vunpack.c.l.b16 %v1900
        %v2029 = vunpack.c.l.b16 %v1901
        %v2030 = vunpack.c.l.b16 %v1902
        %v2031 = vunpack.c.l.b16 %v1903
        %v2032 = vunpack.c.l.b16 %v1904
        %v2033 = vunpack.c.l.b16 %v1905
        %v2034 = vunpack.c.l.b16 %v1906
        %v2035 = vunpack.c.l.b16 %v1907
        %v2036 = vunpack.c.l.b16 %v1908
        %v2037 = vunpack.c.l.b16 %v1909
        %v2038 = vunpack.c.l.b16 %v1910
        %v2039 = vunpack.c.l.b16 %v1911
        %v2040 = vunpack.c.l.b16 %v1912
        %v2041 = vunpack.c.l.b16 %v1913
        %v2042 = vunpack.c.l.b16 %v1914
        %v2043 = vunpack.c.l.b16 %v1915
        %v2044 = vunpack.c.l.b16 %v1916
        %v2045 = vunpack.c.l.b16 %v1917
        %v2046 = vunpack.c.l.b16 %v1918
        %v2047 = vunpack.c.l.b16 %v1919
        %v2048 = vunpack.c.l.b16 %v1920
        %v2049 = vunpack.c.l.b16 %v1921
        %v2050 = vunpack.c.l.b16 %v1922
        %v2051 = vpack.c.b16 %v1988, %v1987
        %v2052 = vpack.c.b16 %v1990, %v1989
        %v2053 = vpack.c.b16 %v1992, %v1991
        %v2054 = vpack.c.b16 %v1994, %v1993
        %v2055 = vpack.c.b16 %v1996, %v1995
        %v2056 = vpack.c.b16 %v1998, %v1997
        %v2057 = vpack.c.b16 %v2000, %v1999
        %v2058 = vpack.c.b16 %v2002, %v2001
        %v2059 = vpack.c.b16 %v2004, %v2003
        %v2060 = vpack.c.b16 %v2006, %v2005
        %v2061 = vpack.c.b16 %v2008, %v2007
        %v2062 = vpack.c.b16 %v2010, %v2009
        %v2063 = vpack.c.b16 %v2012, %v2011
        %v2064 = vpack.c.b16 %v2014, %v2013
        %v2065 = vpack.c.b16 %v2016, %v2015
        %v2066 = vpack.c.b16 %v2018, %v2017
        %v2067 = vpack.c.b16 %v2020, %v2019
        %v2068 = vpack.c.b16 %v2022, %v2021
        %v2069 = vpack.c.b16 %v2024, %v2023
        %v2070 = vpack.c.b16 %v2026, %v2025
        %v2071 = vpack.c.b16 %v2028, %v2027
        %v2072 = vpack.c.b16 %v2030, %v2029
        %v2073 = vpack.c.b16 %v2032, %v2031
        %v2074 = vpack.c.b16 %v2034, %v2033
        %v2075 = vpack.c.b16 %v2036, %v2035
        %v2076 = vpack.c.b16 %v2038, %v2037
        %v2077 = vpack.c.b16 %v2040, %v2039
        %v2078 = vpack.c.b16 %v2042, %v2041
        %v2079 = vpack.c.b16 %v2044, %v2043
        %v2080 = vpack.c.b16 %v2046, %v2045
        %v2081 = vpack.c.b16 %v2048, %v2047
        %v2082 = vpack.c.b16 %v2050, %v2049
        %2115 = vmatprep.subr.bf16.mxu0 0
        %2116 = vmatpush1.bf16.msra.mxu0 %v2051
        %2117 = vmatprep.subr.bf16.mxu0 0
        %2118 = vmatpush1.bf16.msra.mxu0 %v2052
        %2119 = vmatprep.subr.bf16.mxu0 0
        %2120 = vmatpush1.bf16.msra.mxu0 %v2053
        %2121 = vmatprep.subr.bf16.mxu0 0
        %2122 = vmatpush1.bf16.msra.mxu0 %v2054
        %2123 = vmatprep.subr.bf16.mxu0 0
        %2124 = vmatpush1.bf16.msra.mxu0 %v2055
        %2125 = vmatprep.subr.bf16.mxu0 0
        %2126 = vmatpush1.bf16.msra.mxu0 %v2056
        %2127 = vmatprep.subr.bf16.mxu0 0
        %2128 = vmatpush1.bf16.msra.mxu0 %v2057
        %2129 = vmatprep.subr.bf16.mxu0 0
        %2130 = vmatpush1.bf16.msra.mxu0 %v2058
        %2131 = vmatprep.subr.bf16.mxu0 0
        %2132 = vmatpush1.bf16.msra.mxu0 %v2059
        %2133 = vmatprep.subr.bf16.mxu0 0
        %2134 = vmatpush1.bf16.msra.mxu0 %v2060
        %2135 = vmatprep.subr.bf16.mxu0 0
        %2136 = vmatpush1.bf16.msra.mxu0 %v2061
        %2137 = vmatprep.subr.bf16.mxu0 0
        %2138 = vmatpush1.bf16.msra.mxu0 %v2062
        %2139 = vmatprep.subr.bf16.mxu0 0
        %2140 = vmatpush1.bf16.msra.mxu0 %v2063
        %2141 = vmatprep.subr.bf16.mxu0 0
        %2142 = vmatpush1.bf16.msra.mxu0 %v2064
        %2143 = vmatprep.subr.bf16.mxu0 0
        %2144 = vmatpush1.bf16.msra.mxu0 %v2065
        %2145 = vmatprep.subr.bf16.mxu0 0
        %2146 = vmatpush1.bf16.msra.mxu0 %v2066
        %2147 = vmatprep.mubr.bf16.mxu0 %v1856
        %2148 = vmatmul.mubr.bf16.gmra.mrb[0].mxu0 %v1855
        %v2149 = vpop.f32.mrb[0].mxu0
        %v2150 = vadd.f32 0.0, %v2149
        %v2151 = vpop.f32.mrb[0].mxu0
        %v2152 = vpop.f32.mrb[0].mxu0
        %v2153 = vpop.f32.mrb[0].mxu0
        %2154 = vdwg.mxu0
        %2155 = vmatprep.subr.bf16.mxu0 0
        %2156 = vmatpush1.bf16.msra.mxu0 %v2067
        %2157 = vmatprep.subr.bf16.mxu0 0
        %2158 = vmatpush1.bf16.msra.mxu0 %v2068
        %2159 = vmatprep.subr.bf16.mxu0 0
        %2160 = vmatpush1.bf16.msra.mxu0 %v2069
        %2161 = vmatprep.subr.bf16.mxu0 0
        %2162 = vmatpush1.bf16.msra.mxu0 %v2070
        %2163 = vmatprep.subr.bf16.mxu0 0
        %2164 = vmatpush1.bf16.msra.mxu0 %v2071
        %2165 = vmatprep.subr.bf16.mxu0 0
        %2166 = vmatpush1.bf16.msra.mxu0 %v2072
        %2167 = vmatprep.subr.bf16.mxu0 0
        %2168 = vmatpush1.bf16.msra.mxu0 %v2073
        %2169 = vmatprep.subr.bf16.mxu0 0
        %2170 = vmatpush1.bf16.msra.mxu0 %v2074
        %2171 = vmatprep.subr.bf16.mxu0 0
        %2172 = vmatpush1.bf16.msra.mxu0 %v2075
        %2173 = vmatprep.subr.bf16.mxu0 0
        %2174 = vmatpush1.bf16.msra.mxu0 %v2076
        %2175 = vmatprep.subr.bf16.mxu0 0
        %2176 = vmatpush1.bf16.msra.mxu0 %v2077
        %2177 = vmatprep.subr.bf16.mxu0 0
        %2178 = vmatpush1.bf16.msra.mxu0 %v2078
        %2179 = vmatprep.subr.bf16.mxu0 0
        %2180 = vmatpush1.bf16.msra.mxu0 %v2079
        %2181 = vmatprep.subr.bf16.mxu0 0
        %2182 = vmatpush1.bf16.msra.mxu0 %v2080
        %2183 = vmatprep.subr.bf16.mxu0 0
        %2184 = vmatpush1.bf16.msra.mxu0 %v2081
        %2185 = vmatprep.subr.bf16.mxu0 0
        %2186 = vmatpush1.bf16.msra.mxu0 %v2082
        %2187 = vmatprep.mubr.bf16.mxu0 %v1858
        %2188 = vmatmul.mubr.bf16.gmra.mrb[0].mxu0 %v1857
        %v2189 = vpop.f32.mrb[0].mxu0
        %v2190 = vadd.f32 %v2150, %v2189
        %v2191 = vpop.f32.mrb[0].mxu0
        %v2192 = vpop.f32.mrb[0].mxu0
        %v2193 = vpop.f32.mrb[0].mxu0
        %2194 = vdwg.mxu0
        %v2259 = vunpack.c.l.b16 %v1635
        %v2260 = vunpack.c.l.b16 %v1636
        %v2261 = vunpack.c.l.b16 %v1637
        %v2262 = vunpack.c.l.b16 %v1638
        %v2263 = vunpack.c.l.b16 %v1639
        %v2264 = vunpack.c.l.b16 %v1640
        %v2265 = vunpack.c.l.b16 %v1641
        %v2266 = vunpack.c.l.b16 %v1642
        %v2267 = vunpack.c.l.b16 %v1643
        %v2268 = vunpack.c.l.b16 %v1644
        %v2269 = vunpack.c.l.b16 %v1645
        %v2270 = vunpack.c.l.b16 %v1646
        %v2271 = vunpack.c.l.b16 %v1647
        %v2272 = vunpack.c.l.b16 %v1648
        %v2273 = vunpack.c.l.b16 %v1649
        %v2274 = vunpack.c.l.b16 %v1650
        %v2275 = vunpack.c.l.b16 %v1651
        %v2276 = vunpack.c.l.b16 %v1652
        %v2277 = vunpack.c.l.b16 %v1653
        %v2278 = vunpack.c.l.b16 %v1654
        %v2279 = vunpack.c.l.b16 %v1655
        %v2280 = vunpack.c.l.b16 %v1656
        %v2281 = vunpack.c.l.b16 %v1657
        %v2282 = vunpack.c.l.b16 %v1658
        %v2283 = vunpack.c.l.b16 %v1659
        %v2284 = vunpack.c.l.b16 %v1660
        %v2285 = vunpack.c.l.b16 %v1661
        %v2286 = vunpack.c.l.b16 %v1662
        %v2287 = vunpack.c.l.b16 %v1663
        %v2288 = vunpack.c.l.b16 %v1664
        %v2289 = vunpack.c.l.b16 %v1665
        %v2290 = vunpack.c.l.b16 %v1666
        %v2291 = vunpack.c.l.b16 %v1667
        %v2292 = vunpack.c.l.b16 %v1668
        %v2293 = vunpack.c.l.b16 %v1669
        %v2294 = vunpack.c.l.b16 %v1670
        %v2295 = vunpack.c.l.b16 %v1671
        %v2296 = vunpack.c.l.b16 %v1672
        %v2297 = vunpack.c.l.b16 %v1673
        %v2298 = vunpack.c.l.b16 %v1674
        %v2299 = vunpack.c.l.b16 %v1675
        %v2300 = vunpack.c.l.b16 %v1676
        %v2301 = vunpack.c.l.b16 %v1677
        %v2302 = vunpack.c.l.b16 %v1678
        %v2303 = vunpack.c.l.b16 %v1679
        %v2304 = vunpack.c.l.b16 %v1680
        %v2305 = vunpack.c.l.b16 %v1681
        %v2306 = vunpack.c.l.b16 %v1682
        %v2307 = vunpack.c.l.b16 %v1683
        %v2308 = vunpack.c.l.b16 %v1684
        %v2309 = vunpack.c.l.b16 %v1685
        %v2310 = vunpack.c.l.b16 %v1686
        %v2311 = vunpack.c.l.b16 %v1687
        %v2312 = vunpack.c.l.b16 %v1688
        %v2313 = vunpack.c.l.b16 %v1689
        %v2314 = vunpack.c.l.b16 %v1690
        %v2315 = vunpack.c.l.b16 %v1691
        %v2316 = vunpack.c.l.b16 %v1692
        %v2317 = vunpack.c.l.b16 %v1693
        %v2318 = vunpack.c.l.b16 %v1694
        %v2319 = vunpack.c.l.b16 %v1695
        %v2320 = vunpack.c.l.b16 %v1696
        %v2321 = vunpack.c.l.b16 %v1697
        %v2322 = vunpack.c.l.b16 %v1698
        %v2323 = vpack.c.b16 %v2260, %v2259
        %v2324 = vpack.c.b16 %v2262, %v2261
        %v2325 = vpack.c.b16 %v2264, %v2263
        %v2326 = vpack.c.b16 %v2266, %v2265
        %v2327 = vpack.c.b16 %v2268, %v2267
        %v2328 = vpack.c.b16 %v2270, %v2269
        %v2329 = vpack.c.b16 %v2272, %v2271
        %v2330 = vpack.c.b16 %v2274, %v2273
        %v2331 = vpack.c.b16 %v2276, %v2275
        %v2332 = vpack.c.b16 %v2278, %v2277
        %v2333 = vpack.c.b16 %v2280, %v2279
        %v2334 = vpack.c.b16 %v2282, %v2281
        %v2335 = vpack.c.b16 %v2284, %v2283
        %v2336 = vpack.c.b16 %v2286, %v2285
        %v2337 = vpack.c.b16 %v2288, %v2287
        %v2338 = vpack.c.b16 %v2290, %v2289
        %v2339 = vpack.c.b16 %v2292, %v2291
        %v2340 = vpack.c.b16 %v2294, %v2293
        %v2341 = vpack.c.b16 %v2296, %v2295
        %v2342 = vpack.c.b16 %v2298, %v2297
        %v2343 = vpack.c.b16 %v2300, %v2299
        %v2344 = vpack.c.b16 %v2302, %v2301
        %v2345 = vpack.c.b16 %v2304, %v2303
        %v2346 = vpack.c.b16 %v2306, %v2305
        %v2347 = vpack.c.b16 %v2308, %v2307
        %v2348 = vpack.c.b16 %v2310, %v2309
        %v2349 = vpack.c.b16 %v2312, %v2311
        %v2350 = vpack.c.b16 %v2314, %v2313
        %v2351 = vpack.c.b16 %v2316, %v2315
        %v2352 = vpack.c.b16 %v2318, %v2317
        %v2353 = vpack.c.b16 %v2320, %v2319
        %v2354 = vpack.c.b16 %v2322, %v2321
        %2387 = vmatprep.subr.bf16.mxu0 0
        %2388 = vmatpush1.bf16.msra.mxu0 %v2323
        %2389 = vmatprep.subr.bf16.mxu0 0
        %2390 = vmatpush1.bf16.msra.mxu0 %v2324
        %2391 = vmatprep.subr.bf16.mxu0 0
        %2392 = vmatpush1.bf16.msra.mxu0 %v2325
        %2393 = vmatprep.subr.bf16.mxu0 0
        %2394 = vmatpush1.bf16.msra.mxu0 %v2326
        %2395 = vmatprep.subr.bf16.mxu0 0
        %2396 = vmatpush1.bf16.msra.mxu0 %v2327
        %2397 = vmatprep.subr.bf16.mxu0 0
        %2398 = vmatpush1.bf16.msra.mxu0 %v2328
        %2399 = vmatprep.subr.bf16.mxu0 0
        %2400 = vmatpush1.bf16.msra.mxu0 %v2329
        %2401 = vmatprep.subr.bf16.mxu0 0
        %2402 = vmatpush1.bf16.msra.mxu0 %v2330
        %2403 = vmatprep.subr.bf16.mxu0 0
        %2404 = vmatpush1.bf16.msra.mxu0 %v2331
        %2405 = vmatprep.subr.bf16.mxu0 0
        %2406 = vmatpush1.bf16.msra.mxu0 %v2332
        %2407 = vmatprep.subr.bf16.mxu0 0
        %2408 = vmatpush1.bf16.msra.mxu0 %v2333
        %2409 = vmatprep.subr.bf16.mxu0 0
        %2410 = vmatpush1.bf16.msra.mxu0 %v2334
        %2411 = vmatprep.subr.bf16.mxu0 0
        %2412 = vmatpush1.bf16.msra.mxu0 %v2335
        %2413 = vmatprep.subr.bf16.mxu0 0
        %2414 = vmatpush1.bf16.msra.mxu0 %v2336
        %2415 = vmatprep.subr.bf16.mxu0 0
        %2416 = vmatpush1.bf16.msra.mxu0 %v2337
        %2417 = vmatprep.subr.bf16.mxu0 0
        %2418 = vmatpush1.bf16.msra.mxu0 %v2338
        %2419 = vmatprep.mubr.bf16.mxu0 %v1632
        %2420 = vmatmul.mubr.bf16.gmra.mrb[0].mxu0 %v1631
        %v2421 = vpop.f32.mrb[0].mxu0
        %v2422 = vadd.f32 %v2190, %v2421
        %v2423 = vpop.f32.mrb[0].mxu0
        %v2424 = vpop.f32.mrb[0].mxu0
        %v2425 = vpop.f32.mrb[0].mxu0
        %2426 = vdwg.mxu0
        %2427 = vmatprep.subr.bf16.mxu0 0
        %2428 = vmatpush1.bf16.msra.mxu0 %v2339
        %2429 = vmatprep.subr.bf16.mxu0 0
        %2430 = vmatpush1.bf16.msra.mxu0 %v2340
        %2431 = vmatprep.subr.bf16.mxu0 0
        %2432 = vmatpush1.bf16.msra.mxu0 %v2341
        %2433 = vmatprep.subr.bf16.mxu0 0
        %2434 = vmatpush1.bf16.msra.mxu0 %v2342
        %2435 = vmatprep.subr.bf16.mxu0 0
        %2436 = vmatpush1.bf16.msra.mxu0 %v2343
        %2437 = vmatprep.subr.bf16.mxu0 0
        %2438 = vmatpush1.bf16.msra.mxu0 %v2344
        %2439 = vmatprep.subr.bf16.mxu0 0
        %2440 = vmatpush1.bf16.msra.mxu0 %v2345
        %2441 = vmatprep.subr.bf16.mxu0 0
        %2442 = vmatpush1.bf16.msra.mxu0 %v2346
        %2443 = vmatprep.subr.bf16.mxu0 0
        %2444 = vmatpush1.bf16.msra.mxu0 %v2347
        %2445 = vmatprep.subr.bf16.mxu0 0
        %2446 = vmatpush1.bf16.msra.mxu0 %v2348
        %2447 = vmatprep.subr.bf16.mxu0 0
        %2448 = vmatpush1.bf16.msra.mxu0 %v2349
        %2449 = vmatprep.subr.bf16.mxu0 0
        %2450 = vmatpush1.bf16.msra.mxu0 %v2350
        %2451 = vmatprep.subr.bf16.mxu0 0
        %2452 = vmatpush1.bf16.msra.mxu0 %v2351
        %2453 = vmatprep.subr.bf16.mxu0 0
        %2454 = vmatpush1.bf16.msra.mxu0 %v2352
        %2455 = vmatprep.subr.bf16.mxu0 0
        %2456 = vmatpush1.bf16.msra.mxu0 %v2353
        %2457 = vmatprep.subr.bf16.mxu0 0
        %2458 = vmatpush1.bf16.msra.mxu0 %v2354
        %2459 = vmatprep.mubr.bf16.mxu0 %v1634
        %2460 = vmatmul.mubr.bf16.gmra.mrb[0].mxu0 %v1633
        %v2461 = vpop.f32.mrb[0].mxu0
        %v2462 = vadd.f32 %v2422, %v2461
        %v2463 = vpop.f32.mrb[0].mxu0
        %v2464 = vpop.f32.mrb[0].mxu0
        %v2465 = vpop.f32.mrb[0].mxu0
        %2466 = vdwg.mxu0
        %v2467 = vld [vmem:[#allocation14 + $0x20] sm:$0xff]
        %v2468 = vld [vmem:[#allocation14 + $0x28] sm:$0xff]
        %v2469 = vld [vmem:[#allocation14 + $0x60] sm:$0xff]
        %v2470 = vld [vmem:[#allocation14 + $0x68] sm:$0xff]
        %v2471 = vld [vmem:[#allocation14 + $0xa0] sm:$0xff]
        %v2472 = vld [vmem:[#allocation14 + $0xa8] sm:$0xff]
        %v2473 = vld [vmem:[#allocation14 + $0xe0] sm:$0xff]
        %v2474 = vld [vmem:[#allocation14 + $0xe8] sm:$0xff]
        %v2475 = vld [vmem:[#allocation16 + $0x8] sm:$0xf]
        %v2477 = vlaneseq
        %v2478 = vshrl.u32 %v2477, 7
        %v2479 = vsub.s32 0, %v2478
        %v2480 = vrot.slane %v2475, %v2479
        %v2481 = vlaneseq
        %v2482 = vshrl.u32 %v2481, 7
        %v2483 = vsub.s32 1, %v2482
        %v2484 = vrot.slane %v2475, %v2483
        %v2485 = vlaneseq
        %v2486 = vshrl.u32 %v2485, 7
        %v2487 = vsub.s32 2, %v2486
        %v2488 = vrot.slane %v2475, %v2487
        %v2489 = vlaneseq
        %v2490 = vshrl.u32 %v2489, 7
        %v2491 = vsub.s32 3, %v2490
        %v2492 = vrot.slane %v2475, %v2491
        %v2505 = vunpack.c.l.b16 %v2467
        %v2506 = vunpack.c.h.b16 %v2467
        %v2507 = vunpack.c.l.b16 %v2468
        %v2508 = vunpack.c.h.b16 %v2468
        %v2509 = vunpack.c.l.b16 %v2469
        %v2510 = vunpack.c.h.b16 %v2469
        %v2511 = vunpack.c.l.b16 %v2470
        %v2512 = vunpack.c.h.b16 %v2470
        %v2513 = vunpack.c.l.b16 %v2471
        %v2514 = vunpack.c.h.b16 %v2471
        %v2515 = vunpack.c.l.b16 %v2472
        %v2516 = vunpack.c.h.b16 %v2472
        %v2517 = vunpack.c.l.b16 %v2473
        %v2518 = vunpack.c.h.b16 %v2473
        %v2519 = vunpack.c.l.b16 %v2474
        %v2520 = vunpack.c.h.b16 %v2474
        %v2521 = vpack.c.b16 %v2509, %v2505
        %v2522 = vpack.c.b16 %v2510, %v2506
        %v2523 = vpack.c.b16 %v2511, %v2507
        %v2524 = vpack.c.b16 %v2512, %v2508
        %v2525 = vpack.c.b16 %v2517, %v2513
        %v2526 = vpack.c.b16 %v2518, %v2514
        %v2527 = vpack.c.b16 %v2519, %v2515
        %v2528 = vpack.c.b16 %v2520, %v2516
        %2537 = vmatprep.subr.bf16.mxu0 %v2522
        %2538 = vmatpush1.bf16.msra.mxu0 %v2521
        %2539 = vmatprep.subr.bf16.mxu0 %v2526
        %2540 = vmatpush1.bf16.msra.mxu0 %v2525
        %2541 = vmatprep.subr.bf16.mxu0 0
        %2542 = vmatpush1.bf16.msra.mxu0 0
        %2543 = vmatprep.subr.bf16.mxu0 0
        %2544 = vmatpush1.bf16.msra.mxu0 0
        %2545 = vmatprep.subr.bf16.mxu0 0
        %2546 = vmatpush1.bf16.msra.mxu0 0
        %2547 = vmatprep.subr.bf16.mxu0 0
        %2548 = vmatpush1.bf16.msra.mxu0 0
        %2549 = vmatprep.subr.bf16.mxu0 0
        %2550 = vmatpush1.bf16.msra.mxu0 0
        %2551 = vmatprep.subr.bf16.mxu0 0
        %2552 = vmatpush1.bf16.msra.mxu0 0
        %2553 = vmatprep.subr.bf16.mxu0 0
        %2554 = vmatpush1.bf16.msra.mxu0 0
        %2555 = vmatprep.subr.bf16.mxu0 0
        %2556 = vmatpush1.bf16.msra.mxu0 0
        %2557 = vmatprep.subr.bf16.mxu0 0
        %2558 = vmatpush1.bf16.msra.mxu0 0
        %2559 = vmatprep.subr.bf16.mxu0 0
        %2560 = vmatpush1.bf16.msra.mxu0 0
        %2561 = vmatprep.subr.bf16.mxu0 0
        %2562 = vmatpush1.bf16.msra.mxu0 0
        %2563 = vmatprep.subr.bf16.mxu0 0
        %2564 = vmatpush1.bf16.msra.mxu0 0
        %2565 = vmatprep.subr.bf16.mxu0 0
        %2566 = vmatpush1.bf16.msra.mxu0 0
        %2567 = vmatprep.subr.bf16.mxu0 0
        %2568 = vmatpush1.bf16.msra.mxu0 0
        %2569 = vmatprep.mubr.bf16.mxu0 0
        %2570 = vmatmul.mubr.bf16.gmra.mrb[0].mxu0 %v1543
        %v2571 = vpop.f32.mrb[0].mxu0
        %v2572 = vadd.f32 %v2480, %v2571
        %v2573 = vpop.f32.mrb[0].mxu0
        %v2574 = vadd.f32 %v2484, %v2573
        %v2575 = vpop.f32.mrb[0].mxu0
        %v2576 = vpop.f32.mrb[0].mxu0
        %2577 = vdwg.mxu0
        %2578 = vmatprep.subr.bf16.mxu0 %v2524
        %2579 = vmatpush1.bf16.msra.mxu0 %v2523
        %2580 = vmatprep.subr.bf16.mxu0 %v2528
        %2581 = vmatpush1.bf16.msra.mxu0 %v2527
        %2582 = vmatprep.subr.bf16.mxu0 0
        %2583 = vmatpush1.bf16.msra.mxu0 0
        %2584 = vmatprep.subr.bf16.mxu0 0
        %2585 = vmatpush1.bf16.msra.mxu0 0
        %2586 = vmatprep.subr.bf16.mxu0 0
        %2587 = vmatpush1.bf16.msra.mxu0 0
        %2588 = vmatprep.subr.bf16.mxu0 0
        %2589 = vmatpush1.bf16.msra.mxu0 0
        %2590 = vmatprep.subr.bf16.mxu0 0
        %2591 = vmatpush1.bf16.msra.mxu0 0
        %2592 = vmatprep.subr.bf16.mxu0 0
        %2593 = vmatpush1.bf16.msra.mxu0 0
        %2594 = vmatprep.subr.bf16.mxu0 0
        %2595 = vmatpush1.bf16.msra.mxu0 0
        %2596 = vmatprep.subr.bf16.mxu0 0
        %2597 = vmatpush1.bf16.msra.mxu0 0
        %2598 = vmatprep.subr.bf16.mxu0 0
        %2599 = vmatpush1.bf16.msra.mxu0 0
        %2600 = vmatprep.subr.bf16.mxu0 0
        %2601 = vmatpush1.bf16.msra.mxu0 0
        %2602 = vmatprep.subr.bf16.mxu0 0
        %2603 = vmatpush1.bf16.msra.mxu0 0
        %2604 = vmatprep.subr.bf16.mxu0 0
        %2605 = vmatpush1.bf16.msra.mxu0 0
        %2606 = vmatprep.subr.bf16.mxu0 0
        %2607 = vmatpush1.bf16.msra.mxu0 0
        %2608 = vmatprep.subr.bf16.mxu0 0
        %2609 = vmatpush1.bf16.msra.mxu0 0
        %2610 = vmatprep.mubr.bf16.mxu0 0
        %2611 = vmatmul.mubr.bf16.gmra.mrb[0].mxu0 %v1543
        %v2612 = vpop.f32.mrb[0].mxu0
        %v2613 = vadd.f32 %v2488, %v2612
        %v2614 = vpop.f32.mrb[0].mxu0
        %v2615 = vadd.f32 %v2492, %v2614
        %v2616 = vpop.f32.mrb[0].mxu0
        %v2617 = vpop.f32.mrb[0].mxu0
        %2618 = vdwg.mxu0
        %v2619 = vmax.f32 %v2572, 0.0
        %v2620 = vmax.f32 %v2574, 0.0
        %v2621 = vmax.f32 %v2613, 0.0
        %v2622 = vmax.f32 %v2615, 0.0
        %v2623 = vpack.c.bf16 %v2619, %v2619
        %v2624 = vpack.c.bf16 %v2620, %v2620
        %v2625 = vpack.c.bf16 %v2621, %v2621
        %v2626 = vpack.c.bf16 %v2622, %v2622
        %v2627 = vld [vmem:[#allocation17 + $0x200] sm:$0xf]
        %v2628 = vld [vmem:[#allocation17 + $0x204] sm:$0xf]
        %v2629 = vld [vmem:[#allocation17 + $0x208] sm:$0xf]
        %v2630 = vld [vmem:[#allocation17 + $0x20c] sm:$0xf]
        %v2631 = vld [vmem:[#allocation17 + $0x210] sm:$0xf]
        %v2632 = vld [vmem:[#allocation17 + $0x214] sm:$0xf]
        %v2633 = vld [vmem:[#allocation17 + $0x218] sm:$0xf]
        %v2634 = vld [vmem:[#allocation17 + $0x21c] sm:$0xf]
        %v2635 = vld [vmem:[#allocation17 + $0x220] sm:$0xf]
        %v2636 = vld [vmem:[#allocation17 + $0x224] sm:$0xf]
        %v2637 = vld [vmem:[#allocation17 + $0x228] sm:$0xf]
        %v2638 = vld [vmem:[#allocation17 + $0x22c] sm:$0xf]
        %v2639 = vld [vmem:[#allocation17 + $0x230] sm:$0xf]
        %v2640 = vld [vmem:[#allocation17 + $0x234] sm:$0xf]
        %v2641 = vld [vmem:[#allocation17 + $0x238] sm:$0xf]
        %v2642 = vld [vmem:[#allocation17 + $0x23c] sm:$0xf]
        %v2643 = vld [vmem:[#allocation17 + $0x240] sm:$0xf]
        %v2644 = vld [vmem:[#allocation17 + $0x244] sm:$0xf]
        %v2645 = vld [vmem:[#allocation17 + $0x248] sm:$0xf]
        %v2646 = vld [vmem:[#allocation17 + $0x24c] sm:$0xf]
        %v2647 = vld [vmem:[#allocation17 + $0x250] sm:$0xf]
        %v2648 = vld [vmem:[#allocation17 + $0x254] sm:$0xf]
        %v2649 = vld [vmem:[#allocation17 + $0x258] sm:$0xf]
        %v2650 = vld [vmem:[#allocation17 + $0x25c] sm:$0xf]
        %v2651 = vld [vmem:[#allocation17 + $0x260] sm:$0xf]
        %v2652 = vld [vmem:[#allocation17 + $0x264] sm:$0xf]
        %v2653 = vld [vmem:[#allocation17 + $0x268] sm:$0xf]
        %v2654 = vld [vmem:[#allocation17 + $0x26c] sm:$0xf]
        %v2655 = vld [vmem:[#allocation17 + $0x270] sm:$0xf]
        %v2656 = vld [vmem:[#allocation17 + $0x274] sm:$0xf]
        %v2657 = vld [vmem:[#allocation17 + $0x278] sm:$0xf]
        %v2658 = vld [vmem:[#allocation17 + $0x27c] sm:$0xf]
        %v2659 = vld [vmem:[#allocation17 + $0x280] sm:$0xf]
        %v2660 = vld [vmem:[#allocation17 + $0x284] sm:$0xf]
        %v2661 = vld [vmem:[#allocation17 + $0x288] sm:$0xf]
        %v2662 = vld [vmem:[#allocation17 + $0x28c] sm:$0xf]
        %v2663 = vld [vmem:[#allocation17 + $0x290] sm:$0xf]
        %v2664 = vld [vmem:[#allocation17 + $0x294] sm:$0xf]
        %v2665 = vld [vmem:[#allocation17 + $0x298] sm:$0xf]
        %v2666 = vld [vmem:[#allocation17 + $0x29c] sm:$0xf]
        %v2667 = vld [vmem:[#allocation17 + $0x2a0] sm:$0xf]
        %v2668 = vld [vmem:[#allocation17 + $0x2a4] sm:$0xf]
        %v2669 = vld [vmem:[#allocation17 + $0x2a8] sm:$0xf]
        %v2670 = vld [vmem:[#allocation17 + $0x2ac] sm:$0xf]
        %v2671 = vld [vmem:[#allocation17 + $0x2b0] sm:$0xf]
        %v2672 = vld [vmem:[#allocation17 + $0x2b4] sm:$0xf]
        %v2673 = vld [vmem:[#allocation17 + $0x2b8] sm:$0xf]
        %v2674 = vld [vmem:[#allocation17 + $0x2bc] sm:$0xf]
        %v2675 = vld [vmem:[#allocation17 + $0x2c0] sm:$0xf]
        %v2676 = vld [vmem:[#allocation17 + $0x2c4] sm:$0xf]
        %v2677 = vld [vmem:[#allocation17 + $0x2c8] sm:$0xf]
        %v2678 = vld [vmem:[#allocation17 + $0x2cc] sm:$0xf]
        %v2679 = vld [vmem:[#allocation17 + $0x2d0] sm:$0xf]
        %v2680 = vld [vmem:[#allocation17 + $0x2d4] sm:$0xf]
        %v2681 = vld [vmem:[#allocation17 + $0x2d8] sm:$0xf]
        %v2682 = vld [vmem:[#allocation17 + $0x2dc] sm:$0xf]
        %v2683 = vld [vmem:[#allocation17 + $0x2e0] sm:$0xf]
        %v2684 = vld [vmem:[#allocation17 + $0x2e4] sm:$0xf]
        %v2685 = vld [vmem:[#allocation17 + $0x2e8] sm:$0xf]
        %v2686 = vld [vmem:[#allocation17 + $0x2ec] sm:$0xf]
        %v2687 = vld [vmem:[#allocation17 + $0x2f0] sm:$0xf]
        %v2688 = vld [vmem:[#allocation17 + $0x2f4] sm:$0xf]
        %v2689 = vld [vmem:[#allocation17 + $0x2f8] sm:$0xf]
        %v2690 = vld [vmem:[#allocation17 + $0x2fc] sm:$0xf]
        %v2755 = vunpack.c.l.b16 %v2627
        %v2756 = vunpack.c.l.b16 %v2628
        %v2757 = vunpack.c.l.b16 %v2629
        %v2758 = vunpack.c.l.b16 %v2630
        %v2759 = vunpack.c.l.b16 %v2631
        %v2760 = vunpack.c.l.b16 %v2632
        %v2761 = vunpack.c.l.b16 %v2633
        %v2762 = vunpack.c.l.b16 %v2634
        %v2763 = vunpack.c.l.b16 %v2635
        %v2764 = vunpack.c.l.b16 %v2636
        %v2765 = vunpack.c.l.b16 %v2637
        %v2766 = vunpack.c.l.b16 %v2638
        %v2767 = vunpack.c.l.b16 %v2639
        %v2768 = vunpack.c.l.b16 %v2640
        %v2769 = vunpack.c.l.b16 %v2641
        %v2770 = vunpack.c.l.b16 %v2642
        %v2771 = vunpack.c.l.b16 %v2643
        %v2772 = vunpack.c.l.b16 %v2644
        %v2773 = vunpack.c.l.b16 %v2645
        %v2774 = vunpack.c.l.b16 %v2646
        %v2775 = vunpack.c.l.b16 %v2647
        %v2776 = vunpack.c.l.b16 %v2648
        %v2777 = vunpack.c.l.b16 %v2649
        %v2778 = vunpack.c.l.b16 %v2650
        %v2779 = vunpack.c.l.b16 %v2651
        %v2780 = vunpack.c.l.b16 %v2652
        %v2781 = vunpack.c.l.b16 %v2653
        %v2782 = vunpack.c.l.b16 %v2654
        %v2783 = vunpack.c.l.b16 %v2655
        %v2784 = vunpack.c.l.b16 %v2656
        %v2785 = vunpack.c.l.b16 %v2657
        %v2786 = vunpack.c.l.b16 %v2658
        %v2787 = vunpack.c.l.b16 %v2659
        %v2788 = vunpack.c.l.b16 %v2660
        %v2789 = vunpack.c.l.b16 %v2661
        %v2790 = vunpack.c.l.b16 %v2662
        %v2791 = vunpack.c.l.b16 %v2663
        %v2792 = vunpack.c.l.b16 %v2664
        %v2793 = vunpack.c.l.b16 %v2665
        %v2794 = vunpack.c.l.b16 %v2666
        %v2795 = vunpack.c.l.b16 %v2667
        %v2796 = vunpack.c.l.b16 %v2668
        %v2797 = vunpack.c.l.b16 %v2669
        %v2798 = vunpack.c.l.b16 %v2670
        %v2799 = vunpack.c.l.b16 %v2671
        %v2800 = vunpack.c.l.b16 %v2672
        %v2801 = vunpack.c.l.b16 %v2673
        %v2802 = vunpack.c.l.b16 %v2674
        %v2803 = vunpack.c.l.b16 %v2675
        %v2804 = vunpack.c.l.b16 %v2676
        %v2805 = vunpack.c.l.b16 %v2677
        %v2806 = vunpack.c.l.b16 %v2678
        %v2807 = vunpack.c.l.b16 %v2679
        %v2808 = vunpack.c.l.b16 %v2680
        %v2809 = vunpack.c.l.b16 %v2681
        %v2810 = vunpack.c.l.b16 %v2682
        %v2811 = vunpack.c.l.b16 %v2683
        %v2812 = vunpack.c.l.b16 %v2684
        %v2813 = vunpack.c.l.b16 %v2685
        %v2814 = vunpack.c.l.b16 %v2686
        %v2815 = vunpack.c.l.b16 %v2687
        %v2816 = vunpack.c.l.b16 %v2688
        %v2817 = vunpack.c.l.b16 %v2689
        %v2818 = vunpack.c.l.b16 %v2690
        %v2819 = vpack.c.b16 %v2756, %v2755
        %v2820 = vpack.c.b16 %v2758, %v2757
        %v2821 = vpack.c.b16 %v2760, %v2759
        %v2822 = vpack.c.b16 %v2762, %v2761
        %v2823 = vpack.c.b16 %v2764, %v2763
        %v2824 = vpack.c.b16 %v2766, %v2765
        %v2825 = vpack.c.b16 %v2768, %v2767
        %v2826 = vpack.c.b16 %v2770, %v2769
        %v2827 = vpack.c.b16 %v2772, %v2771
        %v2828 = vpack.c.b16 %v2774, %v2773
        %v2829 = vpack.c.b16 %v2776, %v2775
        %v2830 = vpack.c.b16 %v2778, %v2777
        %v2831 = vpack.c.b16 %v2780, %v2779
        %v2832 = vpack.c.b16 %v2782, %v2781
        %v2833 = vpack.c.b16 %v2784, %v2783
        %v2834 = vpack.c.b16 %v2786, %v2785
        %v2835 = vpack.c.b16 %v2788, %v2787
        %v2836 = vpack.c.b16 %v2790, %v2789
        %v2837 = vpack.c.b16 %v2792, %v2791
        %v2838 = vpack.c.b16 %v2794, %v2793
        %v2839 = vpack.c.b16 %v2796, %v2795
        %v2840 = vpack.c.b16 %v2798, %v2797
        %v2841 = vpack.c.b16 %v2800, %v2799
        %v2842 = vpack.c.b16 %v2802, %v2801
        %v2843 = vpack.c.b16 %v2804, %v2803
        %v2844 = vpack.c.b16 %v2806, %v2805
        %v2845 = vpack.c.b16 %v2808, %v2807
        %v2846 = vpack.c.b16 %v2810, %v2809
        %v2847 = vpack.c.b16 %v2812, %v2811
        %v2848 = vpack.c.b16 %v2814, %v2813
        %v2849 = vpack.c.b16 %v2816, %v2815
        %v2850 = vpack.c.b16 %v2818, %v2817
        %2883 = vmatprep.subr.bf16.mxu0 0
        %2884 = vmatpush1.bf16.msra.mxu0 %v2819
        %2885 = vmatprep.subr.bf16.mxu0 0
        %2886 = vmatpush1.bf16.msra.mxu0 %v2820
        %2887 = vmatprep.subr.bf16.mxu0 0
        %2888 = vmatpush1.bf16.msra.mxu0 %v2821
        %2889 = vmatprep.subr.bf16.mxu0 0
        %2890 = vmatpush1.bf16.msra.mxu0 %v2822
        %2891 = vmatprep.subr.bf16.mxu0 0
        %2892 = vmatpush1.bf16.msra.mxu0 %v2823
        %2893 = vmatprep.subr.bf16.mxu0 0
        %2894 = vmatpush1.bf16.msra.mxu0 %v2824
        %2895 = vmatprep.subr.bf16.mxu0 0
        %2896 = vmatpush1.bf16.msra.mxu0 %v2825
        %2897 = vmatprep.subr.bf16.mxu0 0
        %2898 = vmatpush1.bf16.msra.mxu0 %v2826
        %2899 = vmatprep.subr.bf16.mxu0 0
        %2900 = vmatpush1.bf16.msra.mxu0 %v2827
        %2901 = vmatprep.subr.bf16.mxu0 0
        %2902 = vmatpush1.bf16.msra.mxu0 %v2828
        %2903 = vmatprep.subr.bf16.mxu0 0
        %2904 = vmatpush1.bf16.msra.mxu0 %v2829
        %2905 = vmatprep.subr.bf16.mxu0 0
        %2906 = vmatpush1.bf16.msra.mxu0 %v2830
        %2907 = vmatprep.subr.bf16.mxu0 0
        %2908 = vmatpush1.bf16.msra.mxu0 %v2831
        %2909 = vmatprep.subr.bf16.mxu0 0
        %2910 = vmatpush1.bf16.msra.mxu0 %v2832
        %2911 = vmatprep.subr.bf16.mxu0 0
        %2912 = vmatpush1.bf16.msra.mxu0 %v2833
        %2913 = vmatprep.subr.bf16.mxu0 0
        %2914 = vmatpush1.bf16.msra.mxu0 %v2834
        %2915 = vmatprep.mubr.bf16.mxu0 %v2624
        %2916 = vmatmul.mubr.bf16.gmra.mrb[0].mxu0 %v2623
        %v2917 = vpop.f32.mrb[0].mxu0
        %v2918 = vadd.f32 0.0, %v2917
        %v2919 = vpop.f32.mrb[0].mxu0
        %v2920 = vpop.f32.mrb[0].mxu0
        %v2921 = vpop.f32.mrb[0].mxu0
        %2922 = vdwg.mxu0
        %2923 = vmatprep.subr.bf16.mxu0 0
        %2924 = vmatpush1.bf16.msra.mxu0 %v2835
        %2925 = vmatprep.subr.bf16.mxu0 0
        %2926 = vmatpush1.bf16.msra.mxu0 %v2836
        %2927 = vmatprep.subr.bf16.mxu0 0
        %2928 = vmatpush1.bf16.msra.mxu0 %v2837
        %2929 = vmatprep.subr.bf16.mxu0 0
        %2930 = vmatpush1.bf16.msra.mxu0 %v2838
        %2931 = vmatprep.subr.bf16.mxu0 0
        %2932 = vmatpush1.bf16.msra.mxu0 %v2839
        %2933 = vmatprep.subr.bf16.mxu0 0
        %2934 = vmatpush1.bf16.msra.mxu0 %v2840
        %2935 = vmatprep.subr.bf16.mxu0 0
        %2936 = vmatpush1.bf16.msra.mxu0 %v2841
        %2937 = vmatprep.subr.bf16.mxu0 0
        %2938 = vmatpush1.bf16.msra.mxu0 %v2842
        %2939 = vmatprep.subr.bf16.mxu0 0
        %2940 = vmatpush1.bf16.msra.mxu0 %v2843
        %2941 = vmatprep.subr.bf16.mxu0 0
        %2942 = vmatpush1.bf16.msra.mxu0 %v2844
        %2943 = vmatprep.subr.bf16.mxu0 0
        %2944 = vmatpush1.bf16.msra.mxu0 %v2845
        %2945 = vmatprep.subr.bf16.mxu0 0
        %2946 = vmatpush1.bf16.msra.mxu0 %v2846
        %2947 = vmatprep.subr.bf16.mxu0 0
        %2948 = vmatpush1.bf16.msra.mxu0 %v2847
        %2949 = vmatprep.subr.bf16.mxu0 0
        %2950 = vmatpush1.bf16.msra.mxu0 %v2848
        %2951 = vmatprep.subr.bf16.mxu0 0
        %2952 = vmatpush1.bf16.msra.mxu0 %v2849
        %2953 = vmatprep.subr.bf16.mxu0 0
        %2954 = vmatpush1.bf16.msra.mxu0 %v2850
        %2955 = vmatprep.mubr.bf16.mxu0 %v2626
        %2956 = vmatmul.mubr.bf16.gmra.mrb[0].mxu0 %v2625
        %v2957 = vpop.f32.mrb[0].mxu0
        %v2958 = vadd.f32 %v2918, %v2957
        %v2959 = vpop.f32.mrb[0].mxu0
        %v2960 = vpop.f32.mrb[0].mxu0
        %v2961 = vpop.f32.mrb[0].mxu0
        %2962 = vdwg.mxu0
        %v2963 = vadd.f32 %v2462, %v2958
        %v2964 = vld [vmem:[#allocation14 + $0x30] sm:$0xff]
        %v2965 = vld [vmem:[#allocation14 + $0x38] sm:$0xff]
        %v2966 = vld [vmem:[#allocation14 + $0x70] sm:$0xff]
        %v2967 = vld [vmem:[#allocation14 + $0x78] sm:$0xff]
        %v2968 = vld [vmem:[#allocation14 + $0xb0] sm:$0xff]
        %v2969 = vld [vmem:[#allocation14 + $0xb8] sm:$0xff]
        %v2970 = vld [vmem:[#allocation14 + $0xf0] sm:$0xff]
        %v2971 = vld [vmem:[#allocation14 + $0xf8] sm:$0xff]
        %v2972 = vld [vmem:[#allocation16 + $0xc] sm:$0xf]
        %v2974 = vlaneseq
        %v2975 = vshrl.u32 %v2974, 7
        %v2976 = vsub.s32 0, %v2975
        %v2977 = vrot.slane %v2972, %v2976
        %v2978 = vlaneseq
        %v2979 = vshrl.u32 %v2978, 7
        %v2980 = vsub.s32 1, %v2979
        %v2981 = vrot.slane %v2972, %v2980
        %v2982 = vlaneseq
        %v2983 = vshrl.u32 %v2982, 7
        %v2984 = vsub.s32 2, %v2983
        %v2985 = vrot.slane %v2972, %v2984
        %v2986 = vlaneseq
        %v2987 = vshrl.u32 %v2986, 7
        %v2988 = vsub.s32 3, %v2987
        %v2989 = vrot.slane %v2972, %v2988
        %v3002 = vunpack.c.l.b16 %v2964
        %v3003 = vunpack.c.h.b16 %v2964
        %v3004 = vunpack.c.l.b16 %v2965
        %v3005 = vunpack.c.h.b16 %v2965
        %v3006 = vunpack.c.l.b16 %v2966
        %v3007 = vunpack.c.h.b16 %v2966
        %v3008 = vunpack.c.l.b16 %v2967
        %v3009 = vunpack.c.h.b16 %v2967
        %v3010 = vunpack.c.l.b16 %v2968
        %v3011 = vunpack.c.h.b16 %v2968
        %v3012 = vunpack.c.l.b16 %v2969
        %v3013 = vunpack.c.h.b16 %v2969
        %v3014 = vunpack.c.l.b16 %v2970
        %v3015 = vunpack.c.h.b16 %v2970
        %v3016 = vunpack.c.l.b16 %v2971
        %v3017 = vunpack.c.h.b16 %v2971
        %v3018 = vpack.c.b16 %v3006, %v3002
        %v3019 = vpack.c.b16 %v3007, %v3003
        %v3020 = vpack.c.b16 %v3008, %v3004
        %v3021 = vpack.c.b16 %v3009, %v3005
        %v3022 = vpack.c.b16 %v3014, %v3010
        %v3023 = vpack.c.b16 %v3015, %v3011
        %v3024 = vpack.c.b16 %v3016, %v3012
        %v3025 = vpack.c.b16 %v3017, %v3013
        %3034 = vmatprep.subr.bf16.mxu0 %v3019
        %3035 = vmatpush1.bf16.msra.mxu0 %v3018
        %3036 = vmatprep.subr.bf16.mxu0 %v3023
        %3037 = vmatpush1.bf16.msra.mxu0 %v3022
        %3038 = vmatprep.subr.bf16.mxu0 0
        %3039 = vmatpush1.bf16.msra.mxu0 0
        %3040 = vmatprep.subr.bf16.mxu0 0
        %3041 = vmatpush1.bf16.msra.mxu0 0
        %3042 = vmatprep.subr.bf16.mxu0 0
        %3043 = vmatpush1.bf16.msra.mxu0 0
        %3044 = vmatprep.subr.bf16.mxu0 0
        %3045 = vmatpush1.bf16.msra.mxu0 0
        %3046 = vmatprep.subr.bf16.mxu0 0
        %3047 = vmatpush1.bf16.msra.mxu0 0
        %3048 = vmatprep.subr.bf16.mxu0 0
        %3049 = vmatpush1.bf16.msra.mxu0 0
        %3050 = vmatprep.subr.bf16.mxu0 0
        %3051 = vmatpush1.bf16.msra.mxu0 0
        %3052 = vmatprep.subr.bf16.mxu0 0
        %3053 = vmatpush1.bf16.msra.mxu0 0
        %3054 = vmatprep.subr.bf16.mxu0 0
        %3055 = vmatpush1.bf16.msra.mxu0 0
        %3056 = vmatprep.subr.bf16.mxu0 0
        %3057 = vmatpush1.bf16.msra.mxu0 0
        %3058 = vmatprep.subr.bf16.mxu0 0
        %3059 = vmatpush1.bf16.msra.mxu0 0
        %3060 = vmatprep.subr.bf16.mxu0 0
        %3061 = vmatpush1.bf16.msra.mxu0 0
        %3062 = vmatprep.subr.bf16.mxu0 0
        %3063 = vmatpush1.bf16.msra.mxu0 0
        %3064 = vmatprep.subr.bf16.mxu0 0
        %3065 = vmatpush1.bf16.msra.mxu0 0
        %3066 = vmatprep.mubr.bf16.mxu0 0
        %3067 = vmatmul.mubr.bf16.gmra.mrb[0].mxu0 %v1543
        %v3068 = vpop.f32.mrb[0].mxu0
        %v3069 = vadd.f32 %v2977, %v3068
        %v3070 = vpop.f32.mrb[0].mxu0
        %v3071 = vadd.f32 %v2981, %v3070
        %v3072 = vpop.f32.mrb[0].mxu0
        %v3073 = vpop.f32.mrb[0].mxu0
        %3074 = vdwg.mxu0
        %3075 = vmatprep.subr.bf16.mxu0 %v3021
        %3076 = vmatpush1.bf16.msra.mxu0 %v3020
        %3077 = vmatprep.subr.bf16.mxu0 %v3025
        %3078 = vmatpush1.bf16.msra.mxu0 %v3024
        %3079 = vmatprep.subr.bf16.mxu0 0
        %3080 = vmatpush1.bf16.msra.mxu0 0
        %3081 = vmatprep.subr.bf16.mxu0 0
        %3082 = vmatpush1.bf16.msra.mxu0 0
        %3083 = vmatprep.subr.bf16.mxu0 0
        %3084 = vmatpush1.bf16.msra.mxu0 0
        %3085 = vmatprep.subr.bf16.mxu0 0
        %3086 = vmatpush1.bf16.msra.mxu0 0
        %3087 = vmatprep.subr.bf16.mxu0 0
        %3088 = vmatpush1.bf16.msra.mxu0 0
        %3089 = vmatprep.subr.bf16.mxu0 0
        %3090 = vmatpush1.bf16.msra.mxu0 0
        %3091 = vmatprep.subr.bf16.mxu0 0
        %3092 = vmatpush1.bf16.msra.mxu0 0
        %3093 = vmatprep.subr.bf16.mxu0 0
        %3094 = vmatpush1.bf16.msra.mxu0 0
        %3095 = vmatprep.subr.bf16.mxu0 0
        %3096 = vmatpush1.bf16.msra.mxu0 0
        %3097 = vmatprep.subr.bf16.mxu0 0
        %3098 = vmatpush1.bf16.msra.mxu0 0
        %3099 = vmatprep.subr.bf16.mxu0 0
        %3100 = vmatpush1.bf16.msra.mxu0 0
        %3101 = vmatprep.subr.bf16.mxu0 0
        %3102 = vmatpush1.bf16.msra.mxu0 0
        %3103 = vmatprep.subr.bf16.mxu0 0
        %3104 = vmatpush1.bf16.msra.mxu0 0
        %3105 = vmatprep.subr.bf16.mxu0 0
        %3106 = vmatpush1.bf16.msra.mxu0 0
        %3107 = vmatprep.mubr.bf16.mxu0 0
        %3108 = vmatmul.mubr.bf16.gmra.mrb[0].mxu0 %v1543
        %v3109 = vpop.f32.mrb[0].mxu0
        %v3110 = vadd.f32 %v2985, %v3109
        %v3111 = vpop.f32.mrb[0].mxu0
        %v3112 = vadd.f32 %v2989, %v3111
        %v3113 = vpop.f32.mrb[0].mxu0
        %v3114 = vpop.f32.mrb[0].mxu0
        %3115 = vdwg.mxu0
        %v3116 = vmax.f32 %v3069, 0.0
        %v3117 = vmax.f32 %v3071, 0.0
        %v3118 = vmax.f32 %v3110, 0.0
        %v3119 = vmax.f32 %v3112, 0.0
        %v3120 = vpack.c.bf16 %v3116, %v3116
        %v3121 = vpack.c.bf16 %v3117, %v3117
        %v3122 = vpack.c.bf16 %v3118, %v3118
        %v3123 = vpack.c.bf16 %v3119, %v3119
        %v3124 = vld [vmem:[#allocation17 + $0x300] sm:$0xf]
        %v3125 = vld [vmem:[#allocation17 + $0x304] sm:$0xf]
        %v3126 = vld [vmem:[#allocation17 + $0x308] sm:$0xf]
        %v3127 = vld [vmem:[#allocation17 + $0x30c] sm:$0xf]
        %v3128 = vld [vmem:[#allocation17 + $0x310] sm:$0xf]
        %v3129 = vld [vmem:[#allocation17 + $0x314] sm:$0xf]
        %v3130 = vld [vmem:[#allocation17 + $0x318] sm:$0xf]
        %v3131 = vld [vmem:[#allocation17 + $0x31c] sm:$0xf]
        %v3132 = vld [vmem:[#allocation17 + $0x320] sm:$0xf]
        %v3133 = vld [vmem:[#allocation17 + $0x324] sm:$0xf]
        %v3134 = vld [vmem:[#allocation17 + $0x328] sm:$0xf]
        %v3135 = vld [vmem:[#allocation17 + $0x32c] sm:$0xf]
        %v3136 = vld [vmem:[#allocation17 + $0x330] sm:$0xf]
        %v3137 = vld [vmem:[#allocation17 + $0x334] sm:$0xf]
        %v3138 = vld [vmem:[#allocation17 + $0x338] sm:$0xf]
        %v3139 = vld [vmem:[#allocation17 + $0x33c] sm:$0xf]
        %v3140 = vld [vmem:[#allocation17 + $0x340] sm:$0xf]
        %v3141 = vld [vmem:[#allocation17 + $0x344] sm:$0xf]
        %v3142 = vld [vmem:[#allocation17 + $0x348] sm:$0xf]
        %v3143 = vld [vmem:[#allocation17 + $0x34c] sm:$0xf]
        %v3144 = vld [vmem:[#allocation17 + $0x350] sm:$0xf]
        %v3145 = vld [vmem:[#allocation17 + $0x354] sm:$0xf]
        %v3146 = vld [vmem:[#allocation17 + $0x358] sm:$0xf]
        %v3147 = vld [vmem:[#allocation17 + $0x35c] sm:$0xf]
        %v3148 = vld [vmem:[#allocation17 + $0x360] sm:$0xf]
        %v3149 = vld [vmem:[#allocation17 + $0x364] sm:$0xf]
        %v3150 = vld [vmem:[#allocation17 + $0x368] sm:$0xf]
        %v3151 = vld [vmem:[#allocation17 + $0x36c] sm:$0xf]
        %v3152 = vld [vmem:[#allocation17 + $0x370] sm:$0xf]
        %v3153 = vld [vmem:[#allocation17 + $0x374] sm:$0xf]
        %v3154 = vld [vmem:[#allocation17 + $0x378] sm:$0xf]
        %v3155 = vld [vmem:[#allocation17 + $0x37c] sm:$0xf]
        %v3156 = vld [vmem:[#allocation17 + $0x380] sm:$0xf]
        %v3157 = vld [vmem:[#allocation17 + $0x384] sm:$0xf]
        %v3158 = vld [vmem:[#allocation17 + $0x388] sm:$0xf]
        %v3159 = vld [vmem:[#allocation17 + $0x38c] sm:$0xf]
        %v3160 = vld [vmem:[#allocation17 + $0x390] sm:$0xf]
        %v3161 = vld [vmem:[#allocation17 + $0x394] sm:$0xf]
        %v3162 = vld [vmem:[#allocation17 + $0x398] sm:$0xf]
        %v3163 = vld [vmem:[#allocation17 + $0x39c] sm:$0xf]
        %v3164 = vld [vmem:[#allocation17 + $0x3a0] sm:$0xf]
        %v3165 = vld [vmem:[#allocation17 + $0x3a4] sm:$0xf]
        %v3166 = vld [vmem:[#allocation17 + $0x3a8] sm:$0xf]
        %v3167 = vld [vmem:[#allocation17 + $0x3ac] sm:$0xf]
        %v3168 = vld [vmem:[#allocation17 + $0x3b0] sm:$0xf]
        %v3169 = vld [vmem:[#allocation17 + $0x3b4] sm:$0xf]
        %v3170 = vld [vmem:[#allocation17 + $0x3b8] sm:$0xf]
        %v3171 = vld [vmem:[#allocation17 + $0x3bc] sm:$0xf]
        %v3172 = vld [vmem:[#allocation17 + $0x3c0] sm:$0xf]
        %v3173 = vld [vmem:[#allocation17 + $0x3c4] sm:$0xf]
        %v3174 = vld [vmem:[#allocation17 + $0x3c8] sm:$0xf]
        %v3175 = vld [vmem:[#allocation17 + $0x3cc] sm:$0xf]
        %v3176 = vld [vmem:[#allocation17 + $0x3d0] sm:$0xf]
        %v3177 = vld [vmem:[#allocation17 + $0x3d4] sm:$0xf]
        %v3178 = vld [vmem:[#allocation17 + $0x3d8] sm:$0xf]
        %v3179 = vld [vmem:[#allocation17 + $0x3dc] sm:$0xf]
        %v3180 = vld [vmem:[#allocation17 + $0x3e0] sm:$0xf]
        %v3181 = vld [vmem:[#allocation17 + $0x3e4] sm:$0xf]
        %v3182 = vld [vmem:[#allocation17 + $0x3e8] sm:$0xf]
        %v3183 = vld [vmem:[#allocation17 + $0x3ec] sm:$0xf]
        %v3184 = vld [vmem:[#allocation17 + $0x3f0] sm:$0xf]
        %v3185 = vld [vmem:[#allocation17 + $0x3f4] sm:$0xf]
        %v3186 = vld [vmem:[#allocation17 + $0x3f8] sm:$0xf]
        %v3187 = vld [vmem:[#allocation17 + $0x3fc] sm:$0xf]
        %v3252 = vunpack.c.l.b16 %v3124
        %v3253 = vunpack.c.l.b16 %v3125
        %v3254 = vunpack.c.l.b16 %v3126
        %v3255 = vunpack.c.l.b16 %v3127
        %v3256 = vunpack.c.l.b16 %v3128
        %v3257 = vunpack.c.l.b16 %v3129
        %v3258 = vunpack.c.l.b16 %v3130
        %v3259 = vunpack.c.l.b16 %v3131
        %v3260 = vunpack.c.l.b16 %v3132
        %v3261 = vunpack.c.l.b16 %v3133
        %v3262 = vunpack.c.l.b16 %v3134
        %v3263 = vunpack.c.l.b16 %v3135
        %v3264 = vunpack.c.l.b16 %v3136
        %v3265 = vunpack.c.l.b16 %v3137
        %v3266 = vunpack.c.l.b16 %v3138
        %v3267 = vunpack.c.l.b16 %v3139
        %v3268 = vunpack.c.l.b16 %v3140
        %v3269 = vunpack.c.l.b16 %v3141
        %v3270 = vunpack.c.l.b16 %v3142
        %v3271 = vunpack.c.l.b16 %v3143
        %v3272 = vunpack.c.l.b16 %v3144
        %v3273 = vunpack.c.l.b16 %v3145
        %v3274 = vunpack.c.l.b16 %v3146
        %v3275 = vunpack.c.l.b16 %v3147
        %v3276 = vunpack.c.l.b16 %v3148
        %v3277 = vunpack.c.l.b16 %v3149
        %v3278 = vunpack.c.l.b16 %v3150
        %v3279 = vunpack.c.l.b16 %v3151
        %v3280 = vunpack.c.l.b16 %v3152
        %v3281 = vunpack.c.l.b16 %v3153
        %v3282 = vunpack.c.l.b16 %v3154
        %v3283 = vunpack.c.l.b16 %v3155
        %v3284 = vunpack.c.l.b16 %v3156
        %v3285 = vunpack.c.l.b16 %v3157
        %v3286 = vunpack.c.l.b16 %v3158
        %v3287 = vunpack.c.l.b16 %v3159
        %v3288 = vunpack.c.l.b16 %v3160
        %v3289 = vunpack.c.l.b16 %v3161
        %v3290 = vunpack.c.l.b16 %v3162
        %v3291 = vunpack.c.l.b16 %v3163
        %v3292 = vunpack.c.l.b16 %v3164
        %v3293 = vunpack.c.l.b16 %v3165
        %v3294 = vunpack.c.l.b16 %v3166
        %v3295 = vunpack.c.l.b16 %v3167
        %v3296 = vunpack.c.l.b16 %v3168
        %v3297 = vunpack.c.l.b16 %v3169
        %v3298 = vunpack.c.l.b16 %v3170
        %v3299 = vunpack.c.l.b16 %v3171
        %v3300 = vunpack.c.l.b16 %v3172
        %v3301 = vunpack.c.l.b16 %v3173
        %v3302 = vunpack.c.l.b16 %v3174
        %v3303 = vunpack.c.l.b16 %v3175
        %v3304 = vunpack.c.l.b16 %v3176
        %v3305 = vunpack.c.l.b16 %v3177
        %v3306 = vunpack.c.l.b16 %v3178
        %v3307 = vunpack.c.l.b16 %v3179
        %v3308 = vunpack.c.l.b16 %v3180
        %v3309 = vunpack.c.l.b16 %v3181
        %v3310 = vunpack.c.l.b16 %v3182
        %v3311 = vunpack.c.l.b16 %v3183
        %v3312 = vunpack.c.l.b16 %v3184
        %v3313 = vunpack.c.l.b16 %v3185
        %v3314 = vunpack.c.l.b16 %v3186
        %v3315 = vunpack.c.l.b16 %v3187
        %v3316 = vpack.c.b16 %v3253, %v3252
        %v3317 = vpack.c.b16 %v3255, %v3254
        %v3318 = vpack.c.b16 %v3257, %v3256
        %v3319 = vpack.c.b16 %v3259, %v3258
        %v3320 = vpack.c.b16 %v3261, %v3260
        %v3321 = vpack.c.b16 %v3263, %v3262
        %v3322 = vpack.c.b16 %v3265, %v3264
        %v3323 = vpack.c.b16 %v3267, %v3266
        %v3324 = vpack.c.b16 %v3269, %v3268
        %v3325 = vpack.c.b16 %v3271, %v3270
        %v3326 = vpack.c.b16 %v3273, %v3272
        %v3327 = vpack.c.b16 %v3275, %v3274
        %v3328 = vpack.c.b16 %v3277, %v3276
        %v3329 = vpack.c.b16 %v3279, %v3278
        %v3330 = vpack.c.b16 %v3281, %v3280
        %v3331 = vpack.c.b16 %v3283, %v3282
        %v3332 = vpack.c.b16 %v3285, %v3284
        %v3333 = vpack.c.b16 %v3287, %v3286
        %v3334 = vpack.c.b16 %v3289, %v3288
        %v3335 = vpack.c.b16 %v3291, %v3290
        %v3336 = vpack.c.b16 %v3293, %v3292
        %v3337 = vpack.c.b16 %v3295, %v3294
        %v3338 = vpack.c.b16 %v3297, %v3296
        %v3339 = vpack.c.b16 %v3299, %v3298
        %v3340 = vpack.c.b16 %v3301, %v3300
        %v3341 = vpack.c.b16 %v3303, %v3302
        %v3342 = vpack.c.b16 %v3305, %v3304
        %v3343 = vpack.c.b16 %v3307, %v3306
        %v3344 = vpack.c.b16 %v3309, %v3308
        %v3345 = vpack.c.b16 %v3311, %v3310
        %v3346 = vpack.c.b16 %v3313, %v3312
        %v3347 = vpack.c.b16 %v3315, %v3314
        %3380 = vmatprep.subr.bf16.mxu0 0
        %3381 = vmatpush1.bf16.msra.mxu0 %v3316
        %3382 = vmatprep.subr.bf16.mxu0 0
        %3383 = vmatpush1.bf16.msra.mxu0 %v3317
        %3384 = vmatprep.subr.bf16.mxu0 0
        %3385 = vmatpush1.bf16.msra.mxu0 %v3318
        %3386 = vmatprep.subr.bf16.mxu0 0
        %3387 = vmatpush1.bf16.msra.mxu0 %v3319
        %3388 = vmatprep.subr.bf16.mxu0 0
        %3389 = vmatpush1.bf16.msra.mxu0 %v3320
        %3390 = vmatprep.subr.bf16.mxu0 0
        %3391 = vmatpush1.bf16.msra.mxu0 %v3321
        %3392 = vmatprep.subr.bf16.mxu0 0
        %3393 = vmatpush1.bf16.msra.mxu0 %v3322
        %3394 = vmatprep.subr.bf16.mxu0 0
        %3395 = vmatpush1.bf16.msra.mxu0 %v3323
        %3396 = vmatprep.subr.bf16.mxu0 0
        %3397 = vmatpush1.bf16.msra.mxu0 %v3324
        %3398 = vmatprep.subr.bf16.mxu0 0
        %3399 = vmatpush1.bf16.msra.mxu0 %v3325
        %3400 = vmatprep.subr.bf16.mxu0 0
        %3401 = vmatpush1.bf16.msra.mxu0 %v3326
        %3402 = vmatprep.subr.bf16.mxu0 0
        %3403 = vmatpush1.bf16.msra.mxu0 %v3327
        %3404 = vmatprep.subr.bf16.mxu0 0
        %3405 = vmatpush1.bf16.msra.mxu0 %v3328
        %3406 = vmatprep.subr.bf16.mxu0 0
        %3407 = vmatpush1.bf16.msra.mxu0 %v3329
        %3408 = vmatprep.subr.bf16.mxu0 0
        %3409 = vmatpush1.bf16.msra.mxu0 %v3330
        %3410 = vmatprep.subr.bf16.mxu0 0
        %3411 = vmatpush1.bf16.msra.mxu0 %v3331
        %3412 = vmatprep.mubr.bf16.mxu0 %v3121
        %3413 = vmatmul.mubr.bf16.gmra.mrb[0].mxu0 %v3120
        %v3414 = vpop.f32.mrb[0].mxu0
        %v3415 = vadd.f32 0.0, %v3414
        %v3416 = vpop.f32.mrb[0].mxu0
        %v3417 = vpop.f32.mrb[0].mxu0
        %v3418 = vpop.f32.mrb[0].mxu0
        %3419 = vdwg.mxu0
        %3420 = vmatprep.subr.bf16.mxu0 0
        %3421 = vmatpush1.bf16.msra.mxu0 %v3332
        %3422 = vmatprep.subr.bf16.mxu0 0
        %3423 = vmatpush1.bf16.msra.mxu0 %v3333
        %3424 = vmatprep.subr.bf16.mxu0 0
        %3425 = vmatpush1.bf16.msra.mxu0 %v3334
        %3426 = vmatprep.subr.bf16.mxu0 0
        %3427 = vmatpush1.bf16.msra.mxu0 %v3335
        %3428 = vmatprep.subr.bf16.mxu0 0
        %3429 = vmatpush1.bf16.msra.mxu0 %v3336
        %3430 = vmatprep.subr.bf16.mxu0 0
        %3431 = vmatpush1.bf16.msra.mxu0 %v3337
        %3432 = vmatprep.subr.bf16.mxu0 0
        %3433 = vmatpush1.bf16.msra.mxu0 %v3338
        %3434 = vmatprep.subr.bf16.mxu0 0
        %3435 = vmatpush1.bf16.msra.mxu0 %v3339
        %3436 = vmatprep.subr.bf16.mxu0 0
        %3437 = vmatpush1.bf16.msra.mxu0 %v3340
        %3438 = vmatprep.subr.bf16.mxu0 0
        %3439 = vmatpush1.bf16.msra.mxu0 %v3341
        %3440 = vmatprep.subr.bf16.mxu0 0
        %3441 = vmatpush1.bf16.msra.mxu0 %v3342
        %3442 = vmatprep.subr.bf16.mxu0 0
        %3443 = vmatpush1.bf16.msra.mxu0 %v3343
        %3444 = vmatprep.subr.bf16.mxu0 0
        %3445 = vmatpush1.bf16.msra.mxu0 %v3344
        %3446 = vmatprep.subr.bf16.mxu0 0
        %3447 = vmatpush1.bf16.msra.mxu0 %v3345
        %3448 = vmatprep.subr.bf16.mxu0 0
        %3449 = vmatpush1.bf16.msra.mxu0 %v3346
        %3450 = vmatprep.subr.bf16.mxu0 0
        %3451 = vmatpush1.bf16.msra.mxu0 %v3347
        %3452 = vmatprep.mubr.bf16.mxu0 %v3123
        %3453 = vmatmul.mubr.bf16.gmra.mrb[0].mxu0 %v3122
        %v3454 = vpop.f32.mrb[0].mxu0
        %v3455 = vadd.f32 %v3415, %v3454
        %v3456 = vpop.f32.mrb[0].mxu0
        %v3457 = vpop.f32.mrb[0].mxu0
        %v3458 = vpop.f32.mrb[0].mxu0
        %3459 = vdwg.mxu0
        %v3460 = vadd.f32 %v2963, %v3455
        %v3461 = vld [vmem:[#allocation19] sm:$0x1]
        %v3463 = vlaneseq
        %v3464 = vshrl.u32 %v3463, 7
        %v3465 = vsub.s32 0, %v3464
        %v3466 = vrot.slane %v3461, %v3465
        %v3468 = vadd.f32 %v3460, %v3466
        %v3469 = vadd.f32 %v1470, %v3468
        %v3470 = vld [vmem:[#allocation23] sm:$0x1]
        %v3471 = vld [vmem:[#allocation25] sm:$0x1]
        %v3472 = vsel %vm749, %v3469, 0.0
        %3473 = vadd.xlane.f32.xlu0 %v3472
        %v3474 = vpop.xlane.xlu0 %3473
        %v3475 = vmul.f32 %v3474, %v1446
        %v3476 = vsub.f32 %v3469, %v3475
        %v3477 = vmul.f32 %v3476, %v3476
        %v3478 = vsel %vm749, %v3477, 0.0
        %3479 = vadd.xlane.f32.xlu0 %v3478
        %v3480 = vpop.xlane.xlu0 %3479
        %v3481 = vmul.f32 %v3480, %v1446
        %v3482 = vadd.f32 %v3481, 1e-05
        %v3483 = vrsqrt.pop %v3482
        %v3484 = vmul.f32 %v3476, %v3483
        %v3486 = vlaneseq
        %v3487 = vshrl.u32 %v3486, 7
        %v3488 = vsub.s32 0, %v3487
        %v3489 = vrot.slane %v3470, %v3488
        %v3491 = vmul.f32 %v3484, %v3489
        %v3493 = vlaneseq
        %v3494 = vshrl.u32 %v3493, 7
        %v3495 = vsub.s32 0, %v3494
        %v3496 = vrot.slane %v3471, %v3495
        %v3498 = vadd.f32 %v3491, %v3496
        %3499 = vst.msk [vmem:[%s713] sm:$0xff] %vm749, %v3498
        %s3500 = sand.u32 %s374, 1
        %s3501 = scalar_lea.sflag [#allocation4], %s3500
        %s3502 = sand.u32 %s374, 1
        %s3503 = smul.addr %s3502, 8
        %s3504 = scalar_lea.vmem [#allocation26], %s3503
        // Predicated region
        $region141: #{_session_encoder_impl.1} parent=79 // pred_check
          %p3505 = pneg %p384
        $region142: #{_session_encoder_impl.1} parent=79 // pred_check_branch
          %3507 = sbr.rel (%p3505) target = $region144
        $region143: #{_session_encoder_impl.1} parent=79 // pred_region
          %s3509 = ssub.s32 128, 128
          %3510 = vsyncadd %s3501, %s3509
          %s3511 = smul.addr %s41, 128
          %s3512 = scalar_lea.hbm %s15, %s3511
          %s3514 = sshll.u32 %s3504, 4
          %s3515 = int_to_ptr.vmem [resolvable:$true] %s3514
          %3517 = dma.vmem_to_hbm [thread:$0]  %s3515, 128, %s3512, %s3501
        $region144: #{_session_encoder_impl.1} parent=79 // pred_fallthru
          _
      $region80: #{_session_encoder_impl.1} parent=5 // pred_fallthru
        _
      %p3518 = scmp.le.s32.totalorder 2, %s36
      // Predicated region
      $region145: #{_session_encoder_impl.1} parent=5 // pred_check
        %p3519 = pneg %p3518
      $region146: #{_session_encoder_impl.1} parent=5 // pred_check_branch
        %3521 = sbr.rel (%p3519) target = $region148
      $region147: #{_session_encoder_impl.1} parent=5 // pred_region
        %s3522 = ssub.s32 %s36, 2
        // Predicated region
        $region149: #{_session_encoder_impl.1} parent=147 // pred_check
          %p3523 = pneg %p390
        $region150: #{_session_encoder_impl.1} parent=147 // pred_check_branch
          %3525 = sbr.rel (%p3523) target = $region152
        $region151: #{_session_encoder_impl.1} parent=147 // pred_region
          %s3526 = sand.u32 %s375, 1
          %s3527 = scalar_lea.sflag [#allocation4], %s3526
          %s3528 = sand.u32 %s375, 1
          %s3529 = smul.addr %s3528, 8
          %s3530 = scalar_lea.vmem [#allocation26], %s3529
          %3531 = dma.done %s3527, 128
        $region152: #{_session_encoder_impl.1} parent=147 // pred_fallthru
          _
      $region148: #{_session_encoder_impl.1} parent=5 // pred_fallthru
        _
    $region6: #{_session_encoder_impl.1} parent=1 // loop_footer
      %s40 = sadd.s32 1, %s36
    $region7: #{_session_encoder_impl.1} parent=1 // loop_footer_branch
      %35 = sbr.rel target = $region3
    $region8: #{_session_encoder_impl.1} parent=1 // loop_exit
      _
    %3532 = vsyncpa [#allocation3], 1
    %s3533 = scalar_lea.sflag [#allocation3], 1
    %3534 = vsyncpa %s3533, 1
    %3535 = vsyncpa [#allocation6], 1
    %s3536 = scalar_lea.sflag [#allocation6], 1
    %3537 = vsyncpa %s3536, 1
    %3538 = vsyncpa [#allocation9], 1
    %3539 = vsyncpa [#allocation12], 1
    %3540 = vsyncpa [#allocation15], 1
    %3541 = vsyncpa [#allocation18], 1
    %3542 = vsyncpa [#allocation21], 1
    %3543 = vsyncpa [#allocation24], 1
    %3544 = vsyncpa [#allocation4], 1
    %s3545 = scalar_lea.sflag [#allocation4], 1
    %3546 = vsyncpa %s3545, 1

</llo_original>
